<compile_context>
chip_gen: v6e
topology: v6e:2x2x1
jax: 0.10.0
libtpu: 0.0.40
codegen_flags: <defaults>
</compile_context>

<pallas_src>
import math
import numpy as np
import jax
import jax.numpy as jnp
from jax import lax
from jax.experimental import pallas as pl
from jax.experimental.pallas import tpu as pltpu

# ---- model hyper-parameters (small, consistent with the module) -------------
NDIM = 32
EDIM = 32
NUM_HEADS = 8
DIM = max(NDIM, EDIM)            # 32
D_K = DIM // NUM_HEADS           # 4
N_NODES = 16
FFN_HID = 4 * NDIM               # 128
EPS = 1e-5                       # PyTorch LayerNorm default

# GROUP graphs per grid step (GROUP*NDIM = 128 output lanes).
# TODO(synk): on single-TensorCore chips (v5e/v6e) GROUP=8 halves step overhead;
# kept at 4 so B=8 still yields 2 "parallel" steps for the 2 TCs of v7x.
GROUP = 4
KPAD = 8                         # kv / group-broadcast K padded to 8 (MXU-friendly)
NW = N_NODES * DIM               # 512 : "wide" lane layout, lane = src*DIM + d
NH = N_NODES * NUM_HEADS         # 128 : score lane layout, lane = src*NUM_HEADS + h

# packed weight slab WA (NDIM, 768): [ Wq tiled x16 | Wo | pad | ffn_W1 ]
WA_WQ = 0
WA_WO = NW                       # 512
WA_W1 = NW + 128                 # 640 (Wo slot padded so W1 starts on a lane tile)
WA_COLS = WA_W1 + FFN_HID        # 768


def _ln(y, gamma, beta):
    mu = jnp.mean(y, axis=-1, keepdims=True)
    var = jnp.mean((y - mu) ** 2, axis=-1, keepdims=True)
    return (y - mu) * lax.rsqrt(var + EPS) * gamma + beta


# ---------------------------- the Pallas kernel ------------------------------
def rgat_kernel(x_ref,      # (GROUP*N, NDIM)     f32  node feats, row = g_local*N + dst   (streamed)
                kv_ref,     # (1, KPAD, 2*NW)     f32  per-graph [k|v] flat, lane = src*DIM+d (streamed)
                adj_ref,    # (GROUP*N, N)        bf16 compact adjacency adj[dst, src]      (streamed)
                e_ref,      # (GROUP*N, NW)       bf16 edge feats, lane = src*DIM + d       (streamed)
                wa_ref,     # (NDIM, WA_COLS)     f32  [Wq_tiled | Wo | pad | W1]           (resident)
                w2_ref,     # (FFN_HID, NDIM)     f32                                        (resident)
                vec_ref,    # (8, NW)             f32  biases / LayerNorm params             (resident)
                gexp_ref,   # (GROUP*N, KPAD)     f32  0/1 group-broadcast matrix            (resident)
                rexp_ref,   # (N, NH)             bf16 0/1 adjacency head-expand             (resident)
                pa_ref,     # (NW, NH+DIM)        bf16 [P_pool | P_src_sum]                  (resident)
                pb_ref,     # (NH, NW+DIM)        bf16 [P_expand | P_den]                    (resident)
                out_ref):   # (N, GROUP*NDIM)     f32  lane-dense output block
    f32 = jnp.float32
    bf16 = jnp.bfloat16

    x2 = x_ref[...]                                                    # (64, 32)
    gexp = gexp_ref[...]                                               # (64, 8) 0/1
    kv = kv_ref[0]                                                     # (8, 1024) per-graph [k|v]

    # ---- q directly in wide layout (one MXU pass against the lane-tiled Wq) --
    q_wide = (jnp.dot(x2, wa_ref[:, WA_WQ:WA_WQ + NW], preferred_element_type=f32)
              + vec_ref[0:1, :])                                       # (64, 512)

    # ---- k broadcast from per-graph rows to all dst rows of the group --------
    k_rep = jnp.dot(gexp, kv[:, 0:NW], preferred_element_type=f32)     # (64, 512)

    # ---- adjacency-masked multi-head attention (reductions on the MXU) -------
    t = (k_rep + e_ref[...].astype(f32)) * q_wide                      # (64, 512)
    logits = jnp.dot(t.astype(bf16), pa_ref[:, 0:NH],
                     preferred_element_type=f32) * (1.0 / math.sqrt(D_K))   # (64, 128)
    adj_w = jnp.dot(adj_ref[...], rexp_ref[...],
                    preferred_element_type=f32)                        # (64, 128) exact 0/1
    scores = jnp.exp(jnp.clip(logits, -10.0, 10.0)) * adj_w            # (64, 128)

    se = jnp.dot(scores.astype(bf16), pb_ref[...],
                 preferred_element_type=f32)                           # (64, 544)
    score_exp = se[:, 0:NW]                                            # scores expanded per d
    z = se[:, NW:NW + DIM]                                             # per-head normalizer

    # v / weighted only materialize now (keeps peak live wide values low)
    v_rep = jnp.dot(gexp, kv[:, NW:2 * NW], preferred_element_type=f32)    # (64, 512)
    weighted = score_exp * (v_rep + e_ref[...].astype(f32))                # (64, 512)
    num = jnp.dot(weighted.astype(bf16), pa_ref[:, NH:NH + DIM],
                  preferred_element_type=f32)                              # (64, 32)
    # NOTE: the z floor is an intentional deviation from the reference (which
    # would NaN) for a dst node with no in-edges; test graphs carry self-loops.
    o = num * pl.reciprocal(jnp.maximum(z, 1e-30), approx=True)

    # ---- affine_o + residual + LayerNorm, then FFN block ----------------------
    h_att = (x2
             + jnp.dot(o, wa_ref[:, WA_WO:WA_WO + NDIM], preferred_element_type=f32)
             + vec_ref[1:2, 0:NDIM])
    h1 = _ln(h_att, vec_ref[2:3, 0:NDIM], vec_ref[3:4, 0:NDIM])
    ff = jnp.maximum(
        jnp.dot(h1, wa_ref[:, WA_W1:WA_W1 + FFN_HID], preferred_element_type=f32)
        + vec_ref[4:5, 0:FFN_HID], 0.0)
    ff = jnp.dot(ff, w2_ref[...], preferred_element_type=f32) + vec_ref[5:6, 0:NDIM]
    res = _ln(h1 + ff, vec_ref[6:7, 0:NDIM], vec_ref[7:8, 0:NDIM])     # (64, 32)

    # ---- single unmasked lane-dense (16, 128) store ---------------------------
    out_ref[...] = jnp.concatenate(
        [res[g * N_NODES:(g + 1) * N_NODES, :] for g in range(GROUP)], axis=1)


# --------------------------- constant routing matrices -----------------------
def _routing_constants():
    # P_pool[s*DIM+d, s*H+h] = 1 iff d//D_K == h      (per-head logit pooling)
    head_pool = np.repeat(np.eye(NUM_HEADS, dtype=np.float32), D_K, axis=0)     # (DIM, H)
    p_pool = np.kron(np.eye(N_NODES, dtype=np.float32), head_pool)              # (NW, NH)
    # P_src_sum[s*DIM+d, d'] = 1 iff d == d'          (sum over src)
    p_sum = np.tile(np.eye(DIM, dtype=np.float32), (N_NODES, 1))                # (NW, DIM)
    # P_den[s*H+h, d] = 1 iff h == d//D_K             (z expanded per feature)
    p_den = np.tile(np.repeat(np.eye(NUM_HEADS, dtype=np.float32), D_K, axis=1),
                    (N_NODES, 1))                                               # (NH, DIM)
    pa = np.concatenate([p_pool, p_sum], axis=1)                                # (NW, NH+DIM)
    pb = np.concatenate([p_pool.T, p_den], axis=1)                              # (NH, NW+DIM)
    # group broadcast: gexp[g*N + n, g'] = 1 iff g == g'   (K padded to KPAD)
    gexp = np.zeros((GROUP * N_NODES, KPAD), np.float32)
    for g in range(GROUP):
        gexp[g * N_NODES:(g + 1) * N_NODES, g] = 1.0
    # adjacency head-expand: rexp[s, s'*H + h] = 1 iff s == s'
    rexp = np.kron(np.eye(N_NODES, dtype=np.float32),
                   np.ones((1, NUM_HEADS), np.float32))                         # (N, NH)
    return (jnp.asarray(pa, jnp.bfloat16), jnp.asarray(pb, jnp.bfloat16),
            jnp.asarray(gexp, jnp.float32), jnp.asarray(rexp, jnp.bfloat16))


ROUTE_PA, ROUTE_PB, GEXP, REXP = _routing_constants()


def _pack_params(p):
    """Pack the small parameter tensors into 3 slabs (f32)."""
    wa = jnp.zeros((NDIM, WA_COLS), jnp.float32)
    wa = wa.at[:, WA_WQ:WA_WQ + NW].set(jnp.tile(p["wq"], (1, N_NODES)))
    wa = wa.at[:, WA_WO:WA_WO + NDIM].set(p["wo"])
    wa = wa.at[:, WA_W1:WA_W1 + FFN_HID].set(p["ffn_w1"])

    vec = jnp.zeros((8, NW), jnp.float32)
    vec = vec.at[0, :].set(jnp.tile(p["bq"].reshape(-1), (N_NODES,)))
    vec = vec.at[1, :NDIM].set(p["bo"].reshape(-1))
    vec = vec.at[2, :NDIM].set(p["ln1_g"].reshape(-1))
    vec = vec.at[3, :NDIM].set(p["ln1_b"].reshape(-1))
    vec = vec.at[4, :FFN_HID].set(p["ffn_b1"].reshape(-1))
    vec = vec.at[5, :NDIM].set(p["ffn_b2"].reshape(-1))
    vec = vec.at[6, :NDIM].set(p["ln2_g"].reshape(-1))
    vec = vec.at[7, :NDIM].set(p["ln2_b"].reshape(-1))
    return wa, p["ffn_w2"], vec


def _nbytes(a):
    return int(np.prod(a.shape)) * jnp.dtype(a.dtype).itemsize


# ------------------------------- wrapper --------------------------------------
@jax.jit
def rgat_layer(x, lgx_dense, adj, params):
    """x: (B, N, NDIM); lgx_dense: (B, N, N, EDIM) dense edge feats (0 where no
    edge); adj: (B, N, N) with adj[b, dst, src] = 1.  Returns (out, lgx)."""
    B, N, _ = x.shape
    assert N == N_NODES and B % GROUP == 0
    steps = B // GROUP
    gn = GROUP * N

    wa, w2, vec = _pack_params(params)

    # k/v projections are tiny; do them on the XLA side and stream the compact
    # per-graph result (f32, (steps, KPAD, 2*NW) ~ 32 KB/step) instead of the old
    # 2 MiB block-diagonal [Wk|Wv] slab + its 94%-zeros matmul.
    x_flat = x.reshape(B * N, NDIM)
    k_flat = (x_flat @ params["wk"]).reshape(steps, GROUP, NW)
    v_flat = (x_flat @ params["wv"]).reshape(steps, GROUP, NW)
    kv = jnp.concatenate([k_flat, v_flat], axis=2)                      # (steps, GROUP, 2*NW)
    kv = jnp.pad(kv, ((0, 0), (0, KPAD - GROUP), (0, 0))).astype(jnp.float32)

    # lane-dense layouts (pure layout plumbing on the XLA side)
    x_rows = x_flat                                                     # (B*N, NDIM) f32
    adj_c = adj.reshape(B * N, N).astype(jnp.bfloat16)                  # compact adjacency
    e_w = lgx_dense.reshape(B * N, NW).astype(jnp.bfloat16)             # lane = src*DIM + d

    flops_per_step = 2 * gn * (NDIM * NW            # q_wide
                               + 2 * KPAD * NW      # k/v group broadcast
                               + NW * NH            # head pooling
                               + N * NH             # adjacency head-expand
                               + NH * (NW + DIM)    # score expand + z
                               + NW * DIM           # src sum
                               + DIM * NDIM         # affine_o
                               + NDIM * FFN_HID + FFN_HID * NDIM)       # FFN
    operands = (x_rows, kv, adj_c, e_w, wa, w2, vec, GEXP, REXP, ROUTE_PA, ROUTE_PB)
    cost = pl.CostEstimate(
        flops=int(steps * flops_per_step),
        transcendentals=int(steps * gn * (NH + DIM)),
        bytes_accessed=int(sum(_nbytes(a) for a in operands)
                           + steps * N * GROUP * NDIM * 4),
    )

    out_wide = pl.pallas_call(
        rgat_kernel,
        out_shape=jax.ShapeDtypeStruct((steps * N, GROUP * NDIM), jnp.float32),
        grid=(steps,),
        in_specs=[
            pl.BlockSpec((gn, NDIM), lambda b: (b, 0)),                # x rows     (streamed)
            pl.BlockSpec((1, KPAD, 2 * NW), lambda b: (b, 0, 0)),      # kv         (streamed)
            pl.BlockSpec((gn, N_NODES), lambda b: (b, 0)),             # adj compact(streamed)
            pl.BlockSpec((gn, NW), lambda b: (b, 0)),                  # e bf16     (streamed)
            pl.BlockSpec((NDIM, WA_COLS), lambda b: (0, 0)),           # WA         (resident)
            pl.BlockSpec((FFN_HID, NDIM), lambda b: (0, 0)),           # ffn W2     (resident)
            pl.BlockSpec((8, NW), lambda b: (0, 0)),                   # biases/LN  (resident)
            pl.BlockSpec((gn, KPAD), lambda b: (0, 0)),                # group bcast(resident)
            pl.BlockSpec((N_NODES, NH), lambda b: (0, 0)),             # adj expand (resident)
            pl.BlockSpec((NW, NH + DIM), lambda b: (0, 0)),            # routing PA (resident)
            pl.BlockSpec((NH, NW + DIM), lambda b: (0, 0)),            # routing PB (resident)
        ],
        out_specs=pl.BlockSpec((N_NODES, GROUP * NDIM), lambda b: (b, 0)),
        compiler_params=pltpu.CompilerParams(
            dimension_semantics=("parallel",),        # v7x: split batch over 2 TCs
            vmem_limit_bytes=32 * 1024 * 1024,
        ),
        cost_estimate=cost,
    )(x_rows, kv, adj_c, e_w, wa, w2, vec, GEXP, REXP, ROUTE_PA, ROUTE_PB)

    # un-permute the lane-dense (step, node, group*NDIM) slab back to (B, N, NDIM)
    out = (out_wide.reshape(steps, N, GROUP, NDIM)
           .transpose(0, 2, 1, 3)
           .reshape(B, N, NDIM))
    return out, lgx_dense                                  # lgx passed through unchanged


# --------------------------- pure-JAX reference --------------------------------
def rgat_reference(x, e_dense, adj, p):
    B, N, _ = x.shape
    q = x @ p["wq"] + p["bq"]
    k = x @ p["wk"]
    v = x @ p["wv"]
    qh = q.reshape(B, N, NUM_HEADS, D_K)
    kh = k.reshape(B, N, NUM_HEADS, D_K)
    vh = v.reshape(B, N, NUM_HEADS, D_K)
    eh = e_dense.reshape(B, N, N, NUM_HEADS, D_K)
    s = jnp.sum((kh[:, None, :, :, :] + eh) * qh[:, :, None, :, :], axis=-1)  # (B,dst,src,H)
    s = jnp.exp(jnp.clip(s / math.sqrt(D_K), -10.0, 10.0)) * adj[..., None]
    wv = jnp.sum(s[..., None] * (vh[:, None, :, :, :] + eh), axis=2)          # (B,dst,H,Dk)
    z = jnp.sum(s, axis=2)                                                    # (B,dst,H)
    o = (wv / z[..., None]).reshape(B, N, DIM)
    h1 = _ln(x + o @ p["wo"] + p["bo"], p["ln1_g"], p["ln1_b"])
    ff = jnp.maximum(h1 @ p["ffn_w1"] + p["ffn_b1"], 0.0) @ p["ffn_w2"] + p["ffn_b2"]
    return _ln(h1 + ff, p["ln2_g"], p["ln2_b"]), e_dense


# --------------------------------- main ---------------------------------------
if __name__ == "__main__":
    key = jax.random.PRNGKey(0)
    ks = jax.random.split(key, 16)

    def w(k, shape, scale=0.1):
        return (scale * jax.random.normal(k, shape)).astype(jnp.float32)

    params = {
        "wq": w(ks[0], (NDIM, DIM)), "bq": w(ks[1], (1, DIM)),
        "wk": w(ks[2], (NDIM, DIM)),
        "wv": w(ks[3], (NDIM, DIM)),
        "wo": w(ks[4], (DIM, NDIM)), "bo": w(ks[5], (1, NDIM)),
        "ln1_g": jnp.ones((1, NDIM), jnp.float32), "ln1_b": jnp.zeros((1, NDIM), jnp.float32),
        "ffn_w1": w(ks[6], (NDIM, FFN_HID)), "ffn_b1": w(ks[7], (1, FFN_HID)),
        "ffn_w2": w(ks[8], (FFN_HID, NDIM)), "ffn_b2": w(ks[9], (1, NDIM)),
        "ln2_g": jnp.ones((1, NDIM), jnp.float32), "ln2_b": jnp.zeros((1, NDIM), jnp.float32),
    }

    B = 8                                              # batch of graphs (GROUP=4 per grid step)
    x = jax.random.normal(ks[10], (B, N_NODES, NDIM), jnp.float32)

    # synthetic graphs: random edges + self loops (every node has an in-edge)
    adj_bool = jax.random.bernoulli(ks[11], 0.35, (B, N_NODES, N_NODES))
    adj_bool = adj_bool | jnp.eye(N_NODES, dtype=bool)[None]
    adj = adj_bool.astype(jnp.float32)                 # adj[b, dst, src]

    # dense packing of the per-edge features lgx (zero where there is no edge)
    e_dense = jax.random.normal(ks[12], (B, N_NODES, N_NODES, EDIM), jnp.float32) * adj[..., None]

    out, lgx_out = rgat_layer(x, e_dense, adj, params)
    out = jax.block_until_ready(out)

    ref, _ = rgat_reference(x, e_dense, adj, params)
    # bf16-streamed edge feats / bf16 routing matmuls => test at 1e-2 (f32 path
    # of the previous version passed 5e-3; bf16 adds ~2-4e-3 relative error).
    np.testing.assert_allclose(np.asarray(out), np.asarray(ref), rtol=1e-2, atol=1e-2)

    print("KERNEL_OK")
</pallas_src>

<mosaic_0001>
module attributes {stable_mosaic.version = 11 : i64} {
  func.func @rgat_kernel(%arg0: i32, %arg1: memref<64x32xf32, #tpu.memory_space<vmem>>, %arg2: memref<1x8x1024xf32, #tpu.memory_space<vmem>>, %arg3: memref<64x16xbf16, #tpu.memory_space<vmem>>, %arg4: memref<64x512xbf16, #tpu.memory_space<vmem>>, %arg5: memref<32x768xf32, #tpu.memory_space<vmem>>, %arg6: memref<128x32xf32, #tpu.memory_space<vmem>>, %arg7: memref<8x512xf32, #tpu.memory_space<vmem>>, %arg8: memref<64x8xf32, #tpu.memory_space<vmem>>, %arg9: memref<16x128xbf16, #tpu.memory_space<vmem>>, %arg10: memref<512x160xbf16, #tpu.memory_space<vmem>>, %arg11: memref<128x544xbf16, #tpu.memory_space<vmem>>, %arg12: memref<16x128xf32, #tpu.memory_space<vmem>>) attributes {dimension_semantics = [#tpu.dimension_semantics<parallel>], iteration_bounds = array<i64: 2>, scalar_prefetch = 0 : i64, scratch_operands = 0 : i64, tpu.core_type = #tpu.core_type<tc>, window_params = [{transform_indices = @transform_0, window_bounds = array<i64: 64, 32>}, {transform_indices = @transform_1, window_bounds = array<i64: 1, 8, 1024>}, {transform_indices = @transform_2, window_bounds = array<i64: 64, 16>}, {transform_indices = @transform_3, window_bounds = array<i64: 64, 512>}, {pipeline_mode = #tpu.pipeline_mode<synchronous>, transform_indices = @transform_4, window_bounds = array<i64: 32, 768>}, {pipeline_mode = #tpu.pipeline_mode<synchronous>, transform_indices = @transform_5, window_bounds = array<i64: 128, 32>}, {pipeline_mode = #tpu.pipeline_mode<synchronous>, transform_indices = @transform_6, window_bounds = array<i64: 8, 512>}, {pipeline_mode = #tpu.pipeline_mode<synchronous>, transform_indices = @transform_7, window_bounds = array<i64: 64, 8>}, {pipeline_mode = #tpu.pipeline_mode<synchronous>, transform_indices = @transform_8, window_bounds = array<i64: 16, 128>}, {pipeline_mode = #tpu.pipeline_mode<synchronous>, transform_indices = @transform_9, window_bounds = array<i64: 512, 160>}, {pipeline_mode = #tpu.pipeline_mode<synchronous>, transform_indices = @transform_10, window_bounds = array<i64: 128, 544>}, {transform_indices = @transform_11, window_bounds = array<i64: 16, 128>}]} {
    %c0 = arith.constant 0 : index
    %c0_0 = arith.constant 0 : index
    %0 = vector.load %arg1[%c0, %c0_0] : memref<64x32xf32, #tpu.memory_space<vmem>>, vector<64x32xf32>
    %c0_1 = arith.constant 0 : index
    %c0_2 = arith.constant 0 : index
    %1 = vector.load %arg8[%c0_1, %c0_2] : memref<64x8xf32, #tpu.memory_space<vmem>>, vector<64x8xf32>
    %c0_3 = arith.constant 0 : index
    %c0_4 = arith.constant 0 : index
    %c0_5 = arith.constant 0 : index
    %2 = vector.load %arg2[%c0_3, %c0_4, %c0_5] : memref<1x8x1024xf32, #tpu.memory_space<vmem>>, vector<1x8x1024xf32>
    %3 = vector.shape_cast %2 : vector<1x8x1024xf32> to vector<8x1024xf32>
    %c0_6 = arith.constant 0 : index
    %c0_7 = arith.constant 0 : index
    %4 = vector.load %arg5[%c0_6, %c0_7] : memref<32x768xf32, #tpu.memory_space<vmem>>, vector<32x512xf32>
    %cst = arith.constant dense<0.000000e+00> : vector<64x512xf32>
    %5 = tpu.matmul %0, %4, %cst {dimension_numbers = #tpu.dot_dimension_numbers<[1], [0], [0], [1], [0, 0, 1, 1], [], []>} : vector<64x32xf32>, vector<32x512xf32>, vector<64x512xf32> -> vector<64x512xf32>
    %c0_8 = arith.constant 0 : index
    %c0_9 = arith.constant 0 : index
    %6 = vector.load %arg7[%c0_8, %c0_9] : memref<8x512xf32, #tpu.memory_space<vmem>>, vector<1x512xf32>
    %7 = vector.broadcast %6 : vector<1x512xf32> to vector<64x512xf32>
    %8 = arith.addf %5, %7 : vector<64x512xf32>
    %9 = vector.extract_strided_slice %3 {offsets = [0, 0], sizes = [8, 512], strides = [1, 1]} : vector<8x1024xf32> to vector<8x512xf32>
    %cst_10 = arith.constant dense<0.000000e+00> : vector<64x512xf32>
    %10 = tpu.matmul %1, %9, %cst_10 {dimension_numbers = #tpu.dot_dimension_numbers<[1], [0], [0], [1], [0, 0, 1, 1], [], []>} : vector<64x8xf32>, vector<8x512xf32>, vector<64x512xf32> -> vector<64x512xf32>
    %c0_11 = arith.constant 0 : index
    %c0_12 = arith.constant 0 : index
    %11 = vector.load %arg4[%c0_11, %c0_12] : memref<64x512xbf16, #tpu.memory_space<vmem>>, vector<64x512xbf16>
    %12 = arith.extf %11 : vector<64x512xbf16> to vector<64x512xf32>
    %13 = arith.addf %10, %12 : vector<64x512xf32>
    %14 = arith.mulf %13, %8 : vector<64x512xf32>
    %15 = arith.truncf %14 : vector<64x512xf32> to vector<64x512xbf16>
    %c0_13 = arith.constant 0 : index
    %c0_14 = arith.constant 0 : index
    %16 = vector.load %arg10[%c0_13, %c0_14] : memref<512x160xbf16, #tpu.memory_space<vmem>>, vector<512x128xbf16>
    %cst_15 = arith.constant dense<0.000000e+00> : vector<64x128xf32>
    %17 = tpu.matmul %15, %16, %cst_15 {dimension_numbers = #tpu.dot_dimension_numbers<[1], [0], [0], [1], [0, 0, 1, 1], [], []>} : vector<64x512xbf16>, vector<512x128xbf16>, vector<64x128xf32> -> vector<64x128xf32>
    %cst_16 = arith.constant 5.000000e-01 : f32
    %18 = vector.broadcast %cst_16 : f32 to vector<64x128xf32>
    %19 = arith.mulf %17, %18 : vector<64x128xf32>
    %c0_17 = arith.constant 0 : index
    %c0_18 = arith.constant 0 : index
    %20 = vector.load %arg3[%c0_17, %c0_18] : memref<64x16xbf16, #tpu.memory_space<vmem>>, vector<64x16xbf16>
    %c0_19 = arith.constant 0 : index
    %c0_20 = arith.constant 0 : index
    %21 = vector.load %arg9[%c0_19, %c0_20] : memref<16x128xbf16, #tpu.memory_space<vmem>>, vector<16x128xbf16>
    %cst_21 = arith.constant dense<0.000000e+00> : vector<64x128xf32>
    %22 = tpu.matmul %20, %21, %cst_21 {dimension_numbers = #tpu.dot_dimension_numbers<[1], [0], [0], [1], [0, 0, 1, 1], [], []>} : vector<64x16xbf16>, vector<16x128xbf16>, vector<64x128xf32> -> vector<64x128xf32>
    %cst_22 = arith.constant -1.000000e+01 : f32
    %cst_23 = arith.constant 1.000000e+01 : f32
    %23 = vector.broadcast %cst_22 : f32 to vector<64x128xf32>
    %24 = arith.maximumf %23, %19 : vector<64x128xf32>
    %25 = vector.broadcast %cst_23 : f32 to vector<64x128xf32>
    %26 = arith.minimumf %25, %24 : vector<64x128xf32>
    %27 = math.exp %26 : vector<64x128xf32>
    %28 = arith.mulf %27, %22 : vector<64x128xf32>
    %29 = arith.truncf %28 : vector<64x128xf32> to vector<64x128xbf16>
    %c0_24 = arith.constant 0 : index
    %c0_25 = arith.constant 0 : index
    %30 = vector.load %arg11[%c0_24, %c0_25] : memref<128x544xbf16, #tpu.memory_space<vmem>>, vector<128x544xbf16>
    %cst_26 = arith.constant dense<0.000000e+00> : vector<64x544xf32>
    %31 = tpu.matmul %29, %30, %cst_26 {dimension_numbers = #tpu.dot_dimension_numbers<[1], [0], [0], [1], [0, 0, 1, 1], [], []>} : vector<64x128xbf16>, vector<128x544xbf16>, vector<64x544xf32> -> vector<64x544xf32>
    %32 = vector.extract_strided_slice %31 {offsets = [0, 0], sizes = [64, 512], strides = [1, 1]} : vector<64x544xf32> to vector<64x512xf32>
    %33 = vector.extract_strided_slice %31 {offsets = [0, 512], sizes = [64, 32], strides = [1, 1]} : vector<64x544xf32> to vector<64x32xf32>
    %34 = vector.extract_strided_slice %3 {offsets = [0, 512], sizes = [8, 512], strides = [1, 1]} : vector<8x1024xf32> to vector<8x512xf32>
    %cst_27 = arith.constant dense<0.000000e+00> : vector<64x512xf32>
    %35 = tpu.matmul %1, %34, %cst_27 {dimension_numbers = #tpu.dot_dimension_numbers<[1], [0], [0], [1], [0, 0, 1, 1], [], []>} : vector<64x8xf32>, vector<8x512xf32>, vector<64x512xf32> -> vector<64x512xf32>
    %c0_28 = arith.constant 0 : index
    %c0_29 = arith.constant 0 : index
    %36 = vector.load %arg4[%c0_28, %c0_29] : memref<64x512xbf16, #tpu.memory_space<vmem>>, vector<64x512xbf16>
    %37 = arith.extf %36 : vector<64x512xbf16> to vector<64x512xf32>
    %38 = arith.addf %35, %37 : vector<64x512xf32>
    %39 = arith.mulf %32, %38 : vector<64x512xf32>
    %40 = arith.truncf %39 : vector<64x512xf32> to vector<64x512xbf16>
    %c0_30 = arith.constant 0 : index
    %c128 = arith.constant 128 : index
    %41 = vector.load %arg10[%c0_30, %c128] : memref<512x160xbf16, #tpu.memory_space<vmem>>, vector<512x32xbf16>
    %cst_31 = arith.constant dense<0.000000e+00> : vector<64x32xf32>
    %42 = tpu.matmul %40, %41, %cst_31 {dimension_numbers = #tpu.dot_dimension_numbers<[1], [0], [0], [1], [0, 0, 1, 1], [], []>} : vector<64x512xbf16>, vector<512x32xbf16>, vector<64x32xf32> -> vector<64x32xf32>
    %cst_32 = arith.constant 1.000000e-30 : f32
    %43 = vector.broadcast %cst_32 : f32 to vector<64x32xf32>
    %44 = arith.maximumf %33, %43 : vector<64x32xf32>
    %45 = tpu.reciprocal %44 {approx = true} : vector<64x32xf32> -> vector<64x32xf32>
    %46 = arith.mulf %42, %45 : vector<64x32xf32>
    %c0_33 = arith.constant 0 : index
    %c512 = arith.constant 512 : index
    %47 = vector.load %arg5[%c0_33, %c512] : memref<32x768xf32, #tpu.memory_space<vmem>>, vector<32x32xf32>
    %cst_34 = arith.constant dense<0.000000e+00> : vector<64x32xf32>
    %48 = tpu.matmul %46, %47, %cst_34 {dimension_numbers = #tpu.dot_dimension_numbers<[1], [0], [0], [1], [0, 0, 1, 1], [], []>} : vector<64x32xf32>, vector<32x32xf32>, vector<64x32xf32> -> vector<64x32xf32>
    %49 = arith.addf %0, %48 : vector<64x32xf32>
    %c1 = arith.constant 1 : index
    %c0_35 = arith.constant 0 : index
    %50 = vector.load %arg7[%c1, %c0_35] : memref<8x512xf32, #tpu.memory_space<vmem>>, vector<1x32xf32>
    %51 = vector.broadcast %50 : vector<1x32xf32> to vector<64x32xf32>
    %52 = arith.addf %49, %51 : vector<64x32xf32>
    %c2 = arith.constant 2 : index
    %c0_36 = arith.constant 0 : index
    %53 = vector.load %arg7[%c2, %c0_36] : memref<8x512xf32, #tpu.memory_space<vmem>>, vector<1x32xf32>
    %c3 = arith.constant 3 : index
    %c0_37 = arith.constant 0 : index
    %54 = vector.load %arg7[%c3, %c0_37] : memref<8x512xf32, #tpu.memory_space<vmem>>, vector<1x32xf32>
    %cst_38 = arith.constant dense<0.000000e+00> : vector<64xf32>
    %55 = vector.multi_reduction <add>, %52, %cst_38 [1] : vector<64x32xf32> to vector<64xf32>
    %56 = vector.shape_cast %55 : vector<64xf32> to vector<64x1xf32>
    %cst_39 = arith.constant 3.200000e+01 : f32
    %57 = vector.broadcast %cst_39 : f32 to vector<64x1xf32>
    %58 = arith.divf %56, %57 : vector<64x1xf32>
    %59 = vector.broadcast %58 : vector<64x1xf32> to vector<64x32xf32>
    %60 = arith.subf %52, %59 : vector<64x32xf32>
    %61 = arith.mulf %60, %60 : vector<64x32xf32>
    %cst_40 = arith.constant dense<0.000000e+00> : vector<64xf32>
    %62 = vector.multi_reduction <add>, %61, %cst_40 [1] : vector<64x32xf32> to vector<64xf32>
    %63 = vector.shape_cast %62 : vector<64xf32> to vector<64x1xf32>
    %cst_41 = arith.constant 3.200000e+01 : f32
    %64 = vector.broadcast %cst_41 : f32 to vector<64x1xf32>
    %65 = arith.divf %63, %64 : vector<64x1xf32>
    %66 = vector.broadcast %58 : vector<64x1xf32> to vector<64x32xf32>
    %67 = arith.subf %52, %66 : vector<64x32xf32>
    %cst_42 = arith.constant 9.99999974E-6 : f32
    %68 = vector.broadcast %cst_42 : f32 to vector<64x1xf32>
    %69 = arith.addf %65, %68 : vector<64x1xf32>
    %70 = math.rsqrt %69 : vector<64x1xf32>
    %71 = vector.broadcast %70 : vector<64x1xf32> to vector<64x32xf32>
    %72 = arith.mulf %67, %71 : vector<64x32xf32>
    %73 = vector.broadcast %53 : vector<1x32xf32> to vector<64x32xf32>
    %74 = arith.mulf %72, %73 : vector<64x32xf32>
    %75 = vector.broadcast %54 : vector<1x32xf32> to vector<64x32xf32>
    %76 = arith.addf %74, %75 : vector<64x32xf32>
    %c0_43 = arith.constant 0 : index
    %c640 = arith.constant 640 : index
    %77 = vector.load %arg5[%c0_43, %c640] : memref<32x768xf32, #tpu.memory_space<vmem>>, vector<32x128xf32>
    %cst_44 = arith.constant dense<0.000000e+00> : vector<64x128xf32>
    %78 = tpu.matmul %76, %77, %cst_44 {dimension_numbers = #tpu.dot_dimension_numbers<[1], [0], [0], [1], [0, 0, 1, 1], [], []>} : vector<64x32xf32>, vector<32x128xf32>, vector<64x128xf32> -> vector<64x128xf32>
    %c4 = arith.constant 4 : index
    %c0_45 = arith.constant 0 : index
    %79 = vector.load %arg7[%c4, %c0_45] : memref<8x512xf32, #tpu.memory_space<vmem>>, vector<1x128xf32>
    %80 = vector.broadcast %79 : vector<1x128xf32> to vector<64x128xf32>
    %81 = arith.addf %78, %80 : vector<64x128xf32>
    %cst_46 = arith.constant 0.000000e+00 : f32
    %82 = vector.broadcast %cst_46 : f32 to vector<64x128xf32>
    %83 = arith.maximumf %81, %82 : vector<64x128xf32>
    %c0_47 = arith.constant 0 : index
    %c0_48 = arith.constant 0 : index
    %84 = vector.load %arg6[%c0_47, %c0_48] : memref<128x32xf32, #tpu.memory_space<vmem>>, vector<128x32xf32>
    %cst_49 = arith.constant dense<0.000000e+00> : vector<64x32xf32>
    %85 = tpu.matmul %83, %84, %cst_49 {dimension_numbers = #tpu.dot_dimension_numbers<[1], [0], [0], [1], [0, 0, 1, 1], [], []>} : vector<64x128xf32>, vector<128x32xf32>, vector<64x32xf32> -> vector<64x32xf32>
    %c5 = arith.constant 5 : index
    %c0_50 = arith.constant 0 : index
    %86 = vector.load %arg7[%c5, %c0_50] : memref<8x512xf32, #tpu.memory_space<vmem>>, vector<1x32xf32>
    %87 = vector.broadcast %86 : vector<1x32xf32> to vector<64x32xf32>
    %88 = arith.addf %85, %87 : vector<64x32xf32>
    %89 = arith.addf %76, %88 : vector<64x32xf32>
    %c6 = arith.constant 6 : index
    %c0_51 = arith.constant 0 : index
    %90 = vector.load %arg7[%c6, %c0_51] : memref<8x512xf32, #tpu.memory_space<vmem>>, vector<1x32xf32>
    %c7 = arith.constant 7 : index
    %c0_52 = arith.constant 0 : index
    %91 = vector.load %arg7[%c7, %c0_52] : memref<8x512xf32, #tpu.memory_space<vmem>>, vector<1x32xf32>
    %cst_53 = arith.constant dense<0.000000e+00> : vector<64xf32>
    %92 = vector.multi_reduction <add>, %89, %cst_53 [1] : vector<64x32xf32> to vector<64xf32>
    %93 = vector.shape_cast %92 : vector<64xf32> to vector<64x1xf32>
    %cst_54 = arith.constant 3.200000e+01 : f32
    %94 = vector.broadcast %cst_54 : f32 to vector<64x1xf32>
    %95 = arith.divf %93, %94 : vector<64x1xf32>
    %96 = vector.broadcast %95 : vector<64x1xf32> to vector<64x32xf32>
    %97 = arith.subf %89, %96 : vector<64x32xf32>
    %98 = arith.mulf %97, %97 : vector<64x32xf32>
    %cst_55 = arith.constant dense<0.000000e+00> : vector<64xf32>
    %99 = vector.multi_reduction <add>, %98, %cst_55 [1] : vector<64x32xf32> to vector<64xf32>
    %100 = vector.shape_cast %99 : vector<64xf32> to vector<64x1xf32>
    %cst_56 = arith.constant 3.200000e+01 : f32
    %101 = vector.broadcast %cst_56 : f32 to vector<64x1xf32>
    %102 = arith.divf %100, %101 : vector<64x1xf32>
    %103 = vector.broadcast %95 : vector<64x1xf32> to vector<64x32xf32>
    %104 = arith.subf %89, %103 : vector<64x32xf32>
    %cst_57 = arith.constant 9.99999974E-6 : f32
    %105 = vector.broadcast %cst_57 : f32 to vector<64x1xf32>
    %106 = arith.addf %102, %105 : vector<64x1xf32>
    %107 = math.rsqrt %106 : vector<64x1xf32>
    %108 = vector.broadcast %107 : vector<64x1xf32> to vector<64x32xf32>
    %109 = arith.mulf %104, %108 : vector<64x32xf32>
    %110 = vector.broadcast %90 : vector<1x32xf32> to vector<64x32xf32>
    %111 = arith.mulf %109, %110 : vector<64x32xf32>
    %112 = vector.broadcast %91 : vector<1x32xf32> to vector<64x32xf32>
    %113 = arith.addf %111, %112 : vector<64x32xf32>
    %114 = vector.extract_strided_slice %113 {offsets = [0, 0], sizes = [16, 32], strides = [1, 1]} : vector<64x32xf32> to vector<16x32xf32>
    %115 = vector.extract_strided_slice %113 {offsets = [16, 0], sizes = [16, 32], strides = [1, 1]} : vector<64x32xf32> to vector<16x32xf32>
    %116 = vector.extract_strided_slice %113 {offsets = [32, 0], sizes = [16, 32], strides = [1, 1]} : vector<64x32xf32> to vector<16x32xf32>
    %117 = vector.extract_strided_slice %113 {offsets = [48, 0], sizes = [16, 32], strides = [1, 1]} : vector<64x32xf32> to vector<16x32xf32>
    %118 = tpu.concatenate %114, %115, %116, %117 in 1 : vector<16x32xf32>, vector<16x32xf32>, vector<16x32xf32>, vector<16x32xf32> -> vector<16x128xf32>
    %c0_58 = arith.constant 0 : index
    %c0_59 = arith.constant 0 : index
    %119 = vector.load %arg12[%c0_58, %c0_59] : memref<16x128xf32, #tpu.memory_space<vmem>>, vector<16x128xf32>
    tpu.vector_store %arg12[%c0_58, %c0_59], %118 {strides = array<i32>} : memref<16x128xf32, #tpu.memory_space<vmem>>, vector<16x128xf32>,
    return
  }
  func.func @transform_0(%arg0: i32) -> (i32, i32) {
    %c0_i32 = arith.constant 0 : i32
    %c0_i32_0 = arith.constant 0 : i32
    return %arg0, %c0_i32 : i32, i32
  }
  func.func @transform_1(%arg0: i32) -> (i32, i32, i32) {
    %c0_i32 = arith.constant 0 : i32
    %c0_i32_0 = arith.constant 0 : i32
    %c0_i32_1 = arith.constant 0 : i32
    return %arg0, %c0_i32, %c0_i32_0 : i32, i32, i32
  }
  func.func @transform_2(%arg0: i32) -> (i32, i32) {
    %c0_i32 = arith.constant 0 : i32
    %c0_i32_0 = arith.constant 0 : i32
    return %arg0, %c0_i32 : i32, i32
  }
  func.func @transform_3(%arg0: i32) -> (i32, i32) {
    %c0_i32 = arith.constant 0 : i32
    %c0_i32_0 = arith.constant 0 : i32
    return %arg0, %c0_i32 : i32, i32
  }
  func.func @transform_4(%arg0: i32) -> (i32, i32) {
    %c0_i32 = arith.constant 0 : i32
    %c0_i32_0 = arith.constant 0 : i32
    %c0_i32_1 = arith.constant 0 : i32
    return %c0_i32, %c0_i32_0 : i32, i32
  }
  func.func @transform_5(%arg0: i32) -> (i32, i32) {
    %c0_i32 = arith.constant 0 : i32
    %c0_i32_0 = arith.constant 0 : i32
    %c0_i32_1 = arith.constant 0 : i32
    return %c0_i32, %c0_i32_0 : i32, i32
  }
  func.func @transform_6(%arg0: i32) -> (i32, i32) {
    %c0_i32 = arith.constant 0 : i32
    %c0_i32_0 = arith.constant 0 : i32
    %c0_i32_1 = arith.constant 0 : i32
    return %c0_i32, %c0_i32_0 : i32, i32
  }
  func.func @transform_7(%arg0: i32) -> (i32, i32) {
    %c0_i32 = arith.constant 0 : i32
    %c0_i32_0 = arith.constant 0 : i32
    %c0_i32_1 = arith.constant 0 : i32
    return %c0_i32, %c0_i32_0 : i32, i32
  }
  func.func @transform_8(%arg0: i32) -> (i32, i32) {
    %c0_i32 = arith.constant 0 : i32
    %c0_i32_0 = arith.constant 0 : i32
    %c0_i32_1 = arith.constant 0 : i32
    return %c0_i32, %c0_i32_0 : i32, i32
  }
  func.func @transform_9(%arg0: i32) -> (i32, i32) {
    %c0_i32 = arith.constant 0 : i32
    %c0_i32_0 = arith.constant 0 : i32
    %c0_i32_1 = arith.constant 0 : i32
    return %c0_i32, %c0_i32_0 : i32, i32
  }
  func.func @transform_10(%arg0: i32) -> (i32, i32) {
    %c0_i32 = arith.constant 0 : i32
    %c0_i32_0 = arith.constant 0 : i32
    %c0_i32_1 = arith.constant 0 : i32
    return %c0_i32, %c0_i32_0 : i32, i32
  }
  func.func @transform_11(%arg0: i32) -> (i32, i32) {
    %c0_i32 = arith.constant 0 : i32
    %c0_i32_0 = arith.constant 0 : i32
    return %arg0, %c0_i32 : i32, i32
  }
}

</mosaic_0001>

<llo_original>
// kernel: tile.16
$region0: #{tile.16}
  #allocation2 [shape = 's32[1]{0}', space=sflag, size = 0x4, scoped, tag = 'scoped memory for tile.16']
  %s0 = inlined_call_operand.hbm [shape: f32[32], index: 0, kind: input, shape index: {}]
  %s1 = inlined_call_operand.vmem [shape: f32[16,32], index: 1, kind: output, shape index: {}]
  $region1: #{tile.16} parent=0
    #allocation0 [shape = 'u8[512]{0}', space=vmem, size = 0x400, scoped, tag = 'operand span for operand 0']
    #allocation1 [shape = 's32[1]{0}', space=sflag, size = 0x4, scoped, tag = 'scoped memory for tile.16']
    %2 = vsyncpa [#allocation1], 0
    // Predicated region
    $region2: #{tile.16} parent=1 // pred_check
      _
    $region3: #{tile.16} parent=1 // pred_check_branch
      %4 = sbr.rel (0) target = $region5
    $region4: #{tile.16} parent=1 // pred_region
      %s6 = ssub.s32 16, 16
      %7 = vsyncadd [#allocation1], %s6
      %s9 = sshll.u32 [#allocation0], 4
      %s10 = int_to_ptr.vmem [resolvable:$true] %s9
      %12 = dma.hbm_to_vmem [thread:$0]  %s0, 16, %s10, [#allocation1]
    $region5: #{tile.16} parent=1 // pred_fallthru
      _
    // Predicated region
    $region6: #{tile.16} parent=1 // pred_check
      _
    $region7: #{tile.16} parent=1 // pred_check_branch
      %14 = sbr.rel (0) target = $region9
    $region8: #{tile.16} parent=1 // pred_region
      %15 = dma.done [#allocation1], 16
    $region9: #{tile.16} parent=1 // pred_fallthru
      _
    %v16 = vld [vmem:[#allocation0] ss:$0 sm:$0xff]
    %17 = vst [vmem:[%s1] sm:$0xff] %v16
    %s18 = scalar_lea.vmem %s1, 8
    %19 = vst [vmem:[%s18] sm:$0xff] %v16
    %20 = vsyncpa [#allocation1], 1

// kernel: rgat_layer.1
$region0: #{rgat_layer.1}
  #allocation0 [shape = 'u32[]', space=smem, size = 0x4, offset = 0x4, fixed_abs, tag = 'smem constant byte address 0x4 - core index']
  #allocation1 [shape = 'u32[144,128]{1,0:T(1,128)}', space=vmem, size = 0x12000, scoped, tag = 'internal scratch']
  %s0 = inlined_call_operand.vmem [shape: f32[128,32], index: 0, kind: input, shape index: {}]
  %s1 = inlined_call_operand.vmem [shape: f32[2,8,1024], index: 1, kind: input, shape index: {}]
  %s2 = inlined_call_operand.vmem [shape: bf16[128,16], index: 2, kind: input, shape index: {}]
  %s3 = inlined_call_operand.vmem [shape: bf16[128,512], index: 3, kind: input, shape index: {}]
  %s4 = inlined_call_operand.vmem [shape: f32[32,768], index: 4, kind: input, shape index: {}]
  %s5 = inlined_call_operand.vmem [shape: f32[128,32], index: 5, kind: input, shape index: {}]
  %s6 = inlined_call_operand.vmem [shape: f32[8,512], index: 6, kind: input, shape index: {}]
  %s7 = inlined_call_operand.vmem [shape: f32[64,8], index: 7, kind: input, shape index: {}]
  %s8 = inlined_call_operand.vmem [shape: bf16[16,128], index: 8, kind: input, shape index: {}]
  %s9 = inlined_call_operand.vmem [shape: bf16[512,160], index: 9, kind: input, shape index: {}]
  %s10 = inlined_call_operand.vmem [shape: bf16[128,544], index: 10, kind: input, shape index: {}]
  %s11 = inlined_call_operand.vmem [shape: f32[32,128], index: 11, kind: output, shape index: {}]
  %s12 = sld [smem:[#allocation0]]
  $region77: #{rgat_layer.1} parent=0
    _
  %s14 = ssub.s32 1, %s12
  %s15 = scalar_select 0, %s14, %s12
  loop: start=0, step=1, limit=4
  $region2: #{rgat_layer.1} parent=0 // loop_pre_header
    _
  $region3: #{rgat_layer.1} parent=0 // loop_header
    %s17 = sphi 0, %s21
    %p18 = scmp.ge.s32.totalorder %s17, 4
    %s27 = sphi 0, %s29
    %s30 = sphi 0, %s27
    %s31 = sphi 0, %s30
    %s47 = sphi 0, %s31
    %s53 = sphi 0, %s55
    %s56 = sphi 0, %s53
    %s57 = sphi 0, %s56
    %s73 = sphi 0, %s57
    %s79 = sphi 0, %s81
    %s82 = sphi 0, %s79
    %s83 = sphi 0, %s82
    %s99 = sphi 0, %s83
    %s105 = sphi 0, %s107
    %s108 = sphi 0, %s105
    %s109 = sphi 0, %s108
    %s125 = sphi 0, %s109
    %s129 = sphi 0, %s129
    %s131 = sphi 0, %s129
    %s132 = sphi 0, %s131
    %s146 = sphi 0, %s132
    %s150 = sphi 0, %s150
    %s152 = sphi 0, %s150
    %s153 = sphi 0, %s152
    %s167 = sphi 0, %s153
    %s171 = sphi 0, %s171
    %s173 = sphi 0, %s171
    %s174 = sphi 0, %s173
    %s188 = sphi 0, %s174
    %s192 = sphi 0, %s192
    %s194 = sphi 0, %s192
    %s195 = sphi 0, %s194
    %s209 = sphi 0, %s195
    %s213 = sphi 0, %s213
    %s215 = sphi 0, %s213
    %s216 = sphi 0, %s215
    %s230 = sphi 0, %s216
    %s234 = sphi 0, %s234
    %s236 = sphi 0, %s234
    %s237 = sphi 0, %s236
    %s251 = sphi 0, %s237
    %s255 = sphi 0, %s255
    %s257 = sphi 0, %s255
    %s258 = sphi 0, %s257
    %s272 = sphi 0, %s258
    %s278 = sphi 0, %s280
    %s281 = sphi 0, %s278
    %s282 = sphi 0, %s281
    %s298 = sphi 0, %s282
  $region4: #{rgat_layer.1} parent=0 // loop_header_branch
    %20 = sbr.rel (%p18) target = $region8
  $region5: #{rgat_layer.1} parent=0 // loop_body
    %s22 = ssub.s32 %s17, 1
    %s23 = ssub.s32 %s17, 2
    %s24 = sadd.s32 %s17, 1
    %s25 = ssub.s32 %s17, %s24
    %p26 = scmp.eq.s32.totalorder %s25, 0
    %s28 = sadd.s32 %s27, 1
    %s29 = scalar_select %p26, %s27, %s28
    %p32 = pneg %p26
    %p33 = scmp.eq.s32.totalorder %s17, 1
    %p34 = por %p32, %p33
    %p35 = scmp.ne.s32.totalorder %s27, %s30
    %p36 = scmp.eq.s32.totalorder %s17, 0
    %p37 = por %p35, %p36
    %p38 = scmp.ne.s32.totalorder %s27, %s30
    %p39 = scmp.eq.s32.totalorder %s22, 1
    %p40 = por %p38, %p39
    %p41 = scmp.ne.s32.totalorder %s30, %s31
    %p42 = scmp.eq.s32.totalorder %s22, 0
    %p43 = por %p41, %p42
    %p44 = scmp.ne.s32.totalorder %s30, %s31
    %p45 = scmp.eq.s32.totalorder %s23, 1
    %p46 = por %p44, %p45
    %p48 = scmp.ne.s32.totalorder %s31, %s47
    %p49 = scmp.eq.s32.totalorder %s23, 0
    %p50 = por %p48, %p49
    %s51 = ssub.s32 %s17, %s24
    %p52 = scmp.eq.s32.totalorder %s51, 0
    %s54 = sadd.s32 %s53, 1
    %s55 = scalar_select %p52, %s53, %s54
    %p58 = pneg %p52
    %p59 = scmp.eq.s32.totalorder %s17, 1
    %p60 = por %p58, %p59
    %p61 = scmp.ne.s32.totalorder %s53, %s56
    %p62 = scmp.eq.s32.totalorder %s17, 0
    %p63 = por %p61, %p62
    %p64 = scmp.ne.s32.totalorder %s53, %s56
    %p65 = scmp.eq.s32.totalorder %s22, 1
    %p66 = por %p64, %p65
    %p67 = scmp.ne.s32.totalorder %s56, %s57
    %p68 = scmp.eq.s32.totalorder %s22, 0
    %p69 = por %p67, %p68
    %p70 = scmp.ne.s32.totalorder %s56, %s57
    %p71 = scmp.eq.s32.totalorder %s23, 1
    %p72 = por %p70, %p71
    %p74 = scmp.ne.s32.totalorder %s57, %s73
    %p75 = scmp.eq.s32.totalorder %s23, 0
    %p76 = por %p74, %p75
    %s77 = ssub.s32 %s17, %s24
    %p78 = scmp.eq.s32.totalorder %s77, 0
    %s80 = sadd.s32 %s79, 1
    %s81 = scalar_select %p78, %s79, %s80
    %p84 = pneg %p78
    %p85 = scmp.eq.s32.totalorder %s17, 1
    %p86 = por %p84, %p85
    %p87 = scmp.ne.s32.totalorder %s79, %s82
    %p88 = scmp.eq.s32.totalorder %s17, 0
    %p89 = por %p87, %p88
    %p90 = scmp.ne.s32.totalorder %s79, %s82
    %p91 = scmp.eq.s32.totalorder %s22, 1
    %p92 = por %p90, %p91
    %p93 = scmp.ne.s32.totalorder %s82, %s83
    %p94 = scmp.eq.s32.totalorder %s22, 0
    %p95 = por %p93, %p94
    %p96 = scmp.ne.s32.totalorder %s82, %s83
    %p97 = scmp.eq.s32.totalorder %s23, 1
    %p98 = por %p96, %p97
    %p100 = scmp.ne.s32.totalorder %s83, %s99
    %p101 = scmp.eq.s32.totalorder %s23, 0
    %p102 = por %p100, %p101
    %s103 = ssub.s32 %s17, %s24
    %p104 = scmp.eq.s32.totalorder %s103, 0
    %s106 = sadd.s32 %s105, 1
    %s107 = scalar_select %p104, %s105, %s106
    %p110 = pneg %p104
    %p111 = scmp.eq.s32.totalorder %s17, 1
    %p112 = por %p110, %p111
    %p113 = scmp.ne.s32.totalorder %s105, %s108
    %p114 = scmp.eq.s32.totalorder %s17, 0
    %p115 = por %p113, %p114
    %p116 = scmp.ne.s32.totalorder %s105, %s108
    %p117 = scmp.eq.s32.totalorder %s22, 1
    %p118 = por %p116, %p117
    %p119 = scmp.ne.s32.totalorder %s108, %s109
    %p120 = scmp.eq.s32.totalorder %s22, 0
    %p121 = por %p119, %p120
    %p122 = scmp.ne.s32.totalorder %s108, %s109
    %p123 = scmp.eq.s32.totalorder %s23, 1
    %p124 = por %p122, %p123
    %p126 = scmp.ne.s32.totalorder %s109, %s125
    %p127 = scmp.eq.s32.totalorder %s23, 0
    %p128 = por %p126, %p127
    %s130 = sadd.s32 %s129, 1
    %p133 = scmp.eq.s32.totalorder %s17, 1
    %p134 = scmp.ne.s32.totalorder %s129, %s131
    %p135 = scmp.eq.s32.totalorder %s17, 0
    %p136 = por %p134, %p135
    %p137 = scmp.ne.s32.totalorder %s129, %s131
    %p138 = scmp.eq.s32.totalorder %s22, 1
    %p139 = por %p137, %p138
    %p140 = scmp.ne.s32.totalorder %s131, %s132
    %p141 = scmp.eq.s32.totalorder %s22, 0
    %p142 = por %p140, %p141
    %p143 = scmp.ne.s32.totalorder %s131, %s132
    %p144 = scmp.eq.s32.totalorder %s23, 1
    %p145 = por %p143, %p144
    %p147 = scmp.ne.s32.totalorder %s132, %s146
    %p148 = scmp.eq.s32.totalorder %s23, 0
    %p149 = por %p147, %p148
    %s151 = sadd.s32 %s150, 1
    %p154 = scmp.eq.s32.totalorder %s17, 1
    %p155 = scmp.ne.s32.totalorder %s150, %s152
    %p156 = scmp.eq.s32.totalorder %s17, 0
    %p157 = por %p155, %p156
    %p158 = scmp.ne.s32.totalorder %s150, %s152
    %p159 = scmp.eq.s32.totalorder %s22, 1
    %p160 = por %p158, %p159
    %p161 = scmp.ne.s32.totalorder %s152, %s153
    %p162 = scmp.eq.s32.totalorder %s22, 0
    %p163 = por %p161, %p162
    %p164 = scmp.ne.s32.totalorder %s152, %s153
    %p165 = scmp.eq.s32.totalorder %s23, 1
    %p166 = por %p164, %p165
    %p168 = scmp.ne.s32.totalorder %s153, %s167
    %p169 = scmp.eq.s32.totalorder %s23, 0
    %p170 = por %p168, %p169
    %s172 = sadd.s32 %s171, 1
    %p175 = scmp.eq.s32.totalorder %s17, 1
    %p176 = scmp.ne.s32.totalorder %s171, %s173
    %p177 = scmp.eq.s32.totalorder %s17, 0
    %p178 = por %p176, %p177
    %p179 = scmp.ne.s32.totalorder %s171, %s173
    %p180 = scmp.eq.s32.totalorder %s22, 1
    %p181 = por %p179, %p180
    %p182 = scmp.ne.s32.totalorder %s173, %s174
    %p183 = scmp.eq.s32.totalorder %s22, 0
    %p184 = por %p182, %p183
    %p185 = scmp.ne.s32.totalorder %s173, %s174
    %p186 = scmp.eq.s32.totalorder %s23, 1
    %p187 = por %p185, %p186
    %p189 = scmp.ne.s32.totalorder %s174, %s188
    %p190 = scmp.eq.s32.totalorder %s23, 0
    %p191 = por %p189, %p190
    %s193 = sadd.s32 %s192, 1
    %p196 = scmp.eq.s32.totalorder %s17, 1
    %p197 = scmp.ne.s32.totalorder %s192, %s194
    %p198 = scmp.eq.s32.totalorder %s17, 0
    %p199 = por %p197, %p198
    %p200 = scmp.ne.s32.totalorder %s192, %s194
    %p201 = scmp.eq.s32.totalorder %s22, 1
    %p202 = por %p200, %p201
    %p203 = scmp.ne.s32.totalorder %s194, %s195
    %p204 = scmp.eq.s32.totalorder %s22, 0
    %p205 = por %p203, %p204
    %p206 = scmp.ne.s32.totalorder %s194, %s195
    %p207 = scmp.eq.s32.totalorder %s23, 1
    %p208 = por %p206, %p207
    %p210 = scmp.ne.s32.totalorder %s195, %s209
    %p211 = scmp.eq.s32.totalorder %s23, 0
    %p212 = por %p210, %p211
    %s214 = sadd.s32 %s213, 1
    %p217 = scmp.eq.s32.totalorder %s17, 1
    %p218 = scmp.ne.s32.totalorder %s213, %s215
    %p219 = scmp.eq.s32.totalorder %s17, 0
    %p220 = por %p218, %p219
    %p221 = scmp.ne.s32.totalorder %s213, %s215
    %p222 = scmp.eq.s32.totalorder %s22, 1
    %p223 = por %p221, %p222
    %p224 = scmp.ne.s32.totalorder %s215, %s216
    %p225 = scmp.eq.s32.totalorder %s22, 0
    %p226 = por %p224, %p225
    %p227 = scmp.ne.s32.totalorder %s215, %s216
    %p228 = scmp.eq.s32.totalorder %s23, 1
    %p229 = por %p227, %p228
    %p231 = scmp.ne.s32.totalorder %s216, %s230
    %p232 = scmp.eq.s32.totalorder %s23, 0
    %p233 = por %p231, %p232
    %s235 = sadd.s32 %s234, 1
    %p238 = scmp.eq.s32.totalorder %s17, 1
    %p239 = scmp.ne.s32.totalorder %s234, %s236
    %p240 = scmp.eq.s32.totalorder %s17, 0
    %p241 = por %p239, %p240
    %p242 = scmp.ne.s32.totalorder %s234, %s236
    %p243 = scmp.eq.s32.totalorder %s22, 1
    %p244 = por %p242, %p243
    %p245 = scmp.ne.s32.totalorder %s236, %s237
    %p246 = scmp.eq.s32.totalorder %s22, 0
    %p247 = por %p245, %p246
    %p248 = scmp.ne.s32.totalorder %s236, %s237
    %p249 = scmp.eq.s32.totalorder %s23, 1
    %p250 = por %p248, %p249
    %p252 = scmp.ne.s32.totalorder %s237, %s251
    %p253 = scmp.eq.s32.totalorder %s23, 0
    %p254 = por %p252, %p253
    %s256 = sadd.s32 %s255, 1
    %p259 = scmp.eq.s32.totalorder %s17, 1
    %p260 = scmp.ne.s32.totalorder %s255, %s257
    %p261 = scmp.eq.s32.totalorder %s17, 0
    %p262 = por %p260, %p261
    %p263 = scmp.ne.s32.totalorder %s255, %s257
    %p264 = scmp.eq.s32.totalorder %s22, 1
    %p265 = por %p263, %p264
    %p266 = scmp.ne.s32.totalorder %s257, %s258
    %p267 = scmp.eq.s32.totalorder %s22, 0
    %p268 = por %p266, %p267
    %p269 = scmp.ne.s32.totalorder %s257, %s258
    %p270 = scmp.eq.s32.totalorder %s23, 1
    %p271 = por %p269, %p270
    %p273 = scmp.ne.s32.totalorder %s258, %s272
    %p274 = scmp.eq.s32.totalorder %s23, 0
    %p275 = por %p273, %p274
    %s276 = ssub.s32 %s17, %s24
    %p277 = scmp.eq.s32.totalorder %s276, 0
    %s279 = sadd.s32 %s278, 1
    %s280 = scalar_select %p277, %s278, %s279
    %p283 = pneg %p277
    %p284 = scmp.eq.s32.totalorder %s17, 1
    %p285 = por %p283, %p284
    %p286 = scmp.ne.s32.totalorder %s278, %s281
    %p287 = scmp.eq.s32.totalorder %s17, 0
    %p288 = por %p286, %p287
    %p289 = scmp.ne.s32.totalorder %s278, %s281
    %p290 = scmp.eq.s32.totalorder %s22, 1
    %p291 = por %p289, %p290
    %p292 = scmp.ne.s32.totalorder %s281, %s282
    %p293 = scmp.eq.s32.totalorder %s22, 0
    %p294 = por %p292, %p293
    %p295 = scmp.ne.s32.totalorder %s281, %s282
    %p296 = scmp.eq.s32.totalorder %s23, 1
    %p297 = por %p295, %p296
    %p299 = scmp.ne.s32.totalorder %s282, %s298
    %p300 = scmp.eq.s32.totalorder %s23, 0
    %p301 = por %p299, %p300
    %p302 = scmp.le.s32.totalorder 1, %s17
    %p303 = scmp.lt.s32.totalorder %s17, 3
    %p304 = pnand %p302, %p303
    %p305 = pneg %p304
    // Predicated region
    $region9: #{rgat_layer.1} parent=5 // pred_check
      _
    $region10: #{rgat_layer.1} parent=5 // pred_check_branch
      %307 = sbr.rel (%p304) target = $region12
    $region11: #{rgat_layer.1} parent=5 // pred_region
      %s308 = ssub.s32 %s17, 1
      // Predicated region
      $region13: #{rgat_layer.1} parent=11 // pred_check
        %p309 = pneg %p142
      $region14: #{rgat_layer.1} parent=11 // pred_check_branch
        %311 = sbr.rel (%p309) target = $region16
      $region15: #{rgat_layer.1} parent=11 // pred_region
        _
      $region16: #{rgat_layer.1} parent=11 // pred_fallthru
        _
      // Predicated region
      $region17: #{rgat_layer.1} parent=11 // pred_check
        %p312 = pneg %p163
      $region18: #{rgat_layer.1} parent=11 // pred_check_branch
        %314 = sbr.rel (%p312) target = $region20
      $region19: #{rgat_layer.1} parent=11 // pred_region
        _
      $region20: #{rgat_layer.1} parent=11 // pred_fallthru
        _
      // Predicated region
      $region21: #{rgat_layer.1} parent=11 // pred_check
        %p315 = pneg %p184
      $region22: #{rgat_layer.1} parent=11 // pred_check_branch
        %317 = sbr.rel (%p315) target = $region24
      $region23: #{rgat_layer.1} parent=11 // pred_region
        _
      $region24: #{rgat_layer.1} parent=11 // pred_fallthru
        _
      // Predicated region
      $region25: #{rgat_layer.1} parent=11 // pred_check
        %p318 = pneg %p205
      $region26: #{rgat_layer.1} parent=11 // pred_check_branch
        %320 = sbr.rel (%p318) target = $region28
      $region27: #{rgat_layer.1} parent=11 // pred_region
        _
      $region28: #{rgat_layer.1} parent=11 // pred_fallthru
        _
      // Predicated region
      $region29: #{rgat_layer.1} parent=11 // pred_check
        %p321 = pneg %p226
      $region30: #{rgat_layer.1} parent=11 // pred_check_branch
        %323 = sbr.rel (%p321) target = $region32
      $region31: #{rgat_layer.1} parent=11 // pred_region
        _
      $region32: #{rgat_layer.1} parent=11 // pred_fallthru
        _
      // Predicated region
      $region33: #{rgat_layer.1} parent=11 // pred_check
        %p324 = pneg %p247
      $region34: #{rgat_layer.1} parent=11 // pred_check_branch
        %326 = sbr.rel (%p324) target = $region36
      $region35: #{rgat_layer.1} parent=11 // pred_region
        _
      $region36: #{rgat_layer.1} parent=11 // pred_fallthru
        _
      // Predicated region
      $region37: #{rgat_layer.1} parent=11 // pred_check
        %p327 = pneg %p268
      $region38: #{rgat_layer.1} parent=11 // pred_check_branch
        %329 = sbr.rel (%p327) target = $region40
      $region39: #{rgat_layer.1} parent=11 // pred_region
        _
      $region40: #{rgat_layer.1} parent=11 // pred_fallthru
        _
    $region12: #{rgat_layer.1} parent=5 // pred_fallthru
      _
    %p330 = scmp.lt.s32.totalorder %s17, 2
    // Predicated region
    $region41: #{rgat_layer.1} parent=5 // pred_check
      %p331 = pneg %p330
    $region42: #{rgat_layer.1} parent=5 // pred_check_branch
      %333 = sbr.rel (%p331) target = $region44
    $region43: #{rgat_layer.1} parent=5 // pred_region
      // Predicated region
      $region45: #{rgat_layer.1} parent=43 // pred_check
        %p334 = pneg %p37
      $region46: #{rgat_layer.1} parent=43 // pred_check_branch
        %336 = sbr.rel (%p334) target = $region48
      $region47: #{rgat_layer.1} parent=43 // pred_region
        %s337 = smul.u32 8, %s17
        %p338 = scmp.lt.s32.totalorder %s337, 15
        %s339 = scalar_select %p338, %s337, 15
        %s340 = smul.addr %s339, 8
        %s341 = scalar_lea.vmem %s0, %s340
        %s342 = smul.u32 8, %s17
      $region48: #{rgat_layer.1} parent=43 // pred_fallthru
        _
      // Predicated region
      $region49: #{rgat_layer.1} parent=43 // pred_check
        %p343 = pneg %p63
      $region50: #{rgat_layer.1} parent=43 // pred_check_branch
        %345 = sbr.rel (%p343) target = $region52
      $region51: #{rgat_layer.1} parent=43 // pred_region
        %p346 = scmp.lt.s32.totalorder %s17, 1
        %s347 = scalar_select %p346, %s17, 1
        %s348 = smul.addr %s347, 8
        %s349 = smul.addr %s348, 8
        %s350 = scalar_lea.vmem %s1, %s349
      $region52: #{rgat_layer.1} parent=43 // pred_fallthru
        _
      // Predicated region
      $region53: #{rgat_layer.1} parent=43 // pred_check
        %p351 = pneg %p89
      $region54: #{rgat_layer.1} parent=43 // pred_check_branch
        %353 = sbr.rel (%p351) target = $region56
      $region55: #{rgat_layer.1} parent=43 // pred_region
        %s354 = smul.u32 8, %s17
        %p355 = scmp.lt.s32.totalorder %s354, 15
        %s356 = scalar_select %p355, %s354, 15
        %s357 = smul.addr %s356, 4
        %s358 = scalar_lea.vmem %s2, %s357
        %s359 = smul.u32 8, %s17
      $region56: #{rgat_layer.1} parent=43 // pred_fallthru
        _
      // Predicated region
      $region57: #{rgat_layer.1} parent=43 // pred_check
        %p360 = pneg %p115
      $region58: #{rgat_layer.1} parent=43 // pred_check_branch
        %362 = sbr.rel (%p360) target = $region60
      $region59: #{rgat_layer.1} parent=43 // pred_region
        %s363 = smul.u32 8, %s17
        %p364 = scmp.lt.s32.totalorder %s363, 15
        %s365 = scalar_select %p364, %s363, 15
        %s366 = smul.addr %s365, 4
        %s367 = smul.addr %s366, 4
        %s368 = scalar_lea.vmem %s3, %s367
        %s369 = smul.u32 8, %s17
      $region60: #{rgat_layer.1} parent=43 // pred_fallthru
        _
    $region44: #{rgat_layer.1} parent=5 // pred_fallthru
      _
    %p370 = scmp.le.s32.totalorder 1, %s17
    %p371 = scmp.lt.s32.totalorder %s17, 3
    %p372 = pnand %p370, %p371
    %p373 = pneg %p372
    // Predicated region
    $region61: #{rgat_layer.1} parent=5 // pred_check
      _
    $region62: #{rgat_layer.1} parent=5 // pred_check_branch
      %375 = sbr.rel (%p372) target = $region64
    $region63: #{rgat_layer.1} parent=5 // pred_region
      %s376 = ssub.s32 %s17, 1
      %s377 = smul.u32 8, %s22
      %p378 = scmp.lt.s32.totalorder %s377, 15
      %s379 = scalar_select %p378, %s377, 15
      %s380 = smul.addr %s379, 8
      %s381 = scalar_lea.vmem %s0, %s380
      %p382 = pneg %p43
      %p383 = pneg %p40
      %p384 = scmp.lt.s32.totalorder %s22, 1
      %s385 = scalar_select %p384, %s22, 1
      %s386 = smul.addr %s385, 8
      %s387 = smul.addr %s386, 8
      %s388 = scalar_lea.vmem %s1, %s387
      %p389 = pneg %p69
      %p390 = pneg %p66
      %s391 = smul.u32 8, %s22
      %p392 = scmp.lt.s32.totalorder %s391, 15
      %s393 = scalar_select %p392, %s391, 15
      %s394 = smul.addr %s393, 4
      %s395 = scalar_lea.vmem %s2, %s394
      %p396 = pneg %p95
      %p397 = pneg %p92
      %s398 = smul.u32 8, %s22
      %p399 = scmp.lt.s32.totalorder %s398, 15
      %s400 = scalar_select %p399, %s398, 15
      %s401 = smul.addr %s400, 4
      %s402 = smul.addr %s401, 4
      %s403 = scalar_lea.vmem %s3, %s402
      %p404 = pneg %p121
      %p405 = pneg %p118
      %p406 = pneg %p142
      %p407 = pneg %p139
      %p408 = pneg %p163
      %p409 = pneg %p160
      %p410 = pneg %p184
      %p411 = pneg %p181
      %p412 = pneg %p205
      %p413 = pneg %p202
      %p414 = pneg %p226
      %p415 = pneg %p223
      %p416 = pneg %p247
      %p417 = pneg %p244
      %p418 = pneg %p268
      %p419 = pneg %p265
      %p420 = pneg %p294
      %p421 = pneg %p291
      %s422 = smul.u32 2, %s22
      %p423 = scmp.lt.s32.totalorder %s422, 3
      %s424 = scalar_select %p423, %s422, 3
      %s425 = smul.addr %s424, 8
      %s426 = scalar_lea.vmem %s11, %s425
      %s427 = smul.u32 8, %s22
      %p428 = scmp.lt.s32.totalorder %s427, 15
      %s429 = scalar_select %p428, %s427, 15
      %s430 = smul.addr %s429, 8
      %s431 = scalar_lea.vmem %s0, %s430
      %s432 = smul.u32 8, %s22
      %p433 = scmp.lt.s32.totalorder %s22, 1
      %s434 = scalar_select %p433, %s22, 1
      %s435 = smul.addr %s434, 8
      %s436 = smul.addr %s435, 8
      %s437 = scalar_lea.vmem %s1, %s436
      %s438 = smul.u32 8, %s22
      %p439 = scmp.lt.s32.totalorder %s438, 15
      %s440 = scalar_select %p439, %s438, 15
      %s441 = smul.addr %s440, 4
      %s442 = scalar_lea.vmem %s2, %s441
      %s443 = smul.u32 8, %s22
      %s444 = smul.u32 8, %s22
      %p445 = scmp.lt.s32.totalorder %s444, 15
      %s446 = scalar_select %p445, %s444, 15
      %s447 = smul.addr %s446, 4
      %s448 = smul.addr %s447, 4
      %s449 = scalar_lea.vmem %s3, %s448
      %s450 = smul.u32 8, %s22
      %s451 = smul.u32 2, %s22
      %p452 = scmp.lt.s32.totalorder %s451, 3
      %s453 = scalar_select %p452, %s451, 3
      %s454 = smul.addr %s453, 8
      %s455 = scalar_lea.vmem %s11, %s454
      %s456 = smul.u32 2, %s22
      %v458 = vld [vmem:[%s431] sm:$0xff]
      %v459 = vld [vmem:[%s431 + $0x8] sm:$0xff]
      %v460 = vld [vmem:[%s431 + $0x10] sm:$0xff]
      %v461 = vld [vmem:[%s431 + $0x18] sm:$0xff]
      %v462 = vld [vmem:[%s431 + $0x20] sm:$0xff]
      %v463 = vld [vmem:[%s431 + $0x28] sm:$0xff]
      %v464 = vld [vmem:[%s431 + $0x30] sm:$0xff]
      %v465 = vld [vmem:[%s431 + $0x38] sm:$0xff]
      %v466 = vld [vmem:[%s7] sm:$0xff]
      %v467 = vld [vmem:[%s7 + $0x8] sm:$0xff]
      %v468 = vld [vmem:[%s7 + $0x10] sm:$0xff]
      %v469 = vld [vmem:[%s7 + $0x18] sm:$0xff]
      %v470 = vld [vmem:[%s7 + $0x20] sm:$0xff]
      %v471 = vld [vmem:[%s7 + $0x28] sm:$0xff]
      %v472 = vld [vmem:[%s7 + $0x30] sm:$0xff]
      %v473 = vld [vmem:[%s7 + $0x38] sm:$0xff]
      %v474 = vld [vmem:[%s437] sm:$0xff]
      %v475 = vld [vmem:[%s437 + $0x8] sm:$0xff]
      %v476 = vld [vmem:[%s437 + $0x10] sm:$0xff]
      %v477 = vld [vmem:[%s437 + $0x18] sm:$0xff]
      %v478 = vld [vmem:[%s437 + $0x20] sm:$0xff]
      %v479 = vld [vmem:[%s437 + $0x28] sm:$0xff]
      %v480 = vld [vmem:[%s437 + $0x30] sm:$0xff]
      %v481 = vld [vmem:[%s437 + $0x38] sm:$0xff]
      %v482 = vld [vmem:[%s4] sm:$0xff]
      %v483 = vld [vmem:[%s4 + $0x8] sm:$0xff]
      %v484 = vld [vmem:[%s4 + $0x10] sm:$0xff]
      %v485 = vld [vmem:[%s4 + $0x18] sm:$0xff]
      %v486 = vld [vmem:[%s4 + $0x30] sm:$0xff]
      %v487 = vld [vmem:[%s4 + $0x38] sm:$0xff]
      %v488 = vld [vmem:[%s4 + $0x40] sm:$0xff]
      %v489 = vld [vmem:[%s4 + $0x48] sm:$0xff]
      %v490 = vld [vmem:[%s4 + $0x60] sm:$0xff]
      %v491 = vld [vmem:[%s4 + $0x68] sm:$0xff]
      %v492 = vld [vmem:[%s4 + $0x70] sm:$0xff]
      %v493 = vld [vmem:[%s4 + $0x78] sm:$0xff]
      %v494 = vld [vmem:[%s4 + $0x90] sm:$0xff]
      %v495 = vld [vmem:[%s4 + $0x98] sm:$0xff]
      %v496 = vld [vmem:[%s4 + $0xa0] sm:$0xff]
      %v497 = vld [vmem:[%s4 + $0xa8] sm:$0xff]
      %v498 = vld [vmem:[%s6] ss:$8 sm:$0xf]
      %v500 = vlaneseq
      %v501 = vshrl.u32 %v500, 7
      %v502 = vsub.s32 0, %v501
      %v503 = vrot.slane %v498, %v502
      %v504 = vlaneseq
      %v505 = vshrl.u32 %v504, 7
      %v506 = vsub.s32 1, %v505
      %v507 = vrot.slane %v498, %v506
      %v508 = vlaneseq
      %v509 = vshrl.u32 %v508, 7
      %v510 = vsub.s32 2, %v509
      %v511 = vrot.slane %v498, %v510
      %v512 = vlaneseq
      %v513 = vshrl.u32 %v512, 7
      %v514 = vsub.s32 3, %v513
      %v515 = vrot.slane %v498, %v514
      %vm520 = vcmask 261120
      %v522 = vsel %vm520, %v458, 0
      %v525 = vsel %vm520, %v459, 0
      %v528 = vsel %vm520, %v460, 0
      %v531 = vsel %vm520, %v461, 0
      %v534 = vsel %vm520, %v462, 0
      %v537 = vsel %vm520, %v463, 0
      %v540 = vsel %vm520, %v464, 0
      %v543 = vsel %vm520, %v465, 0
      %545 = vmatprep.subr.mxu0 0.0
      %546 = vmatpush1.msra.mxu0 0.0
      %547 = vmatprep.subr.mxu0 0.0
      %548 = vmatpush1.msra.mxu0 0.0
      %549 = vmatprep.subr.mxu0 0.0
      %550 = vmatpush1.msra.mxu0 0.0
      %551 = vmatprep.subr.mxu0 0.0
      %552 = vmatpush1.msra.mxu0 0.0
      %553 = vmatprep.subr.mxu0 0.0
      %554 = vmatpush1.msra.mxu0 0.0
      %555 = vmatprep.subr.mxu0 0.0
      %556 = vmatpush1.msra.mxu0 0.0
      %557 = vmatprep.subr.mxu0 0.0
      %558 = vmatpush1.msra.mxu0 0.0
      %559 = vmatprep.subr.mxu0 0.0
      %560 = vmatpush1.msra.mxu0 0.0
      %561 = vmatprep.subr.mxu0 0.0
      %562 = vmatpush1.msra.mxu0 0.0
      %563 = vmatprep.subr.mxu0 0.0
      %564 = vmatpush1.msra.mxu0 0.0
      %565 = vmatprep.subr.mxu0 0.0
      %566 = vmatpush1.msra.mxu0 0.0
      %567 = vmatprep.subr.mxu0 0.0
      %568 = vmatpush1.msra.mxu0 0.0
      %569 = vmatprep.subr.mxu0 %v495
      %570 = vmatpush1.msra.mxu0 %v494
      %571 = vmatprep.subr.mxu0 %v491
      %572 = vmatpush1.msra.mxu0 %v490
      %573 = vmatprep.subr.mxu0 %v487
      %574 = vmatpush1.msra.mxu0 %v486
      %575 = vmatprep.subr.mxu0 %v483
      %576 = vmatpush1.msra.mxu0 %v482
      %577 = vmatprep.subr.mxu0 0.0
      %578 = vmatpush2.msra.mxu0 0.0
      %579 = vmatprep.subr.mxu0 0.0
      %580 = vmatpush2.msra.mxu0 0.0
      %581 = vmatprep.subr.mxu0 0.0
      %582 = vmatpush2.msra.mxu0 0.0
      %583 = vmatprep.subr.mxu0 0.0
      %584 = vmatpush2.msra.mxu0 0.0
      %585 = vmatprep.subr.mxu0 0.0
      %586 = vmatpush2.msra.mxu0 0.0
      %587 = vmatprep.subr.mxu0 0.0
      %588 = vmatpush2.msra.mxu0 0.0
      %589 = vmatprep.subr.mxu0 0.0
      %590 = vmatpush2.msra.mxu0 0.0
      %591 = vmatprep.subr.mxu0 0.0
      %592 = vmatpush2.msra.mxu0 0.0
      %593 = vmatprep.subr.mxu0 0.0
      %594 = vmatpush2.msra.mxu0 0.0
      %595 = vmatprep.subr.mxu0 0.0
      %596 = vmatpush2.msra.mxu0 0.0
      %597 = vmatprep.subr.mxu0 0.0
      %598 = vmatpush2.msra.mxu0 0.0
      %599 = vmatprep.subr.mxu0 0.0
      %600 = vmatpush2.msra.mxu0 0.0
      %601 = vmatprep.subr.mxu0 0.0
      %602 = vmatpush2.msra.mxu0 0.0
      %603 = vmatprep.subr.mxu0 0.0
      %604 = vmatpush2.msra.mxu0 0.0
      %605 = vmatprep.subr.mxu0 0.0
      %606 = vmatpush2.msra.mxu0 0.0
      %607 = vmatprep.subr.mxu0 0.0
      %608 = vmatpush2.msra.mxu0 0.0
      %609 = vmatprep.mubr.f32.mxu0 0.0
      %610 = vmatmul.mubr.f32.gmra.mxu0 %v522
      %v611 = vpop.f32.mrf.mxu0
      %v612 = vadd.f32 %v503, %v611
      %v613 = vpop.f32.mrf.mxu0
      %v614 = vadd.f32 %v507, %v613
      %615 = vmatprep.mubr.f32.mxu0 0.0
      %616 = vmatmul.mubr.f32.gmra.mxu0 %v525
      %v617 = vpop.f32.mrf.mxu0
      %v618 = vadd.f32 %v503, %v617
      %v619 = vpop.f32.mrf.mxu0
      %v620 = vadd.f32 %v507, %v619
      %621 = vmatprep.mubr.f32.mxu0 0.0
      %622 = vmatmul.mubr.f32.gmra.mxu0 %v528
      %v623 = vpop.f32.mrf.mxu0
      %v624 = vadd.f32 %v503, %v623
      %v625 = vpop.f32.mrf.mxu0
      %v626 = vadd.f32 %v507, %v625
      %627 = vmatprep.mubr.f32.mxu0 0.0
      %628 = vmatmul.mubr.f32.gmra.mxu0 %v531
      %v629 = vpop.f32.mrf.mxu0
      %v630 = vadd.f32 %v503, %v629
      %v631 = vpop.f32.mrf.mxu0
      %v632 = vadd.f32 %v507, %v631
      %633 = vmatprep.mubr.f32.mxu0 0.0
      %634 = vmatmul.mubr.f32.gmra.mxu0 %v534
      %v635 = vpop.f32.mrf.mxu0
      %v636 = vadd.f32 %v503, %v635
      %v637 = vpop.f32.mrf.mxu0
      %v638 = vadd.f32 %v507, %v637
      %639 = vmatprep.mubr.f32.mxu0 0.0
      %640 = vmatmul.mubr.f32.gmra.mxu0 %v537
      %v641 = vpop.f32.mrf.mxu0
      %v642 = vadd.f32 %v503, %v641
      %v643 = vpop.f32.mrf.mxu0
      %v644 = vadd.f32 %v507, %v643
      %645 = vmatprep.mubr.f32.mxu0 0.0
      %646 = vmatmul.mubr.f32.gmra.mxu0 %v540
      %v647 = vpop.f32.mrf.mxu0
      %v648 = vadd.f32 %v503, %v647
      %v649 = vpop.f32.mrf.mxu0
      %v650 = vadd.f32 %v507, %v649
      %651 = vmatprep.mubr.f32.mxu0 0.0
      %652 = vmatmul.mubr.f32.gmra.mxu0 %v543
      %v653 = vpop.f32.mrf.mxu0
      %v654 = vadd.f32 %v503, %v653
      %v655 = vpop.f32.mrf.mxu0
      %v656 = vadd.f32 %v507, %v655
      %657 = vdwg.mxu0
      %658 = vmatprep.subr.mxu0 0.0
      %659 = vmatpush1.msra.mxu0 0.0
      %660 = vmatprep.subr.mxu0 0.0
      %661 = vmatpush1.msra.mxu0 0.0
      %662 = vmatprep.subr.mxu0 0.0
      %663 = vmatpush1.msra.mxu0 0.0
      %664 = vmatprep.subr.mxu0 0.0
      %665 = vmatpush1.msra.mxu0 0.0
      %666 = vmatprep.subr.mxu0 0.0
      %667 = vmatpush1.msra.mxu0 0.0
      %668 = vmatprep.subr.mxu0 0.0
      %669 = vmatpush1.msra.mxu0 0.0
      %670 = vmatprep.subr.mxu0 0.0
      %671 = vmatpush1.msra.mxu0 0.0
      %672 = vmatprep.subr.mxu0 0.0
      %673 = vmatpush1.msra.mxu0 0.0
      %674 = vmatprep.subr.mxu0 0.0
      %675 = vmatpush1.msra.mxu0 0.0
      %676 = vmatprep.subr.mxu0 0.0
      %677 = vmatpush1.msra.mxu0 0.0
      %678 = vmatprep.subr.mxu0 0.0
      %679 = vmatpush1.msra.mxu0 0.0
      %680 = vmatprep.subr.mxu0 0.0
      %681 = vmatpush1.msra.mxu0 0.0
      %682 = vmatprep.subr.mxu0 %v497
      %683 = vmatpush1.msra.mxu0 %v496
      %684 = vmatprep.subr.mxu0 %v493
      %685 = vmatpush1.msra.mxu0 %v492
      %686 = vmatprep.subr.mxu0 %v489
      %687 = vmatpush1.msra.mxu0 %v488
      %688 = vmatprep.subr.mxu0 %v485
      %689 = vmatpush1.msra.mxu0 %v484
      %690 = vmatprep.subr.mxu0 0.0
      %691 = vmatpush2.msra.mxu0 0.0
      %692 = vmatprep.subr.mxu0 0.0
      %693 = vmatpush2.msra.mxu0 0.0
      %694 = vmatprep.subr.mxu0 0.0
      %695 = vmatpush2.msra.mxu0 0.0
      %696 = vmatprep.subr.mxu0 0.0
      %697 = vmatpush2.msra.mxu0 0.0
      %698 = vmatprep.subr.mxu0 0.0
      %699 = vmatpush2.msra.mxu0 0.0
      %700 = vmatprep.subr.mxu0 0.0
      %701 = vmatpush2.msra.mxu0 0.0
      %702 = vmatprep.subr.mxu0 0.0
      %703 = vmatpush2.msra.mxu0 0.0
      %704 = vmatprep.subr.mxu0 0.0
      %705 = vmatpush2.msra.mxu0 0.0
      %706 = vmatprep.subr.mxu0 0.0
      %707 = vmatpush2.msra.mxu0 0.0
      %708 = vmatprep.subr.mxu0 0.0
      %709 = vmatpush2.msra.mxu0 0.0
      %710 = vmatprep.subr.mxu0 0.0
      %711 = vmatpush2.msra.mxu0 0.0
      %712 = vmatprep.subr.mxu0 0.0
      %713 = vmatpush2.msra.mxu0 0.0
      %714 = vmatprep.subr.mxu0 0.0
      %715 = vmatpush2.msra.mxu0 0.0
      %716 = vmatprep.subr.mxu0 0.0
      %717 = vmatpush2.msra.mxu0 0.0
      %718 = vmatprep.subr.mxu0 0.0
      %719 = vmatpush2.msra.mxu0 0.0
      %720 = vmatprep.subr.mxu0 0.0
      %721 = vmatpush2.msra.mxu0 0.0
      %722 = vmatprep.mubr.f32.mxu0 0.0
      %723 = vmatmul.mubr.f32.gmra.mxu0 %v522
      %v724 = vpop.f32.mrf.mxu0
      %v725 = vadd.f32 %v511, %v724
      %v726 = vpop.f32.mrf.mxu0
      %v727 = vadd.f32 %v515, %v726
      %728 = vmatprep.mubr.f32.mxu0 0.0
      %729 = vmatmul.mubr.f32.gmra.mxu0 %v525
      %v730 = vpop.f32.mrf.mxu0
      %v731 = vadd.f32 %v511, %v730
      %v732 = vpop.f32.mrf.mxu0
      %v733 = vadd.f32 %v515, %v732
      %734 = vmatprep.mubr.f32.mxu0 0.0
      %735 = vmatmul.mubr.f32.gmra.mxu0 %v528
      %v736 = vpop.f32.mrf.mxu0
      %v737 = vadd.f32 %v511, %v736
      %v738 = vpop.f32.mrf.mxu0
      %v739 = vadd.f32 %v515, %v738
      %740 = vmatprep.mubr.f32.mxu0 0.0
      %741 = vmatmul.mubr.f32.gmra.mxu0 %v531
      %v742 = vpop.f32.mrf.mxu0
      %v743 = vadd.f32 %v511, %v742
      %v744 = vpop.f32.mrf.mxu0
      %v745 = vadd.f32 %v515, %v744
      %746 = vmatprep.mubr.f32.mxu0 0.0
      %747 = vmatmul.mubr.f32.gmra.mxu0 %v534
      %v748 = vpop.f32.mrf.mxu0
      %v749 = vadd.f32 %v511, %v748
      %v750 = vpop.f32.mrf.mxu0
      %v751 = vadd.f32 %v515, %v750
      %752 = vmatprep.mubr.f32.mxu0 0.0
      %753 = vmatmul.mubr.f32.gmra.mxu0 %v537
      %v754 = vpop.f32.mrf.mxu0
      %v755 = vadd.f32 %v511, %v754
      %v756 = vpop.f32.mrf.mxu0
      %v757 = vadd.f32 %v515, %v756
      %758 = vmatprep.mubr.f32.mxu0 0.0
      %759 = vmatmul.mubr.f32.gmra.mxu0 %v540
      %v760 = vpop.f32.mrf.mxu0
      %v761 = vadd.f32 %v511, %v760
      %v762 = vpop.f32.mrf.mxu0
      %v763 = vadd.f32 %v515, %v762
      %764 = vmatprep.mubr.f32.mxu0 0.0
      %765 = vmatmul.mubr.f32.gmra.mxu0 %v543
      %v766 = vpop.f32.mrf.mxu0
      %v767 = vadd.f32 %v511, %v766
      %v768 = vpop.f32.mrf.mxu0
      %v769 = vadd.f32 %v515, %v768
      %770 = vdwg.mxu0
      %v771 = vld [vmem:[%s449] sm:$0xff]
      %v772 = vld [vmem:[%s449 + $0x8] sm:$0xff]
      %v773 = vld [vmem:[%s449 + $0x10] sm:$0xff]
      %v774 = vld [vmem:[%s449 + $0x18] sm:$0xff]
      %v775 = vld [vmem:[%s449 + $0x20] sm:$0xff]
      %v776 = vld [vmem:[%s449 + $0x28] sm:$0xff]
      %v777 = vld [vmem:[%s449 + $0x30] sm:$0xff]
      %v778 = vld [vmem:[%s449 + $0x38] sm:$0xff]
      %v779 = vld [vmem:[%s449 + $0x40] sm:$0xff]
      %v780 = vld [vmem:[%s449 + $0x48] sm:$0xff]
      %v781 = vld [vmem:[%s449 + $0x50] sm:$0xff]
      %v782 = vld [vmem:[%s449 + $0x58] sm:$0xff]
      %v783 = vld [vmem:[%s449 + $0x60] sm:$0xff]
      %v784 = vld [vmem:[%s449 + $0x68] sm:$0xff]
      %v785 = vld [vmem:[%s449 + $0x70] sm:$0xff]
      %v786 = vld [vmem:[%s449 + $0x78] sm:$0xff]
      %v787 = vunpack.c.l.bf16 %v771
      %v788 = vunpack.c.h.bf16 %v771
      %v789 = vunpack.c.l.bf16 %v772
      %v790 = vunpack.c.h.bf16 %v772
      %v791 = vunpack.c.l.bf16 %v773
      %v792 = vunpack.c.h.bf16 %v773
      %v793 = vunpack.c.l.bf16 %v774
      %v794 = vunpack.c.h.bf16 %v774
      %v795 = vunpack.c.l.bf16 %v775
      %v796 = vunpack.c.h.bf16 %v775
      %v797 = vunpack.c.l.bf16 %v776
      %v798 = vunpack.c.h.bf16 %v776
      %v799 = vunpack.c.l.bf16 %v777
      %v800 = vunpack.c.h.bf16 %v777
      %v801 = vunpack.c.l.bf16 %v778
      %v802 = vunpack.c.h.bf16 %v778
      %v803 = vunpack.c.l.bf16 %v779
      %v804 = vunpack.c.h.bf16 %v779
      %v805 = vunpack.c.l.bf16 %v780
      %v806 = vunpack.c.h.bf16 %v780
      %v807 = vunpack.c.l.bf16 %v781
      %v808 = vunpack.c.h.bf16 %v781
      %v809 = vunpack.c.l.bf16 %v782
      %v810 = vunpack.c.h.bf16 %v782
      %v811 = vunpack.c.l.bf16 %v783
      %v812 = vunpack.c.h.bf16 %v783
      %v813 = vunpack.c.l.bf16 %v784
      %v814 = vunpack.c.h.bf16 %v784
      %v815 = vunpack.c.l.bf16 %v785
      %v816 = vunpack.c.h.bf16 %v785
      %v817 = vunpack.c.l.bf16 %v786
      %v818 = vunpack.c.h.bf16 %v786
      %vm819 = vcmask 64512
      %v821 = vsel %vm819, %v466, 0
      %v824 = vsel %vm819, %v467, 0
      %v827 = vsel %vm819, %v468, 0
      %v830 = vsel %vm819, %v469, 0
      %v833 = vsel %vm819, %v470, 0
      %v836 = vsel %vm819, %v471, 0
      %v839 = vsel %vm819, %v472, 0
      %v842 = vsel %vm819, %v473, 0
      %844 = vmatprep.subr.mxu0 0.0
      %845 = vmatpush1.msra.mxu0 0.0
      %846 = vmatprep.subr.mxu0 0.0
      %847 = vmatpush1.msra.mxu0 0.0
      %848 = vmatprep.subr.mxu0 0.0
      %849 = vmatpush1.msra.mxu0 0.0
      %850 = vmatprep.subr.mxu0 0.0
      %851 = vmatpush1.msra.mxu0 0.0
      %852 = vmatprep.subr.mxu0 0.0
      %853 = vmatpush1.msra.mxu0 0.0
      %854 = vmatprep.subr.mxu0 0.0
      %855 = vmatpush1.msra.mxu0 0.0
      %856 = vmatprep.subr.mxu0 0.0
      %857 = vmatpush1.msra.mxu0 0.0
      %858 = vmatprep.subr.mxu0 0.0
      %859 = vmatpush1.msra.mxu0 0.0
      %860 = vmatprep.subr.mxu0 0.0
      %861 = vmatpush1.msra.mxu0 0.0
      %862 = vmatprep.subr.mxu0 0.0
      %863 = vmatpush1.msra.mxu0 0.0
      %864 = vmatprep.subr.mxu0 0.0
      %865 = vmatpush1.msra.mxu0 0.0
      %866 = vmatprep.subr.mxu0 0.0
      %867 = vmatpush1.msra.mxu0 0.0
      %868 = vmatprep.subr.mxu0 0.0
      %869 = vmatpush1.msra.mxu0 0.0
      %870 = vmatprep.subr.mxu0 0.0
      %871 = vmatpush1.msra.mxu0 0.0
      %872 = vmatprep.subr.mxu0 0.0
      %873 = vmatpush1.msra.mxu0 0.0
      %874 = vmatprep.subr.mxu0 %v475
      %875 = vmatpush1.msra.mxu0 %v474
      %876 = vmatprep.subr.mxu0 0.0
      %877 = vmatpush2.msra.mxu0 0.0
      %878 = vmatprep.subr.mxu0 0.0
      %879 = vmatpush2.msra.mxu0 0.0
      %880 = vmatprep.subr.mxu0 0.0
      %881 = vmatpush2.msra.mxu0 0.0
      %882 = vmatprep.subr.mxu0 0.0
      %883 = vmatpush2.msra.mxu0 0.0
      %884 = vmatprep.subr.mxu0 0.0
      %885 = vmatpush2.msra.mxu0 0.0
      %886 = vmatprep.subr.mxu0 0.0
      %887 = vmatpush2.msra.mxu0 0.0
      %888 = vmatprep.subr.mxu0 0.0
      %889 = vmatpush2.msra.mxu0 0.0
      %890 = vmatprep.subr.mxu0 0.0
      %891 = vmatpush2.msra.mxu0 0.0
      %892 = vmatprep.subr.mxu0 0.0
      %893 = vmatpush2.msra.mxu0 0.0
      %894 = vmatprep.subr.mxu0 0.0
      %895 = vmatpush2.msra.mxu0 0.0
      %896 = vmatprep.subr.mxu0 0.0
      %897 = vmatpush2.msra.mxu0 0.0
      %898 = vmatprep.subr.mxu0 0.0
      %899 = vmatpush2.msra.mxu0 0.0
      %900 = vmatprep.subr.mxu0 0.0
      %901 = vmatpush2.msra.mxu0 0.0
      %902 = vmatprep.subr.mxu0 0.0
      %903 = vmatpush2.msra.mxu0 0.0
      %904 = vmatprep.subr.mxu0 0.0
      %905 = vmatpush2.msra.mxu0 0.0
      %906 = vmatprep.subr.mxu0 0.0
      %907 = vmatpush2.msra.mxu0 0.0
      %908 = vmatprep.mubr.f32.mxu0 0.0
      %909 = vmatmul.mubr.f32.gmra.mxu0 %v821
      %v910 = vpop.f32.mrf.mxu0
      %v911 = vadd.f32 %v787, %v910
      %v912 = vpop.f32.mrf.mxu0
      %v913 = vadd.f32 %v788, %v912
      %914 = vmatprep.mubr.f32.mxu0 0.0
      %915 = vmatmul.mubr.f32.gmra.mxu0 %v824
      %v916 = vpop.f32.mrf.mxu0
      %v917 = vadd.f32 %v791, %v916
      %v918 = vpop.f32.mrf.mxu0
      %v919 = vadd.f32 %v792, %v918
      %920 = vmatprep.mubr.f32.mxu0 0.0
      %921 = vmatmul.mubr.f32.gmra.mxu0 %v827
      %v922 = vpop.f32.mrf.mxu0
      %v923 = vadd.f32 %v795, %v922
      %v924 = vpop.f32.mrf.mxu0
      %v925 = vadd.f32 %v796, %v924
      %926 = vmatprep.mubr.f32.mxu0 0.0
      %927 = vmatmul.mubr.f32.gmra.mxu0 %v830
      %v928 = vpop.f32.mrf.mxu0
      %v929 = vadd.f32 %v799, %v928
      %v930 = vpop.f32.mrf.mxu0
      %v931 = vadd.f32 %v800, %v930
      %932 = vmatprep.mubr.f32.mxu0 0.0
      %933 = vmatmul.mubr.f32.gmra.mxu0 %v833
      %v934 = vpop.f32.mrf.mxu0
      %v935 = vadd.f32 %v803, %v934
      %v936 = vpop.f32.mrf.mxu0
      %v937 = vadd.f32 %v804, %v936
      %938 = vmatprep.mubr.f32.mxu0 0.0
      %939 = vmatmul.mubr.f32.gmra.mxu0 %v836
      %v940 = vpop.f32.mrf.mxu0
      %v941 = vadd.f32 %v807, %v940
      %v942 = vpop.f32.mrf.mxu0
      %v943 = vadd.f32 %v808, %v942
      %944 = vmatprep.mubr.f32.mxu0 0.0
      %945 = vmatmul.mubr.f32.gmra.mxu0 %v839
      %v946 = vpop.f32.mrf.mxu0
      %v947 = vadd.f32 %v811, %v946
      %v948 = vpop.f32.mrf.mxu0
      %v949 = vadd.f32 %v812, %v948
      %950 = vmatprep.mubr.f32.mxu0 0.0
      %951 = vmatmul.mubr.f32.gmra.mxu0 %v842
      %v952 = vpop.f32.mrf.mxu0
      %v953 = vadd.f32 %v815, %v952
      %v954 = vpop.f32.mrf.mxu0
      %v955 = vadd.f32 %v816, %v954
      %956 = vdwg.mxu0
      %957 = vmatprep.subr.mxu0 0.0
      %958 = vmatpush1.msra.mxu0 0.0
      %959 = vmatprep.subr.mxu0 0.0
      %960 = vmatpush1.msra.mxu0 0.0
      %961 = vmatprep.subr.mxu0 0.0
      %962 = vmatpush1.msra.mxu0 0.0
      %963 = vmatprep.subr.mxu0 0.0
      %964 = vmatpush1.msra.mxu0 0.0
      %965 = vmatprep.subr.mxu0 0.0
      %966 = vmatpush1.msra.mxu0 0.0
      %967 = vmatprep.subr.mxu0 0.0
      %968 = vmatpush1.msra.mxu0 0.0
      %969 = vmatprep.subr.mxu0 0.0
      %970 = vmatpush1.msra.mxu0 0.0
      %971 = vmatprep.subr.mxu0 0.0
      %972 = vmatpush1.msra.mxu0 0.0
      %973 = vmatprep.subr.mxu0 0.0
      %974 = vmatpush1.msra.mxu0 0.0
      %975 = vmatprep.subr.mxu0 0.0
      %976 = vmatpush1.msra.mxu0 0.0
      %977 = vmatprep.subr.mxu0 0.0
      %978 = vmatpush1.msra.mxu0 0.0
      %979 = vmatprep.subr.mxu0 0.0
      %980 = vmatpush1.msra.mxu0 0.0
      %981 = vmatprep.subr.mxu0 0.0
      %982 = vmatpush1.msra.mxu0 0.0
      %983 = vmatprep.subr.mxu0 0.0
      %984 = vmatpush1.msra.mxu0 0.0
      %985 = vmatprep.subr.mxu0 0.0
      %986 = vmatpush1.msra.mxu0 0.0
      %987 = vmatprep.subr.mxu0 %v477
      %988 = vmatpush1.msra.mxu0 %v476
      %989 = vmatprep.subr.mxu0 0.0
      %990 = vmatpush2.msra.mxu0 0.0
      %991 = vmatprep.subr.mxu0 0.0
      %992 = vmatpush2.msra.mxu0 0.0
      %993 = vmatprep.subr.mxu0 0.0
      %994 = vmatpush2.msra.mxu0 0.0
      %995 = vmatprep.subr.mxu0 0.0
      %996 = vmatpush2.msra.mxu0 0.0
      %997 = vmatprep.subr.mxu0 0.0
      %998 = vmatpush2.msra.mxu0 0.0
      %999 = vmatprep.subr.mxu0 0.0
      %1000 = vmatpush2.msra.mxu0 0.0
      %1001 = vmatprep.subr.mxu0 0.0
      %1002 = vmatpush2.msra.mxu0 0.0
      %1003 = vmatprep.subr.mxu0 0.0
      %1004 = vmatpush2.msra.mxu0 0.0
      %1005 = vmatprep.subr.mxu0 0.0
      %1006 = vmatpush2.msra.mxu0 0.0
      %1007 = vmatprep.subr.mxu0 0.0
      %1008 = vmatpush2.msra.mxu0 0.0
      %1009 = vmatprep.subr.mxu0 0.0
      %1010 = vmatpush2.msra.mxu0 0.0
      %1011 = vmatprep.subr.mxu0 0.0
      %1012 = vmatpush2.msra.mxu0 0.0
      %1013 = vmatprep.subr.mxu0 0.0
      %1014 = vmatpush2.msra.mxu0 0.0
      %1015 = vmatprep.subr.mxu0 0.0
      %1016 = vmatpush2.msra.mxu0 0.0
      %1017 = vmatprep.subr.mxu0 0.0
      %1018 = vmatpush2.msra.mxu0 0.0
      %1019 = vmatprep.subr.mxu0 0.0
      %1020 = vmatpush2.msra.mxu0 0.0
      %1021 = vmatprep.mubr.f32.mxu0 0.0
      %1022 = vmatmul.mubr.f32.gmra.mxu0 %v821
      %v1023 = vpop.f32.mrf.mxu0
      %v1024 = vadd.f32 %v789, %v1023
      %v1025 = vpop.f32.mrf.mxu0
      %v1026 = vadd.f32 %v790, %v1025
      %1027 = vmatprep.mubr.f32.mxu0 0.0
      %1028 = vmatmul.mubr.f32.gmra.mxu0 %v824
      %v1029 = vpop.f32.mrf.mxu0
      %v1030 = vadd.f32 %v793, %v1029
      %v1031 = vpop.f32.mrf.mxu0
      %v1032 = vadd.f32 %v794, %v1031
      %1033 = vmatprep.mubr.f32.mxu0 0.0
      %1034 = vmatmul.mubr.f32.gmra.mxu0 %v827
      %v1035 = vpop.f32.mrf.mxu0
      %v1036 = vadd.f32 %v797, %v1035
      %v1037 = vpop.f32.mrf.mxu0
      %v1038 = vadd.f32 %v798, %v1037
      %1039 = vmatprep.mubr.f32.mxu0 0.0
      %1040 = vmatmul.mubr.f32.gmra.mxu0 %v830
      %v1041 = vpop.f32.mrf.mxu0
      %v1042 = vadd.f32 %v801, %v1041
      %v1043 = vpop.f32.mrf.mxu0
      %v1044 = vadd.f32 %v802, %v1043
      %1045 = vmatprep.mubr.f32.mxu0 0.0
      %1046 = vmatmul.mubr.f32.gmra.mxu0 %v833
      %v1047 = vpop.f32.mrf.mxu0
      %v1048 = vadd.f32 %v805, %v1047
      %v1049 = vpop.f32.mrf.mxu0
      %v1050 = vadd.f32 %v806, %v1049
      %1051 = vmatprep.mubr.f32.mxu0 0.0
      %1052 = vmatmul.mubr.f32.gmra.mxu0 %v836
      %v1053 = vpop.f32.mrf.mxu0
      %v1054 = vadd.f32 %v809, %v1053
      %v1055 = vpop.f32.mrf.mxu0
      %v1056 = vadd.f32 %v810, %v1055
      %1057 = vmatprep.mubr.f32.mxu0 0.0
      %1058 = vmatmul.mubr.f32.gmra.mxu0 %v839
      %v1059 = vpop.f32.mrf.mxu0
      %v1060 = vadd.f32 %v813, %v1059
      %v1061 = vpop.f32.mrf.mxu0
      %v1062 = vadd.f32 %v814, %v1061
      %1063 = vmatprep.mubr.f32.mxu0 0.0
      %1064 = vmatmul.mubr.f32.gmra.mxu0 %v842
      %v1065 = vpop.f32.mrf.mxu0
      %v1066 = vadd.f32 %v817, %v1065
      %v1067 = vpop.f32.mrf.mxu0
      %v1068 = vadd.f32 %v818, %v1067
      %1069 = vdwg.mxu0
      %v1070 = vmul.f32 %v911, %v612
      %v1071 = vmul.f32 %v913, %v614
      %v1072 = vmul.f32 %v1024, %v725
      %v1073 = vmul.f32 %v1026, %v727
      %v1074 = vmul.f32 %v917, %v618
      %v1075 = vmul.f32 %v919, %v620
      %v1076 = vmul.f32 %v1030, %v731
      %v1077 = vmul.f32 %v1032, %v733
      %v1078 = vmul.f32 %v923, %v624
      %v1079 = vmul.f32 %v925, %v626
      %v1080 = vmul.f32 %v1036, %v737
      %v1081 = vmul.f32 %v1038, %v739
      %v1082 = vmul.f32 %v929, %v630
      %v1083 = vmul.f32 %v931, %v632
      %v1084 = vmul.f32 %v1042, %v743
      %v1085 = vmul.f32 %v1044, %v745
      %v1086 = vmul.f32 %v935, %v636
      %v1087 = vmul.f32 %v937, %v638
      %v1088 = vmul.f32 %v1048, %v749
      %v1089 = vmul.f32 %v1050, %v751
      %v1090 = vmul.f32 %v941, %v642
      %v1091 = vmul.f32 %v943, %v644
      %v1092 = vmul.f32 %v1054, %v755
      %v1093 = vmul.f32 %v1056, %v757
      %v1094 = vmul.f32 %v947, %v648
      %v1095 = vmul.f32 %v949, %v650
      %v1096 = vmul.f32 %v1060, %v761
      %v1097 = vmul.f32 %v1062, %v763
      %v1098 = vmul.f32 %v953, %v654
      %v1099 = vmul.f32 %v955, %v656
      %v1100 = vmul.f32 %v1066, %v767
      %v1101 = vmul.f32 %v1068, %v769
      %v1102 = vpack.c.bf16 %v1074, %v1070
      %v1103 = vpack.c.bf16 %v1075, %v1071
      %v1104 = vpack.c.bf16 %v1076, %v1072
      %v1105 = vpack.c.bf16 %v1077, %v1073
      %v1106 = vpack.c.bf16 %v1082, %v1078
      %v1107 = vpack.c.bf16 %v1083, %v1079
      %v1108 = vpack.c.bf16 %v1084, %v1080
      %v1109 = vpack.c.bf16 %v1085, %v1081
      %v1110 = vpack.c.bf16 %v1090, %v1086
      %v1111 = vpack.c.bf16 %v1091, %v1087
      %v1112 = vpack.c.bf16 %v1092, %v1088
      %v1113 = vpack.c.bf16 %v1093, %v1089
      %v1114 = vpack.c.bf16 %v1098, %v1094
      %v1115 = vpack.c.bf16 %v1099, %v1095
      %v1116 = vpack.c.bf16 %v1100, %v1096
      %v1117 = vpack.c.bf16 %v1101, %v1097
      %v1118 = vld [vmem:[%s9] sm:$0xf]
      %v1119 = vld [vmem:[%s9 + $0x8] sm:$0xf]
      %v1120 = vld [vmem:[%s9 + $0x10] sm:$0xf]
      %v1121 = vld [vmem:[%s9 + $0x18] sm:$0xf]
      %v1122 = vld [vmem:[%s9 + $0x20] sm:$0xf]
      %v1123 = vld [vmem:[%s9 + $0x28] sm:$0xf]
      %v1124 = vld [vmem:[%s9 + $0x30] sm:$0xf]
      %v1125 = vld [vmem:[%s9 + $0x38] sm:$0xf]
      %v1126 = vld [vmem:[%s9 + $0x40] sm:$0xf]
      %v1127 = vld [vmem:[%s9 + $0x48] sm:$0xf]
      %v1128 = vld [vmem:[%s9 + $0x50] sm:$0xf]
      %v1129 = vld [vmem:[%s9 + $0x58] sm:$0xf]
      %v1130 = vld [vmem:[%s9 + $0x60] sm:$0xf]
      %v1131 = vld [vmem:[%s9 + $0x68] sm:$0xf]
      %v1132 = vld [vmem:[%s9 + $0x70] sm:$0xf]
      %v1133 = vld [vmem:[%s9 + $0x78] sm:$0xf]
      %v1134 = vld [vmem:[%s9 + $0x80] sm:$0xf]
      %v1135 = vld [vmem:[%s9 + $0x88] sm:$0xf]
      %v1136 = vld [vmem:[%s9 + $0x90] sm:$0xf]
      %v1137 = vld [vmem:[%s9 + $0x98] sm:$0xf]
      %v1138 = vld [vmem:[%s9 + $0xa0] sm:$0xf]
      %v1139 = vld [vmem:[%s9 + $0xa8] sm:$0xf]
      %v1140 = vld [vmem:[%s9 + $0xb0] sm:$0xf]
      %v1141 = vld [vmem:[%s9 + $0xb8] sm:$0xf]
      %v1142 = vld [vmem:[%s9 + $0xc0] sm:$0xf]
      %v1143 = vld [vmem:[%s9 + $0xc8] sm:$0xf]
      %v1144 = vld [vmem:[%s9 + $0xd0] sm:$0xf]
      %v1145 = vld [vmem:[%s9 + $0xd8] sm:$0xf]
      %v1146 = vld [vmem:[%s9 + $0xe0] sm:$0xf]
      %v1147 = vld [vmem:[%s9 + $0xe8] sm:$0xf]
      %v1148 = vld [vmem:[%s9 + $0xf0] sm:$0xf]
      %v1149 = vld [vmem:[%s9 + $0xf8] sm:$0xf]
      %v1150 = vld [vmem:[%s9 + $0x100] sm:$0xf]
      %v1151 = vld [vmem:[%s9 + $0x108] sm:$0xf]
      %v1152 = vld [vmem:[%s9 + $0x110] sm:$0xf]
      %v1153 = vld [vmem:[%s9 + $0x118] sm:$0xf]
      %v1154 = vld [vmem:[%s9 + $0x120] sm:$0xf]
      %v1155 = vld [vmem:[%s9 + $0x128] sm:$0xf]
      %v1156 = vld [vmem:[%s9 + $0x130] sm:$0xf]
      %v1157 = vld [vmem:[%s9 + $0x138] sm:$0xf]
      %v1158 = vld [vmem:[%s9 + $0x140] sm:$0xf]
      %v1159 = vld [vmem:[%s9 + $0x148] sm:$0xf]
      %v1160 = vld [vmem:[%s9 + $0x150] sm:$0xf]
      %v1161 = vld [vmem:[%s9 + $0x158] sm:$0xf]
      %v1162 = vld [vmem:[%s9 + $0x160] sm:$0xf]
      %v1163 = vld [vmem:[%s9 + $0x168] sm:$0xf]
      %v1164 = vld [vmem:[%s9 + $0x170] sm:$0xf]
      %v1165 = vld [vmem:[%s9 + $0x178] sm:$0xf]
      %v1166 = vld [vmem:[%s9 + $0x180] sm:$0xf]
      %v1167 = vld [vmem:[%s9 + $0x188] sm:$0xf]
      %v1168 = vld [vmem:[%s9 + $0x190] sm:$0xf]
      %v1169 = vld [vmem:[%s9 + $0x198] sm:$0xf]
      %v1170 = vld [vmem:[%s9 + $0x1a0] sm:$0xf]
      %v1171 = vld [vmem:[%s9 + $0x1a8] sm:$0xf]
      %v1172 = vld [vmem:[%s9 + $0x1b0] sm:$0xf]
      %v1173 = vld [vmem:[%s9 + $0x1b8] sm:$0xf]
      %v1174 = vld [vmem:[%s9 + $0x1c0] sm:$0xf]
      %v1175 = vld [vmem:[%s9 + $0x1c8] sm:$0xf]
      %v1176 = vld [vmem:[%s9 + $0x1d0] sm:$0xf]
      %v1177 = vld [vmem:[%s9 + $0x1d8] sm:$0xf]
      %v1178 = vld [vmem:[%s9 + $0x1e0] sm:$0xf]
      %v1179 = vld [vmem:[%s9 + $0x1e8] sm:$0xf]
      %v1180 = vld [vmem:[%s9 + $0x1f0] sm:$0xf]
      %v1181 = vld [vmem:[%s9 + $0x1f8] sm:$0xf]
      %v1246 = vunpack.c.l.b16 %v1118
      %v1247 = vunpack.c.l.b16 %v1119
      %v1248 = vunpack.c.l.b16 %v1120
      %v1249 = vunpack.c.l.b16 %v1121
      %v1250 = vunpack.c.l.b16 %v1122
      %v1251 = vunpack.c.l.b16 %v1123
      %v1252 = vunpack.c.l.b16 %v1124
      %v1253 = vunpack.c.l.b16 %v1125
      %v1254 = vunpack.c.l.b16 %v1126
      %v1255 = vunpack.c.l.b16 %v1127
      %v1256 = vunpack.c.l.b16 %v1128
      %v1257 = vunpack.c.l.b16 %v1129
      %v1258 = vunpack.c.l.b16 %v1130
      %v1259 = vunpack.c.l.b16 %v1131
      %v1260 = vunpack.c.l.b16 %v1132
      %v1261 = vunpack.c.l.b16 %v1133
      %v1262 = vunpack.c.l.b16 %v1134
      %v1263 = vunpack.c.l.b16 %v1135
      %v1264 = vunpack.c.l.b16 %v1136
      %v1265 = vunpack.c.l.b16 %v1137
      %v1266 = vunpack.c.l.b16 %v1138
      %v1267 = vunpack.c.l.b16 %v1139
      %v1268 = vunpack.c.l.b16 %v1140
      %v1269 = vunpack.c.l.b16 %v1141
      %v1270 = vunpack.c.l.b16 %v1142
      %v1271 = vunpack.c.l.b16 %v1143
      %v1272 = vunpack.c.l.b16 %v1144
      %v1273 = vunpack.c.l.b16 %v1145
      %v1274 = vunpack.c.l.b16 %v1146
      %v1275 = vunpack.c.l.b16 %v1147
      %v1276 = vunpack.c.l.b16 %v1148
      %v1277 = vunpack.c.l.b16 %v1149
      %v1278 = vunpack.c.l.b16 %v1150
      %v1279 = vunpack.c.l.b16 %v1151
      %v1280 = vunpack.c.l.b16 %v1152
      %v1281 = vunpack.c.l.b16 %v1153
      %v1282 = vunpack.c.l.b16 %v1154
      %v1283 = vunpack.c.l.b16 %v1155
      %v1284 = vunpack.c.l.b16 %v1156
      %v1285 = vunpack.c.l.b16 %v1157
      %v1286 = vunpack.c.l.b16 %v1158
      %v1287 = vunpack.c.l.b16 %v1159
      %v1288 = vunpack.c.l.b16 %v1160
      %v1289 = vunpack.c.l.b16 %v1161
      %v1290 = vunpack.c.l.b16 %v1162
      %v1291 = vunpack.c.l.b16 %v1163
      %v1292 = vunpack.c.l.b16 %v1164
      %v1293 = vunpack.c.l.b16 %v1165
      %v1294 = vunpack.c.l.b16 %v1166
      %v1295 = vunpack.c.l.b16 %v1167
      %v1296 = vunpack.c.l.b16 %v1168
      %v1297 = vunpack.c.l.b16 %v1169
      %v1298 = vunpack.c.l.b16 %v1170
      %v1299 = vunpack.c.l.b16 %v1171
      %v1300 = vunpack.c.l.b16 %v1172
      %v1301 = vunpack.c.l.b16 %v1173
      %v1302 = vunpack.c.l.b16 %v1174
      %v1303 = vunpack.c.l.b16 %v1175
      %v1304 = vunpack.c.l.b16 %v1176
      %v1305 = vunpack.c.l.b16 %v1177
      %v1306 = vunpack.c.l.b16 %v1178
      %v1307 = vunpack.c.l.b16 %v1179
      %v1308 = vunpack.c.l.b16 %v1180
      %v1309 = vunpack.c.l.b16 %v1181
      %v1310 = vpack.c.b16 %v1247, %v1246
      %v1311 = vpack.c.b16 %v1249, %v1248
      %v1312 = vpack.c.b16 %v1251, %v1250
      %v1313 = vpack.c.b16 %v1253, %v1252
      %v1314 = vpack.c.b16 %v1255, %v1254
      %v1315 = vpack.c.b16 %v1257, %v1256
      %v1316 = vpack.c.b16 %v1259, %v1258
      %v1317 = vpack.c.b16 %v1261, %v1260
      %v1318 = vpack.c.b16 %v1263, %v1262
      %v1319 = vpack.c.b16 %v1265, %v1264
      %v1320 = vpack.c.b16 %v1267, %v1266
      %v1321 = vpack.c.b16 %v1269, %v1268
      %v1322 = vpack.c.b16 %v1271, %v1270
      %v1323 = vpack.c.b16 %v1273, %v1272
      %v1324 = vpack.c.b16 %v1275, %v1274
      %v1325 = vpack.c.b16 %v1277, %v1276
      %v1326 = vpack.c.b16 %v1279, %v1278
      %v1327 = vpack.c.b16 %v1281, %v1280
      %v1328 = vpack.c.b16 %v1283, %v1282
      %v1329 = vpack.c.b16 %v1285, %v1284
      %v1330 = vpack.c.b16 %v1287, %v1286
      %v1331 = vpack.c.b16 %v1289, %v1288
      %v1332 = vpack.c.b16 %v1291, %v1290
      %v1333 = vpack.c.b16 %v1293, %v1292
      %v1334 = vpack.c.b16 %v1295, %v1294
      %v1335 = vpack.c.b16 %v1297, %v1296
      %v1336 = vpack.c.b16 %v1299, %v1298
      %v1337 = vpack.c.b16 %v1301, %v1300
      %v1338 = vpack.c.b16 %v1303, %v1302
      %v1339 = vpack.c.b16 %v1305, %v1304
      %v1340 = vpack.c.b16 %v1307, %v1306
      %v1341 = vpack.c.b16 %v1309, %v1308
      %1374 = vmatprep.subr.bf16.mxu0 0
      %1375 = vmatpush1.bf16.msra.mxu0 %v1317
      %1376 = vmatprep.subr.bf16.mxu0 0
      %1377 = vmatpush1.bf16.msra.mxu0 %v1316
      %1378 = vmatprep.subr.bf16.mxu0 0
      %1379 = vmatpush1.bf16.msra.mxu0 %v1315
      %1380 = vmatprep.subr.bf16.mxu0 0
      %1381 = vmatpush1.bf16.msra.mxu0 %v1314
      %1382 = vmatprep.subr.bf16.mxu0 0
      %1383 = vmatpush1.bf16.msra.mxu0 %v1313
      %1384 = vmatprep.subr.bf16.mxu0 0
      %1385 = vmatpush1.bf16.msra.mxu0 %v1312
      %1386 = vmatprep.subr.bf16.mxu0 0
      %1387 = vmatpush1.bf16.msra.mxu0 %v1311
      %1388 = vmatprep.subr.bf16.mxu0 0
      %1389 = vmatpush1.bf16.msra.mxu0 %v1310
      %1390 = vmatprep.subr.bf16.mxu0 0
      %1391 = vmatpush2.bf16.msra.mxu0 %v1325
      %1392 = vmatprep.subr.bf16.mxu0 0
      %1393 = vmatpush2.bf16.msra.mxu0 %v1324
      %1394 = vmatprep.subr.bf16.mxu0 0
      %1395 = vmatpush2.bf16.msra.mxu0 %v1323
      %1396 = vmatprep.subr.bf16.mxu0 0
      %1397 = vmatpush2.bf16.msra.mxu0 %v1322
      %1398 = vmatprep.subr.bf16.mxu0 0
      %1399 = vmatpush2.bf16.msra.mxu0 %v1321
      %1400 = vmatprep.subr.bf16.mxu0 0
      %1401 = vmatpush2.bf16.msra.mxu0 %v1320
      %1402 = vmatprep.subr.bf16.mxu0 0
      %1403 = vmatpush2.bf16.msra.mxu0 %v1319
      %1404 = vmatprep.subr.bf16.mxu0 0
      %1405 = vmatpush2.bf16.msra.mxu0 %v1318
      %1406 = vmatprep.mubr.bf16.mxu0 %v1103
      %1407 = vmatmul.mubr.bf16.gmra.mxu0 %v1102
      %v1408 = vpop.f32.mrf.mxu0
      %v1409 = vadd.f32 0.0, %v1408
      %v1410 = vpop.f32.mrf.mxu0
      %v1411 = vpop.f32.mrf.mxu0
      %v1412 = vadd.f32 0.0, %v1411
      %v1413 = vpop.f32.mrf.mxu0
      %1414 = vmatprep.mubr.bf16.mxu0 %v1107
      %1415 = vmatmul.mubr.bf16.gmra.mxu0 %v1106
      %v1416 = vpop.f32.mrf.mxu0
      %v1417 = vadd.f32 0.0, %v1416
      %v1418 = vpop.f32.mrf.mxu0
      %v1419 = vpop.f32.mrf.mxu0
      %v1420 = vadd.f32 0.0, %v1419
      %v1421 = vpop.f32.mrf.mxu0
      %1422 = vmatprep.mubr.bf16.mxu0 %v1111
      %1423 = vmatmul.mubr.bf16.gmra.mxu0 %v1110
      %v1424 = vpop.f32.mrf.mxu0
      %v1425 = vadd.f32 0.0, %v1424
      %v1426 = vpop.f32.mrf.mxu0
      %v1427 = vpop.f32.mrf.mxu0
      %v1428 = vadd.f32 0.0, %v1427
      %v1429 = vpop.f32.mrf.mxu0
      %1430 = vmatprep.mubr.bf16.mxu0 %v1115
      %1431 = vmatmul.mubr.bf16.gmra.mxu0 %v1114
      %v1432 = vpop.f32.mrf.mxu0
      %v1433 = vadd.f32 0.0, %v1432
      %v1434 = vpop.f32.mrf.mxu0
      %v1435 = vpop.f32.mrf.mxu0
      %v1436 = vadd.f32 0.0, %v1435
      %v1437 = vpop.f32.mrf.mxu0
      %1438 = vdwg.mxu0
      %1439 = vmatprep.subr.bf16.mxu0 0
      %1440 = vmatpush1.bf16.msra.mxu0 %v1333
      %1441 = vmatprep.subr.bf16.mxu0 0
      %1442 = vmatpush1.bf16.msra.mxu0 %v1332
      %1443 = vmatprep.subr.bf16.mxu0 0
      %1444 = vmatpush1.bf16.msra.mxu0 %v1331
      %1445 = vmatprep.subr.bf16.mxu0 0
      %1446 = vmatpush1.bf16.msra.mxu0 %v1330
      %1447 = vmatprep.subr.bf16.mxu0 0
      %1448 = vmatpush1.bf16.msra.mxu0 %v1329
      %1449 = vmatprep.subr.bf16.mxu0 0
      %1450 = vmatpush1.bf16.msra.mxu0 %v1328
      %1451 = vmatprep.subr.bf16.mxu0 0
      %1452 = vmatpush1.bf16.msra.mxu0 %v1327
      %1453 = vmatprep.subr.bf16.mxu0 0
      %1454 = vmatpush1.bf16.msra.mxu0 %v1326
      %1455 = vmatprep.subr.bf16.mxu0 0
      %1456 = vmatpush2.bf16.msra.mxu0 %v1341
      %1457 = vmatprep.subr.bf16.mxu0 0
      %1458 = vmatpush2.bf16.msra.mxu0 %v1340
      %1459 = vmatprep.subr.bf16.mxu0 0
      %1460 = vmatpush2.bf16.msra.mxu0 %v1339
      %1461 = vmatprep.subr.bf16.mxu0 0
      %1462 = vmatpush2.bf16.msra.mxu0 %v1338
      %1463 = vmatprep.subr.bf16.mxu0 0
      %1464 = vmatpush2.bf16.msra.mxu0 %v1337
      %1465 = vmatprep.subr.bf16.mxu0 0
      %1466 = vmatpush2.bf16.msra.mxu0 %v1336
      %1467 = vmatprep.subr.bf16.mxu0 0
      %1468 = vmatpush2.bf16.msra.mxu0 %v1335
      %1469 = vmatprep.subr.bf16.mxu0 0
      %1470 = vmatpush2.bf16.msra.mxu0 %v1334
      %1471 = vmatprep.mubr.bf16.mxu0 %v1105
      %1472 = vmatmul.mubr.bf16.gmra.mxu0 %v1104
      %v1473 = vpop.f32.mrf.mxu0
      %v1474 = vadd.f32 %v1409, %v1473
      %v1475 = vpop.f32.mrf.mxu0
      %v1476 = vpop.f32.mrf.mxu0
      %v1477 = vadd.f32 %v1412, %v1476
      %v1478 = vpop.f32.mrf.mxu0
      %1479 = vmatprep.mubr.bf16.mxu0 %v1109
      %1480 = vmatmul.mubr.bf16.gmra.mxu0 %v1108
      %v1481 = vpop.f32.mrf.mxu0
      %v1482 = vadd.f32 %v1417, %v1481
      %v1483 = vpop.f32.mrf.mxu0
      %v1484 = vpop.f32.mrf.mxu0
      %v1485 = vadd.f32 %v1420, %v1484
      %v1486 = vpop.f32.mrf.mxu0
      %1487 = vmatprep.mubr.bf16.mxu0 %v1113
      %1488 = vmatmul.mubr.bf16.gmra.mxu0 %v1112
      %v1489 = vpop.f32.mrf.mxu0
      %v1490 = vadd.f32 %v1425, %v1489
      %v1491 = vpop.f32.mrf.mxu0
      %v1492 = vpop.f32.mrf.mxu0
      %v1493 = vadd.f32 %v1428, %v1492
      %v1494 = vpop.f32.mrf.mxu0
      %1495 = vmatprep.mubr.bf16.mxu0 %v1117
      %1496 = vmatmul.mubr.bf16.gmra.mxu0 %v1116
      %v1497 = vpop.f32.mrf.mxu0
      %v1498 = vadd.f32 %v1433, %v1497
      %v1499 = vpop.f32.mrf.mxu0
      %v1500 = vpop.f32.mrf.mxu0
      %v1501 = vadd.f32 %v1436, %v1500
      %v1502 = vpop.f32.mrf.mxu0
      %1503 = vdwg.mxu0
      %v1504 = vmul.f32 %v1474, 0.5
      %v1505 = vmul.f32 %v1477, 0.5
      %v1506 = vmul.f32 %v1482, 0.5
      %v1507 = vmul.f32 %v1485, 0.5
      %v1508 = vmul.f32 %v1490, 0.5
      %v1509 = vmul.f32 %v1493, 0.5
      %v1510 = vmul.f32 %v1498, 0.5
      %v1511 = vmul.f32 %v1501, 0.5
      %v1512 = vld [vmem:[%s442] sm:$0xf]
      %v1513 = vld [vmem:[%s442 + $0x4] sm:$0xf]
      %v1514 = vld [vmem:[%s442 + $0x8] sm:$0xf]
      %v1515 = vld [vmem:[%s442 + $0xc] sm:$0xf]
      %v1516 = vld [vmem:[%s442 + $0x10] sm:$0xf]
      %v1517 = vld [vmem:[%s442 + $0x14] sm:$0xf]
      %v1518 = vld [vmem:[%s442 + $0x18] sm:$0xf]
      %v1519 = vld [vmem:[%s442 + $0x1c] sm:$0xf]
      %v1520 = vld [vmem:[%s8] sm:$0xf]
      %v1521 = vld [vmem:[%s8 + $0x4] sm:$0xf]
      %v1530 = vunpack.c.l.b16 %v1512
      %v1531 = vunpack.c.l.b16 %v1513
      %v1532 = vunpack.c.l.b16 %v1514
      %v1533 = vunpack.c.l.b16 %v1515
      %v1534 = vunpack.c.l.b16 %v1516
      %v1535 = vunpack.c.l.b16 %v1517
      %v1536 = vunpack.c.l.b16 %v1518
      %v1537 = vunpack.c.l.b16 %v1519
      %v1538 = vpack.c.b16 %v1531, %v1530
      %v1539 = vpack.c.b16 %v1533, %v1532
      %v1540 = vpack.c.b16 %v1535, %v1534
      %v1541 = vpack.c.b16 %v1537, %v1536
      %v1544 = vunpack.c.l.b16 %v1520
      %v1545 = vunpack.c.l.b16 %v1521
      %v1546 = vpack.c.b16 %v1545, %v1544
      %vm1548 = vcmask 130048
      %v1550 = vsel %vm1548, %v1538, 0
      %v1553 = vsel %vm1548, %v1539, 0
      %v1556 = vsel %vm1548, %v1540, 0
      %v1559 = vsel %vm1548, %v1541, 0
      %1561 = vmatprep.subr.bf16.mxu0 0
      %1562 = vmatpush1.bf16.msra.mxu0 0
      %1563 = vmatprep.subr.bf16.mxu0 0
      %1564 = vmatpush1.bf16.msra.mxu0 0
      %1565 = vmatprep.subr.bf16.mxu0 0
      %1566 = vmatpush1.bf16.msra.mxu0 0
      %1567 = vmatprep.subr.bf16.mxu0 0
      %1568 = vmatpush1.bf16.msra.mxu0 0
      %1569 = vmatprep.subr.bf16.mxu0 0
      %1570 = vmatpush1.bf16.msra.mxu0 0
      %1571 = vmatprep.subr.bf16.mxu0 0
      %1572 = vmatpush1.bf16.msra.mxu0 0
      %1573 = vmatprep.subr.bf16.mxu0 0
      %1574 = vmatpush1.bf16.msra.mxu0 0
      %1575 = vmatprep.subr.bf16.mxu0 0
      %1576 = vmatpush1.bf16.msra.mxu0 %v1546
      %1577 = vmatprep.subr.bf16.mxu0 0
      %1578 = vmatpush2.bf16.msra.mxu0 0
      %1579 = vmatprep.subr.bf16.mxu0 0
      %1580 = vmatpush2.bf16.msra.mxu0 0
      %1581 = vmatprep.subr.bf16.mxu0 0
      %1582 = vmatpush2.bf16.msra.mxu0 0
      %1583 = vmatprep.subr.bf16.mxu0 0
      %1584 = vmatpush2.bf16.msra.mxu0 0
      %1585 = vmatprep.subr.bf16.mxu0 0
      %1586 = vmatpush2.bf16.msra.mxu0 0
      %1587 = vmatprep.subr.bf16.mxu0 0
      %1588 = vmatpush2.bf16.msra.mxu0 0
      %1589 = vmatprep.subr.bf16.mxu0 0
      %1590 = vmatpush2.bf16.msra.mxu0 0
      %1591 = vmatprep.subr.bf16.mxu0 0
      %1592 = vmatpush2.bf16.msra.mxu0 0
      %1593 = vmatprep.mubr.bf16.mxu0 0
      %1594 = vmatmul.mubr.bf16.gmra.mxu0 %v1550
      %v1595 = vpop.f32.mrf.mxu0
      %v1596 = vadd.f32 0.0, %v1595
      %v1597 = vpop.f32.mrf.mxu0
      %v1598 = vpop.f32.mrf.mxu0
      %v1599 = vadd.f32 0.0, %v1598
      %v1600 = vpop.f32.mrf.mxu0
      %1601 = vmatprep.mubr.bf16.mxu0 0
      %1602 = vmatmul.mubr.bf16.gmra.mxu0 %v1553
      %v1603 = vpop.f32.mrf.mxu0
      %v1604 = vadd.f32 0.0, %v1603
      %v1605 = vpop.f32.mrf.mxu0
      %v1606 = vpop.f32.mrf.mxu0
      %v1607 = vadd.f32 0.0, %v1606
      %v1608 = vpop.f32.mrf.mxu0
      %1609 = vmatprep.mubr.bf16.mxu0 0
      %1610 = vmatmul.mubr.bf16.gmra.mxu0 %v1556
      %v1611 = vpop.f32.mrf.mxu0
      %v1612 = vadd.f32 0.0, %v1611
      %v1613 = vpop.f32.mrf.mxu0
      %v1614 = vpop.f32.mrf.mxu0
      %v1615 = vadd.f32 0.0, %v1614
      %v1616 = vpop.f32.mrf.mxu0
      %1617 = vmatprep.mubr.bf16.mxu0 0
      %1618 = vmatmul.mubr.bf16.gmra.mxu0 %v1559
      %v1619 = vpop.f32.mrf.mxu0
      %v1620 = vadd.f32 0.0, %v1619
      %v1621 = vpop.f32.mrf.mxu0
      %v1622 = vpop.f32.mrf.mxu0
      %v1623 = vadd.f32 0.0, %v1622
      %v1624 = vpop.f32.mrf.mxu0
      %1625 = vdwg.mxu0
      %v1626 = vmax.f32 %v1504, -10.0
      %v1627 = vmax.f32 %v1505, -10.0
      %v1628 = vmax.f32 %v1506, -10.0
      %v1629 = vmax.f32 %v1507, -10.0
      %v1630 = vmax.f32 %v1508, -10.0
      %v1631 = vmax.f32 %v1509, -10.0
      %v1632 = vmax.f32 %v1510, -10.0
      %v1633 = vmax.f32 %v1511, -10.0
      %v1634 = vmin.f32 %v1626, 10.0
      %v1635 = vmin.f32 %v1627, 10.0
      %v1636 = vmin.f32 %v1628, 10.0
      %v1637 = vmin.f32 %v1629, 10.0
      %v1638 = vmin.f32 %v1630, 10.0
      %v1639 = vmin.f32 %v1631, 10.0
      %v1640 = vmin.f32 %v1632, 10.0
      %v1641 = vmin.f32 %v1633, 10.0
      %v1642 = vmul.f32 %v1634, 1.442695
      %v1643 = vpow.pop %v1642
      %v1644 = vmul.f32 %v1635, 1.442695
      %v1645 = vpow.pop %v1644
      %v1646 = vmul.f32 %v1636, 1.442695
      %v1647 = vpow.pop %v1646
      %v1648 = vmul.f32 %v1637, 1.442695
      %v1649 = vpow.pop %v1648
      %v1650 = vmul.f32 %v1638, 1.442695
      %v1651 = vpow.pop %v1650
      %v1652 = vmul.f32 %v1639, 1.442695
      %v1653 = vpow.pop %v1652
      %v1654 = vmul.f32 %v1640, 1.442695
      %v1655 = vpow.pop %v1654
      %v1656 = vmul.f32 %v1641, 1.442695
      %v1657 = vpow.pop %v1656
      %v1658 = vmul.f32 %v1643, %v1596
      %v1659 = vmul.f32 %v1645, %v1599
      %v1660 = vmul.f32 %v1647, %v1604
      %v1661 = vmul.f32 %v1649, %v1607
      %v1662 = vmul.f32 %v1651, %v1612
      %v1663 = vmul.f32 %v1653, %v1615
      %v1664 = vmul.f32 %v1655, %v1620
      %v1665 = vmul.f32 %v1657, %v1623
      %v1666 = vpack.c.bf16 %v1659, %v1658
      %v1667 = vpack.c.bf16 %v1661, %v1660
      %v1668 = vpack.c.bf16 %v1663, %v1662
      %v1669 = vpack.c.bf16 %v1665, %v1664
      %v1670 = vld [vmem:[%s10] sm:$0xff]
      %v1671 = vld [vmem:[%s10 + $0x8] sm:$0xff]
      %v1672 = vld [vmem:[%s10 + $0x10] sm:$0xf]
      %v1673 = vld [vmem:[%s10 + $0x14] sm:$0xff]
      %v1674 = vld [vmem:[%s10 + $0x1c] sm:$0xff]
      %v1675 = vld [vmem:[%s10 + $0x24] sm:$0xf]
      %v1676 = vld [vmem:[%s10 + $0x28] sm:$0xff]
      %v1677 = vld [vmem:[%s10 + $0x30] sm:$0xff]
      %v1678 = vld [vmem:[%s10 + $0x38] sm:$0xf]
      %v1679 = vld [vmem:[%s10 + $0x3c] sm:$0xff]
      %v1680 = vld [vmem:[%s10 + $0x44] sm:$0xff]
      %v1681 = vld [vmem:[%s10 + $0x4c] sm:$0xf]
      %v1682 = vld [vmem:[%s10 + $0x50] sm:$0xff]
      %v1683 = vld [vmem:[%s10 + $0x58] sm:$0xff]
      %v1684 = vld [vmem:[%s10 + $0x60] sm:$0xf]
      %v1685 = vld [vmem:[%s10 + $0x64] sm:$0xff]
      %v1686 = vld [vmem:[%s10 + $0x6c] sm:$0xff]
      %v1687 = vld [vmem:[%s10 + $0x74] sm:$0xf]
      %v1688 = vld [vmem:[%s10 + $0x78] sm:$0xff]
      %v1689 = vld [vmem:[%s10 + $0x80] sm:$0xff]
      %v1690 = vld [vmem:[%s10 + $0x88] sm:$0xf]
      %v1691 = vld [vmem:[%s10 + $0x8c] sm:$0xff]
      %v1692 = vld [vmem:[%s10 + $0x94] sm:$0xff]
      %v1693 = vld [vmem:[%s10 + $0x9c] sm:$0xf]
      %v1694 = vld [vmem:[%s10 + $0xa0] sm:$0xff]
      %v1695 = vld [vmem:[%s10 + $0xa8] sm:$0xff]
      %v1696 = vld [vmem:[%s10 + $0xb0] sm:$0xf]
      %v1697 = vld [vmem:[%s10 + $0xb4] sm:$0xff]
      %v1698 = vld [vmem:[%s10 + $0xbc] sm:$0xff]
      %v1699 = vld [vmem:[%s10 + $0xc4] sm:$0xf]
      %v1700 = vld [vmem:[%s10 + $0xc8] sm:$0xff]
      %v1701 = vld [vmem:[%s10 + $0xd0] sm:$0xff]
      %v1702 = vld [vmem:[%s10 + $0xd8] sm:$0xf]
      %v1703 = vld [vmem:[%s10 + $0xdc] sm:$0xff]
      %v1704 = vld [vmem:[%s10 + $0xe4] sm:$0xff]
      %v1705 = vld [vmem:[%s10 + $0xec] sm:$0xf]
      %v1706 = vld [vmem:[%s10 + $0xf0] sm:$0xff]
      %v1707 = vld [vmem:[%s10 + $0xf8] sm:$0xff]
      %v1708 = vld [vmem:[%s10 + $0x100] sm:$0xf]
      %v1709 = vld [vmem:[%s10 + $0x104] sm:$0xff]
      %v1710 = vld [vmem:[%s10 + $0x10c] sm:$0xff]
      %v1711 = vld [vmem:[%s10 + $0x114] sm:$0xf]
      %v1712 = vld [vmem:[%s10 + $0x118] sm:$0xff]
      %v1713 = vld [vmem:[%s10 + $0x120] sm:$0xff]
      %v1714 = vld [vmem:[%s10 + $0x128] sm:$0xf]
      %v1715 = vld [vmem:[%s10 + $0x12c] sm:$0xff]
      %v1716 = vld [vmem:[%s10 + $0x134] sm:$0xff]
      %v1717 = vld [vmem:[%s10 + $0x13c] sm:$0xf]
      %v1766 = vunpack.c.l.b16 %v1670
      %v1767 = vunpack.c.h.b16 %v1670
      %v1768 = vunpack.c.l.b16 %v1671
      %v1769 = vunpack.c.h.b16 %v1671
      %v1770 = vunpack.c.l.b16 %v1672
      %v1771 = vunpack.c.l.b16 %v1673
      %v1772 = vunpack.c.h.b16 %v1673
      %v1773 = vunpack.c.l.b16 %v1674
      %v1774 = vunpack.c.h.b16 %v1674
      %v1775 = vunpack.c.l.b16 %v1675
      %v1776 = vunpack.c.l.b16 %v1676
      %v1777 = vunpack.c.h.b16 %v1676
      %v1778 = vunpack.c.l.b16 %v1677
      %v1779 = vunpack.c.h.b16 %v1677
      %v1780 = vunpack.c.l.b16 %v1678
      %v1781 = vunpack.c.l.b16 %v1679
      %v1782 = vunpack.c.h.b16 %v1679
      %v1783 = vunpack.c.l.b16 %v1680
      %v1784 = vunpack.c.h.b16 %v1680
      %v1785 = vunpack.c.l.b16 %v1681
      %v1786 = vunpack.c.l.b16 %v1682
      %v1787 = vunpack.c.h.b16 %v1682
      %v1788 = vunpack.c.l.b16 %v1683
      %v1789 = vunpack.c.h.b16 %v1683
      %v1790 = vunpack.c.l.b16 %v1684
      %v1791 = vunpack.c.l.b16 %v1685
      %v1792 = vunpack.c.h.b16 %v1685
      %v1793 = vunpack.c.l.b16 %v1686
      %v1794 = vunpack.c.h.b16 %v1686
      %v1795 = vunpack.c.l.b16 %v1687
      %v1796 = vunpack.c.l.b16 %v1688
      %v1797 = vunpack.c.h.b16 %v1688
      %v1798 = vunpack.c.l.b16 %v1689
      %v1799 = vunpack.c.h.b16 %v1689
      %v1800 = vunpack.c.l.b16 %v1690
      %v1801 = vunpack.c.l.b16 %v1691
      %v1802 = vunpack.c.h.b16 %v1691
      %v1803 = vunpack.c.l.b16 %v1692
      %v1804 = vunpack.c.h.b16 %v1692
      %v1805 = vunpack.c.l.b16 %v1693
      %v1806 = vunpack.c.l.b16 %v1694
      %v1807 = vunpack.c.h.b16 %v1694
      %v1808 = vunpack.c.l.b16 %v1695
      %v1809 = vunpack.c.h.b16 %v1695
      %v1810 = vunpack.c.l.b16 %v1696
      %v1811 = vunpack.c.l.b16 %v1697
      %v1812 = vunpack.c.h.b16 %v1697
      %v1813 = vunpack.c.l.b16 %v1698
      %v1814 = vunpack.c.h.b16 %v1698
      %v1815 = vunpack.c.l.b16 %v1699
      %v1816 = vunpack.c.l.b16 %v1700
      %v1817 = vunpack.c.h.b16 %v1700
      %v1818 = vunpack.c.l.b16 %v1701
      %v1819 = vunpack.c.h.b16 %v1701
      %v1820 = vunpack.c.l.b16 %v1702
      %v1821 = vunpack.c.l.b16 %v1703
      %v1822 = vunpack.c.h.b16 %v1703
      %v1823 = vunpack.c.l.b16 %v1704
      %v1824 = vunpack.c.h.b16 %v1704
      %v1825 = vunpack.c.l.b16 %v1705
      %v1826 = vunpack.c.l.b16 %v1706
      %v1827 = vunpack.c.h.b16 %v1706
      %v1828 = vunpack.c.l.b16 %v1707
      %v1829 = vunpack.c.h.b16 %v1707
      %v1830 = vunpack.c.l.b16 %v1708
      %v1831 = vunpack.c.l.b16 %v1709
      %v1832 = vunpack.c.h.b16 %v1709
      %v1833 = vunpack.c.l.b16 %v1710
      %v1834 = vunpack.c.h.b16 %v1710
      %v1835 = vunpack.c.l.b16 %v1711
      %v1836 = vunpack.c.l.b16 %v1712
      %v1837 = vunpack.c.h.b16 %v1712
      %v1838 = vunpack.c.l.b16 %v1713
      %v1839 = vunpack.c.h.b16 %v1713
      %v1840 = vunpack.c.l.b16 %v1714
      %v1841 = vunpack.c.l.b16 %v1715
      %v1842 = vunpack.c.h.b16 %v1715
      %v1843 = vunpack.c.l.b16 %v1716
      %v1844 = vunpack.c.h.b16 %v1716
      %v1845 = vunpack.c.l.b16 %v1717
      %v1846 = vpack.c.b16 %v1771, %v1766
      %v1847 = vpack.c.b16 %v1772, %v1767
      %v1848 = vpack.c.b16 %v1773, %v1768
      %v1849 = vpack.c.b16 %v1774, %v1769
      %v1850 = vpack.c.b16 %v1775, %v1770
      %v1851 = vpack.c.b16 %v1781, %v1776
      %v1852 = vpack.c.b16 %v1782, %v1777
      %v1853 = vpack.c.b16 %v1783, %v1778
      %v1854 = vpack.c.b16 %v1784, %v1779
      %v1855 = vpack.c.b16 %v1785, %v1780
      %v1856 = vpack.c.b16 %v1791, %v1786
      %v1857 = vpack.c.b16 %v1792, %v1787
      %v1858 = vpack.c.b16 %v1793, %v1788
      %v1859 = vpack.c.b16 %v1794, %v1789
      %v1860 = vpack.c.b16 %v1795, %v1790
      %v1861 = vpack.c.b16 %v1801, %v1796
      %v1862 = vpack.c.b16 %v1802, %v1797
      %v1863 = vpack.c.b16 %v1803, %v1798
      %v1864 = vpack.c.b16 %v1804, %v1799
      %v1865 = vpack.c.b16 %v1805, %v1800
      %v1866 = vpack.c.b16 %v1811, %v1806
      %v1867 = vpack.c.b16 %v1812, %v1807
      %v1868 = vpack.c.b16 %v1813, %v1808
      %v1869 = vpack.c.b16 %v1814, %v1809
      %v1870 = vpack.c.b16 %v1815, %v1810
      %v1871 = vpack.c.b16 %v1821, %v1816
      %v1872 = vpack.c.b16 %v1822, %v1817
      %v1873 = vpack.c.b16 %v1823, %v1818
      %v1874 = vpack.c.b16 %v1824, %v1819
      %v1875 = vpack.c.b16 %v1825, %v1820
      %v1876 = vpack.c.b16 %v1831, %v1826
      %v1877 = vpack.c.b16 %v1832, %v1827
      %v1878 = vpack.c.b16 %v1833, %v1828
      %v1879 = vpack.c.b16 %v1834, %v1829
      %v1880 = vpack.c.b16 %v1835, %v1830
      %v1881 = vpack.c.b16 %v1841, %v1836
      %v1882 = vpack.c.b16 %v1842, %v1837
      %v1883 = vpack.c.b16 %v1843, %v1838
      %v1884 = vpack.c.b16 %v1844, %v1839
      %v1885 = vpack.c.b16 %v1845, %v1840
      %1926 = vmatprep.subr.bf16.mxu0 %v1882
      %1927 = vmatpush1.bf16.msra.mxu0 %v1881
      %1928 = vmatprep.subr.bf16.mxu0 %v1877
      %1929 = vmatpush1.bf16.msra.mxu0 %v1876
      %1930 = vmatprep.subr.bf16.mxu0 %v1872
      %1931 = vmatpush1.bf16.msra.mxu0 %v1871
      %1932 = vmatprep.subr.bf16.mxu0 %v1867
      %1933 = vmatpush1.bf16.msra.mxu0 %v1866
      %1934 = vmatprep.subr.bf16.mxu0 %v1862
      %1935 = vmatpush1.bf16.msra.mxu0 %v1861
      %1936 = vmatprep.subr.bf16.mxu0 %v1857
      %1937 = vmatpush1.bf16.msra.mxu0 %v1856
      %1938 = vmatprep.subr.bf16.mxu0 %v1852
      %1939 = vmatpush1.bf16.msra.mxu0 %v1851
      %1940 = vmatprep.subr.bf16.mxu0 %v1847
      %1941 = vmatpush1.bf16.msra.mxu0 %v1846
      %1942 = vmatprep.subr.bf16.mxu0 0
      %1943 = vmatpush2.bf16.msra.mxu0 0
      %1944 = vmatprep.subr.bf16.mxu0 0
      %1945 = vmatpush2.bf16.msra.mxu0 0
      %1946 = vmatprep.subr.bf16.mxu0 0
      %1947 = vmatpush2.bf16.msra.mxu0 0
      %1948 = vmatprep.subr.bf16.mxu0 0
      %1949 = vmatpush2.bf16.msra.mxu0 0
      %1950 = vmatprep.subr.bf16.mxu0 0
      %1951 = vmatpush2.bf16.msra.mxu0 0
      %1952 = vmatprep.subr.bf16.mxu0 0
      %1953 = vmatpush2.bf16.msra.mxu0 0
      %1954 = vmatprep.subr.bf16.mxu0 0
      %1955 = vmatpush2.bf16.msra.mxu0 0
      %1956 = vmatprep.subr.bf16.mxu0 0
      %1957 = vmatpush2.bf16.msra.mxu0 0
      %1958 = vmatprep.mubr.bf16.mxu0 0
      %1959 = vmatmul.mubr.bf16.gmra.mxu0 %v1666
      %v1960 = vpop.f32.mrf.mxu0
      %v1961 = vadd.f32 0.0, %v1960
      %v1962 = vpop.f32.mrf.mxu0
      %v1963 = vadd.f32 0.0, %v1962
      %v1964 = vpop.f32.mrf.mxu0
      %v1965 = vadd.f32 0.0, %v1964
      %v1966 = vpop.f32.mrf.mxu0
      %v1967 = vadd.f32 0.0, %v1966
      %1968 = vmatprep.mubr.bf16.mxu0 0
      %1969 = vmatmul.mubr.bf16.gmra.mxu0 %v1667
      %v1970 = vpop.f32.mrf.mxu0
      %v1971 = vadd.f32 0.0, %v1970
      %v1972 = vpop.f32.mrf.mxu0
      %v1973 = vadd.f32 0.0, %v1972
      %v1974 = vpop.f32.mrf.mxu0
      %v1975 = vadd.f32 0.0, %v1974
      %v1976 = vpop.f32.mrf.mxu0
      %v1977 = vadd.f32 0.0, %v1976
      %1978 = vmatprep.mubr.bf16.mxu0 0
      %1979 = vmatmul.mubr.bf16.gmra.mxu0 %v1668
      %v1980 = vpop.f32.mrf.mxu0
      %v1981 = vadd.f32 0.0, %v1980
      %v1982 = vpop.f32.mrf.mxu0
      %v1983 = vadd.f32 0.0, %v1982
      %v1984 = vpop.f32.mrf.mxu0
      %v1985 = vadd.f32 0.0, %v1984
      %v1986 = vpop.f32.mrf.mxu0
      %v1987 = vadd.f32 0.0, %v1986
      %1988 = vmatprep.mubr.bf16.mxu0 0
      %1989 = vmatmul.mubr.bf16.gmra.mxu0 %v1669
      %v1990 = vpop.f32.mrf.mxu0
      %v1991 = vadd.f32 0.0, %v1990
      %v1992 = vpop.f32.mrf.mxu0
      %v1993 = vadd.f32 0.0, %v1992
      %v1994 = vpop.f32.mrf.mxu0
      %v1995 = vadd.f32 0.0, %v1994
      %v1996 = vpop.f32.mrf.mxu0
      %v1997 = vadd.f32 0.0, %v1996
      %1998 = vdwg.mxu0
      %1999 = vmatprep.subr.bf16.mxu0 %v1884
      %2000 = vmatpush1.bf16.msra.mxu0 %v1883
      %2001 = vmatprep.subr.bf16.mxu0 %v1879
      %2002 = vmatpush1.bf16.msra.mxu0 %v1878
      %2003 = vmatprep.subr.bf16.mxu0 %v1874
      %2004 = vmatpush1.bf16.msra.mxu0 %v1873
      %2005 = vmatprep.subr.bf16.mxu0 %v1869
      %2006 = vmatpush1.bf16.msra.mxu0 %v1868
      %2007 = vmatprep.subr.bf16.mxu0 %v1864
      %2008 = vmatpush1.bf16.msra.mxu0 %v1863
      %2009 = vmatprep.subr.bf16.mxu0 %v1859
      %2010 = vmatpush1.bf16.msra.mxu0 %v1858
      %2011 = vmatprep.subr.bf16.mxu0 %v1854
      %2012 = vmatpush1.bf16.msra.mxu0 %v1853
      %2013 = vmatprep.subr.bf16.mxu0 %v1849
      %2014 = vmatpush1.bf16.msra.mxu0 %v1848
      %2015 = vmatprep.subr.bf16.mxu0 0
      %2016 = vmatpush2.bf16.msra.mxu0 0
      %2017 = vmatprep.subr.bf16.mxu0 0
      %2018 = vmatpush2.bf16.msra.mxu0 0
      %2019 = vmatprep.subr.bf16.mxu0 0
      %2020 = vmatpush2.bf16.msra.mxu0 0
      %2021 = vmatprep.subr.bf16.mxu0 0
      %2022 = vmatpush2.bf16.msra.mxu0 0
      %2023 = vmatprep.subr.bf16.mxu0 0
      %2024 = vmatpush2.bf16.msra.mxu0 0
      %2025 = vmatprep.subr.bf16.mxu0 0
      %2026 = vmatpush2.bf16.msra.mxu0 0
      %2027 = vmatprep.subr.bf16.mxu0 0
      %2028 = vmatpush2.bf16.msra.mxu0 0
      %2029 = vmatprep.subr.bf16.mxu0 0
      %2030 = vmatpush2.bf16.msra.mxu0 0
      %2031 = vmatprep.mubr.bf16.mxu0 0
      %2032 = vmatmul.mubr.bf16.gmra.mxu0 %v1666
      %v2033 = vpop.f32.mrf.mxu0
      %v2034 = vadd.f32 0.0, %v2033
      %v2035 = vpop.f32.mrf.mxu0
      %v2036 = vadd.f32 0.0, %v2035
      %v2037 = vpop.f32.mrf.mxu0
      %v2038 = vadd.f32 0.0, %v2037
      %v2039 = vpop.f32.mrf.mxu0
      %v2040 = vadd.f32 0.0, %v2039
      %2041 = vmatprep.mubr.bf16.mxu0 0
      %2042 = vmatmul.mubr.bf16.gmra.mxu0 %v1667
      %v2043 = vpop.f32.mrf.mxu0
      %v2044 = vadd.f32 0.0, %v2043
      %v2045 = vpop.f32.mrf.mxu0
      %v2046 = vadd.f32 0.0, %v2045
      %v2047 = vpop.f32.mrf.mxu0
      %v2048 = vadd.f32 0.0, %v2047
      %v2049 = vpop.f32.mrf.mxu0
      %v2050 = vadd.f32 0.0, %v2049
      %2051 = vmatprep.mubr.bf16.mxu0 0
      %2052 = vmatmul.mubr.bf16.gmra.mxu0 %v1668
      %v2053 = vpop.f32.mrf.mxu0
      %v2054 = vadd.f32 0.0, %v2053
      %v2055 = vpop.f32.mrf.mxu0
      %v2056 = vadd.f32 0.0, %v2055
      %v2057 = vpop.f32.mrf.mxu0
      %v2058 = vadd.f32 0.0, %v2057
      %v2059 = vpop.f32.mrf.mxu0
      %v2060 = vadd.f32 0.0, %v2059
      %2061 = vmatprep.mubr.bf16.mxu0 0
      %2062 = vmatmul.mubr.bf16.gmra.mxu0 %v1669
      %v2063 = vpop.f32.mrf.mxu0
      %v2064 = vadd.f32 0.0, %v2063
      %v2065 = vpop.f32.mrf.mxu0
      %v2066 = vadd.f32 0.0, %v2065
      %v2067 = vpop.f32.mrf.mxu0
      %v2068 = vadd.f32 0.0, %v2067
      %v2069 = vpop.f32.mrf.mxu0
      %v2070 = vadd.f32 0.0, %v2069
      %2071 = vdwg.mxu0
      %2072 = vmatprep.subr.bf16.mxu0 0
      %2073 = vmatpush1.bf16.msra.mxu0 %v1885
      %2074 = vmatprep.subr.bf16.mxu0 0
      %2075 = vmatpush1.bf16.msra.mxu0 %v1880
      %2076 = vmatprep.subr.bf16.mxu0 0
      %2077 = vmatpush1.bf16.msra.mxu0 %v1875
      %2078 = vmatprep.subr.bf16.mxu0 0
      %2079 = vmatpush1.bf16.msra.mxu0 %v1870
      %2080 = vmatprep.subr.bf16.mxu0 0
      %2081 = vmatpush1.bf16.msra.mxu0 %v1865
      %2082 = vmatprep.subr.bf16.mxu0 0
      %2083 = vmatpush1.bf16.msra.mxu0 %v1860
      %2084 = vmatprep.subr.bf16.mxu0 0
      %2085 = vmatpush1.bf16.msra.mxu0 %v1855
      %2086 = vmatprep.subr.bf16.mxu0 0
      %2087 = vmatpush1.bf16.msra.mxu0 %v1850
      %2088 = vmatprep.subr.bf16.mxu0 0
      %2089 = vmatpush2.bf16.msra.mxu0 0
      %2090 = vmatprep.subr.bf16.mxu0 0
      %2091 = vmatpush2.bf16.msra.mxu0 0
      %2092 = vmatprep.subr.bf16.mxu0 0
      %2093 = vmatpush2.bf16.msra.mxu0 0
      %2094 = vmatprep.subr.bf16.mxu0 0
      %2095 = vmatpush2.bf16.msra.mxu0 0
      %2096 = vmatprep.subr.bf16.mxu0 0
      %2097 = vmatpush2.bf16.msra.mxu0 0
      %2098 = vmatprep.subr.bf16.mxu0 0
      %2099 = vmatpush2.bf16.msra.mxu0 0
      %2100 = vmatprep.subr.bf16.mxu0 0
      %2101 = vmatpush2.bf16.msra.mxu0 0
      %2102 = vmatprep.subr.bf16.mxu0 0
      %2103 = vmatpush2.bf16.msra.mxu0 0
      %2104 = vmatprep.mubr.bf16.mxu0 0
      %2105 = vmatmul.mubr.bf16.gmra.mxu0 %v1666
      %v2106 = vpop.f32.mrf.mxu0
      %v2107 = vadd.f32 0.0, %v2106
      %v2108 = vpop.f32.mrf.mxu0
      %v2109 = vpop.f32.mrf.mxu0
      %v2110 = vadd.f32 0.0, %v2109
      %v2111 = vpop.f32.mrf.mxu0
      %2112 = vmatprep.mubr.bf16.mxu0 0
      %2113 = vmatmul.mubr.bf16.gmra.mxu0 %v1667
      %v2114 = vpop.f32.mrf.mxu0
      %v2115 = vadd.f32 0.0, %v2114
      %v2116 = vpop.f32.mrf.mxu0
      %v2117 = vpop.f32.mrf.mxu0
      %v2118 = vadd.f32 0.0, %v2117
      %v2119 = vpop.f32.mrf.mxu0
      %2120 = vmatprep.mubr.bf16.mxu0 0
      %2121 = vmatmul.mubr.bf16.gmra.mxu0 %v1668
      %v2122 = vpop.f32.mrf.mxu0
      %v2123 = vadd.f32 0.0, %v2122
      %v2124 = vpop.f32.mrf.mxu0
      %v2125 = vpop.f32.mrf.mxu0
      %v2126 = vadd.f32 0.0, %v2125
      %v2127 = vpop.f32.mrf.mxu0
      %2128 = vmatprep.mubr.bf16.mxu0 0
      %2129 = vmatmul.mubr.bf16.gmra.mxu0 %v1669
      %v2130 = vpop.f32.mrf.mxu0
      %v2131 = vadd.f32 0.0, %v2130
      %v2132 = vpop.f32.mrf.mxu0
      %v2133 = vpop.f32.mrf.mxu0
      %v2134 = vadd.f32 0.0, %v2133
      %v2135 = vpop.f32.mrf.mxu0
      %2136 = vdwg.mxu0
      %2137 = vmatprep.subr.mxu0 0.0
      %2138 = vmatpush1.msra.mxu0 0.0
      %2139 = vmatprep.subr.mxu0 0.0
      %2140 = vmatpush1.msra.mxu0 0.0
      %2141 = vmatprep.subr.mxu0 0.0
      %2142 = vmatpush1.msra.mxu0 0.0
      %2143 = vmatprep.subr.mxu0 0.0
      %2144 = vmatpush1.msra.mxu0 0.0
      %2145 = vmatprep.subr.mxu0 0.0
      %2146 = vmatpush1.msra.mxu0 0.0
      %2147 = vmatprep.subr.mxu0 0.0
      %2148 = vmatpush1.msra.mxu0 0.0
      %2149 = vmatprep.subr.mxu0 0.0
      %2150 = vmatpush1.msra.mxu0 0.0
      %2151 = vmatprep.subr.mxu0 0.0
      %2152 = vmatpush1.msra.mxu0 0.0
      %2153 = vmatprep.subr.mxu0 0.0
      %2154 = vmatpush1.msra.mxu0 0.0
      %2155 = vmatprep.subr.mxu0 0.0
      %2156 = vmatpush1.msra.mxu0 0.0
      %2157 = vmatprep.subr.mxu0 0.0
      %2158 = vmatpush1.msra.mxu0 0.0
      %2159 = vmatprep.subr.mxu0 0.0
      %2160 = vmatpush1.msra.mxu0 0.0
      %2161 = vmatprep.subr.mxu0 0.0
      %2162 = vmatpush1.msra.mxu0 0.0
      %2163 = vmatprep.subr.mxu0 0.0
      %2164 = vmatpush1.msra.mxu0 0.0
      %2165 = vmatprep.subr.mxu0 0.0
      %2166 = vmatpush1.msra.mxu0 0.0
      %2167 = vmatprep.subr.mxu0 %v479
      %2168 = vmatpush1.msra.mxu0 %v478
      %2169 = vmatprep.subr.mxu0 0.0
      %2170 = vmatpush2.msra.mxu0 0.0
      %2171 = vmatprep.subr.mxu0 0.0
      %2172 = vmatpush2.msra.mxu0 0.0
      %2173 = vmatprep.subr.mxu0 0.0
      %2174 = vmatpush2.msra.mxu0 0.0
      %2175 = vmatprep.subr.mxu0 0.0
      %2176 = vmatpush2.msra.mxu0 0.0
      %2177 = vmatprep.subr.mxu0 0.0
      %2178 = vmatpush2.msra.mxu0 0.0
      %2179 = vmatprep.subr.mxu0 0.0
      %2180 = vmatpush2.msra.mxu0 0.0
      %2181 = vmatprep.subr.mxu0 0.0
      %2182 = vmatpush2.msra.mxu0 0.0
      %2183 = vmatprep.subr.mxu0 0.0
      %2184 = vmatpush2.msra.mxu0 0.0
      %2185 = vmatprep.subr.mxu0 0.0
      %2186 = vmatpush2.msra.mxu0 0.0
      %2187 = vmatprep.subr.mxu0 0.0
      %2188 = vmatpush2.msra.mxu0 0.0
      %2189 = vmatprep.subr.mxu0 0.0
      %2190 = vmatpush2.msra.mxu0 0.0
      %2191 = vmatprep.subr.mxu0 0.0
      %2192 = vmatpush2.msra.mxu0 0.0
      %2193 = vmatprep.subr.mxu0 0.0
      %2194 = vmatpush2.msra.mxu0 0.0
      %2195 = vmatprep.subr.mxu0 0.0
      %2196 = vmatpush2.msra.mxu0 0.0
      %2197 = vmatprep.subr.mxu0 0.0
      %2198 = vmatpush2.msra.mxu0 0.0
      %2199 = vmatprep.subr.mxu0 0.0
      %2200 = vmatpush2.msra.mxu0 0.0
      %2201 = vmatprep.mubr.f32.mxu0 0.0
      %2202 = vmatmul.mubr.f32.gmra.mxu0 %v821
      %v2203 = vpop.f32.mrf.mxu0
      %v2204 = vadd.f32 %v787, %v2203
      %v2205 = vpop.f32.mrf.mxu0
      %v2206 = vadd.f32 %v788, %v2205
      %2207 = vmatprep.mubr.f32.mxu0 0.0
      %2208 = vmatmul.mubr.f32.gmra.mxu0 %v824
      %v2209 = vpop.f32.mrf.mxu0
      %v2210 = vadd.f32 %v791, %v2209
      %v2211 = vpop.f32.mrf.mxu0
      %v2212 = vadd.f32 %v792, %v2211
      %2213 = vmatprep.mubr.f32.mxu0 0.0
      %2214 = vmatmul.mubr.f32.gmra.mxu0 %v827
      %v2215 = vpop.f32.mrf.mxu0
      %v2216 = vadd.f32 %v795, %v2215
      %v2217 = vpop.f32.mrf.mxu0
      %v2218 = vadd.f32 %v796, %v2217
      %2219 = vmatprep.mubr.f32.mxu0 0.0
      %2220 = vmatmul.mubr.f32.gmra.mxu0 %v830
      %v2221 = vpop.f32.mrf.mxu0
      %v2222 = vadd.f32 %v799, %v2221
      %v2223 = vpop.f32.mrf.mxu0
      %v2224 = vadd.f32 %v800, %v2223
      %2225 = vmatprep.mubr.f32.mxu0 0.0
      %2226 = vmatmul.mubr.f32.gmra.mxu0 %v833
      %v2227 = vpop.f32.mrf.mxu0
      %v2228 = vadd.f32 %v803, %v2227
      %v2229 = vpop.f32.mrf.mxu0
      %v2230 = vadd.f32 %v804, %v2229
      %2231 = vmatprep.mubr.f32.mxu0 0.0
      %2232 = vmatmul.mubr.f32.gmra.mxu0 %v836
      %v2233 = vpop.f32.mrf.mxu0
      %v2234 = vadd.f32 %v807, %v2233
      %v2235 = vpop.f32.mrf.mxu0
      %v2236 = vadd.f32 %v808, %v2235
      %2237 = vmatprep.mubr.f32.mxu0 0.0
      %2238 = vmatmul.mubr.f32.gmra.mxu0 %v839
      %v2239 = vpop.f32.mrf.mxu0
      %v2240 = vadd.f32 %v811, %v2239
      %v2241 = vpop.f32.mrf.mxu0
      %v2242 = vadd.f32 %v812, %v2241
      %2243 = vmatprep.mubr.f32.mxu0 0.0
      %2244 = vmatmul.mubr.f32.gmra.mxu0 %v842
      %v2245 = vpop.f32.mrf.mxu0
      %v2246 = vadd.f32 %v815, %v2245
      %v2247 = vpop.f32.mrf.mxu0
      %v2248 = vadd.f32 %v816, %v2247
      %2249 = vdwg.mxu0
      %2250 = vmatprep.subr.mxu0 0.0
      %2251 = vmatpush1.msra.mxu0 0.0
      %2252 = vmatprep.subr.mxu0 0.0
      %2253 = vmatpush1.msra.mxu0 0.0
      %2254 = vmatprep.subr.mxu0 0.0
      %2255 = vmatpush1.msra.mxu0 0.0
      %2256 = vmatprep.subr.mxu0 0.0
      %2257 = vmatpush1.msra.mxu0 0.0
      %2258 = vmatprep.subr.mxu0 0.0
      %2259 = vmatpush1.msra.mxu0 0.0
      %2260 = vmatprep.subr.mxu0 0.0
      %2261 = vmatpush1.msra.mxu0 0.0
      %2262 = vmatprep.subr.mxu0 0.0
      %2263 = vmatpush1.msra.mxu0 0.0
      %2264 = vmatprep.subr.mxu0 0.0
      %2265 = vmatpush1.msra.mxu0 0.0
      %2266 = vmatprep.subr.mxu0 0.0
      %2267 = vmatpush1.msra.mxu0 0.0
      %2268 = vmatprep.subr.mxu0 0.0
      %2269 = vmatpush1.msra.mxu0 0.0
      %2270 = vmatprep.subr.mxu0 0.0
      %2271 = vmatpush1.msra.mxu0 0.0
      %2272 = vmatprep.subr.mxu0 0.0
      %2273 = vmatpush1.msra.mxu0 0.0
      %2274 = vmatprep.subr.mxu0 0.0
      %2275 = vmatpush1.msra.mxu0 0.0
      %2276 = vmatprep.subr.mxu0 0.0
      %2277 = vmatpush1.msra.mxu0 0.0
      %2278 = vmatprep.subr.mxu0 0.0
      %2279 = vmatpush1.msra.mxu0 0.0
      %2280 = vmatprep.subr.mxu0 %v481
      %2281 = vmatpush1.msra.mxu0 %v480
      %2282 = vmatprep.subr.mxu0 0.0
      %2283 = vmatpush2.msra.mxu0 0.0
      %2284 = vmatprep.subr.mxu0 0.0
      %2285 = vmatpush2.msra.mxu0 0.0
      %2286 = vmatprep.subr.mxu0 0.0
      %2287 = vmatpush2.msra.mxu0 0.0
      %2288 = vmatprep.subr.mxu0 0.0
      %2289 = vmatpush2.msra.mxu0 0.0
      %2290 = vmatprep.subr.mxu0 0.0
      %2291 = vmatpush2.msra.mxu0 0.0
      %2292 = vmatprep.subr.mxu0 0.0
      %2293 = vmatpush2.msra.mxu0 0.0
      %2294 = vmatprep.subr.mxu0 0.0
      %2295 = vmatpush2.msra.mxu0 0.0
      %2296 = vmatprep.subr.mxu0 0.0
      %2297 = vmatpush2.msra.mxu0 0.0
      %2298 = vmatprep.subr.mxu0 0.0
      %2299 = vmatpush2.msra.mxu0 0.0
      %2300 = vmatprep.subr.mxu0 0.0
      %2301 = vmatpush2.msra.mxu0 0.0
      %2302 = vmatprep.subr.mxu0 0.0
      %2303 = vmatpush2.msra.mxu0 0.0
      %2304 = vmatprep.subr.mxu0 0.0
      %2305 = vmatpush2.msra.mxu0 0.0
      %2306 = vmatprep.subr.mxu0 0.0
      %2307 = vmatpush2.msra.mxu0 0.0
      %2308 = vmatprep.subr.mxu0 0.0
      %2309 = vmatpush2.msra.mxu0 0.0
      %2310 = vmatprep.subr.mxu0 0.0
      %2311 = vmatpush2.msra.mxu0 0.0
      %2312 = vmatprep.subr.mxu0 0.0
      %2313 = vmatpush2.msra.mxu0 0.0
      %2314 = vmatprep.mubr.f32.mxu0 0.0
      %2315 = vmatmul.mubr.f32.gmra.mxu0 %v821
      %v2316 = vpop.f32.mrf.mxu0
      %v2317 = vadd.f32 %v789, %v2316
      %v2318 = vpop.f32.mrf.mxu0
      %v2319 = vadd.f32 %v790, %v2318
      %2320 = vmatprep.mubr.f32.mxu0 0.0
      %2321 = vmatmul.mubr.f32.gmra.mxu0 %v824
      %v2322 = vpop.f32.mrf.mxu0
      %v2323 = vadd.f32 %v793, %v2322
      %v2324 = vpop.f32.mrf.mxu0
      %v2325 = vadd.f32 %v794, %v2324
      %2326 = vmatprep.mubr.f32.mxu0 0.0
      %2327 = vmatmul.mubr.f32.gmra.mxu0 %v827
      %v2328 = vpop.f32.mrf.mxu0
      %v2329 = vadd.f32 %v797, %v2328
      %v2330 = vpop.f32.mrf.mxu0
      %v2331 = vadd.f32 %v798, %v2330
      %2332 = vmatprep.mubr.f32.mxu0 0.0
      %2333 = vmatmul.mubr.f32.gmra.mxu0 %v830
      %v2334 = vpop.f32.mrf.mxu0
      %v2335 = vadd.f32 %v801, %v2334
      %v2336 = vpop.f32.mrf.mxu0
      %v2337 = vadd.f32 %v802, %v2336
      %2338 = vmatprep.mubr.f32.mxu0 0.0
      %2339 = vmatmul.mubr.f32.gmra.mxu0 %v833
      %v2340 = vpop.f32.mrf.mxu0
      %v2341 = vadd.f32 %v805, %v2340
      %v2342 = vpop.f32.mrf.mxu0
      %v2343 = vadd.f32 %v806, %v2342
      %2344 = vmatprep.mubr.f32.mxu0 0.0
      %2345 = vmatmul.mubr.f32.gmra.mxu0 %v836
      %v2346 = vpop.f32.mrf.mxu0
      %v2347 = vadd.f32 %v809, %v2346
      %v2348 = vpop.f32.mrf.mxu0
      %v2349 = vadd.f32 %v810, %v2348
      %2350 = vmatprep.mubr.f32.mxu0 0.0
      %2351 = vmatmul.mubr.f32.gmra.mxu0 %v839
      %v2352 = vpop.f32.mrf.mxu0
      %v2353 = vadd.f32 %v813, %v2352
      %v2354 = vpop.f32.mrf.mxu0
      %v2355 = vadd.f32 %v814, %v2354
      %2356 = vmatprep.mubr.f32.mxu0 0.0
      %2357 = vmatmul.mubr.f32.gmra.mxu0 %v842
      %v2358 = vpop.f32.mrf.mxu0
      %v2359 = vadd.f32 %v817, %v2358
      %v2360 = vpop.f32.mrf.mxu0
      %v2361 = vadd.f32 %v818, %v2360
      %2362 = vdwg.mxu0
      %v2363 = vmul.f32 %v1961, %v2204
      %v2364 = vmul.f32 %v1963, %v2206
      %v2365 = vmul.f32 %v2034, %v2317
      %v2366 = vmul.f32 %v2036, %v2319
      %v2367 = vmul.f32 %v1965, %v2210
      %v2368 = vmul.f32 %v1967, %v2212
      %v2369 = vmul.f32 %v2038, %v2323
      %v2370 = vmul.f32 %v2040, %v2325
      %v2371 = vmul.f32 %v1971, %v2216
      %v2372 = vmul.f32 %v1973, %v2218
      %v2373 = vmul.f32 %v2044, %v2329
      %v2374 = vmul.f32 %v2046, %v2331
      %v2375 = vmul.f32 %v1975, %v2222
      %v2376 = vmul.f32 %v1977, %v2224
      %v2377 = vmul.f32 %v2048, %v2335
      %v2378 = vmul.f32 %v2050, %v2337
      %v2379 = vmul.f32 %v1981, %v2228
      %v2380 = vmul.f32 %v1983, %v2230
      %v2381 = vmul.f32 %v2054, %v2341
      %v2382 = vmul.f32 %v2056, %v2343
      %v2383 = vmul.f32 %v1985, %v2234
      %v2384 = vmul.f32 %v1987, %v2236
      %v2385 = vmul.f32 %v2058, %v2347
      %v2386 = vmul.f32 %v2060, %v2349
      %v2387 = vmul.f32 %v1991, %v2240
      %v2388 = vmul.f32 %v1993, %v2242
      %v2389 = vmul.f32 %v2064, %v2353
      %v2390 = vmul.f32 %v2066, %v2355
      %v2391 = vmul.f32 %v1995, %v2246
      %v2392 = vmul.f32 %v1997, %v2248
      %v2393 = vmul.f32 %v2068, %v2359
      %v2394 = vmul.f32 %v2070, %v2361
      %v2395 = vpack.c.bf16 %v2367, %v2363
      %v2396 = vpack.c.bf16 %v2368, %v2364
      %v2397 = vpack.c.bf16 %v2369, %v2365
      %v2398 = vpack.c.bf16 %v2370, %v2366
      %v2399 = vpack.c.bf16 %v2375, %v2371
      %v2400 = vpack.c.bf16 %v2376, %v2372
      %v2401 = vpack.c.bf16 %v2377, %v2373
      %v2402 = vpack.c.bf16 %v2378, %v2374
      %v2403 = vpack.c.bf16 %v2383, %v2379
      %v2404 = vpack.c.bf16 %v2384, %v2380
      %v2405 = vpack.c.bf16 %v2385, %v2381
      %v2406 = vpack.c.bf16 %v2386, %v2382
      %v2407 = vpack.c.bf16 %v2391, %v2387
      %v2408 = vpack.c.bf16 %v2392, %v2388
      %v2409 = vpack.c.bf16 %v2393, %v2389
      %v2410 = vpack.c.bf16 %v2394, %v2390
      %v2411 = vld [vmem:[%s9 + $0x4] sm:$0xf]
      %v2412 = vld [vmem:[%s9 + $0xc] sm:$0xf]
      %v2413 = vld [vmem:[%s9 + $0x14] sm:$0xf]
      %v2414 = vld [vmem:[%s9 + $0x1c] sm:$0xf]
      %v2415 = vld [vmem:[%s9 + $0x24] sm:$0xf]
      %v2416 = vld [vmem:[%s9 + $0x2c] sm:$0xf]
      %v2417 = vld [vmem:[%s9 + $0x34] sm:$0xf]
      %v2418 = vld [vmem:[%s9 + $0x3c] sm:$0xf]
      %v2419 = vld [vmem:[%s9 + $0x44] sm:$0xf]
      %v2420 = vld [vmem:[%s9 + $0x4c] sm:$0xf]
      %v2421 = vld [vmem:[%s9 + $0x54] sm:$0xf]
      %v2422 = vld [vmem:[%s9 + $0x5c] sm:$0xf]
      %v2423 = vld [vmem:[%s9 + $0x64] sm:$0xf]
      %v2424 = vld [vmem:[%s9 + $0x6c] sm:$0xf]
      %v2425 = vld [vmem:[%s9 + $0x74] sm:$0xf]
      %v2426 = vld [vmem:[%s9 + $0x7c] sm:$0xf]
      %v2427 = vld [vmem:[%s9 + $0x84] sm:$0xf]
      %v2428 = vld [vmem:[%s9 + $0x8c] sm:$0xf]
      %v2429 = vld [vmem:[%s9 + $0x94] sm:$0xf]
      %v2430 = vld [vmem:[%s9 + $0x9c] sm:$0xf]
      %v2431 = vld [vmem:[%s9 + $0xa4] sm:$0xf]
      %v2432 = vld [vmem:[%s9 + $0xac] sm:$0xf]
      %v2433 = vld [vmem:[%s9 + $0xb4] sm:$0xf]
      %v2434 = vld [vmem:[%s9 + $0xbc] sm:$0xf]
      %v2435 = vld [vmem:[%s9 + $0xc4] sm:$0xf]
      %v2436 = vld [vmem:[%s9 + $0xcc] sm:$0xf]
      %v2437 = vld [vmem:[%s9 + $0xd4] sm:$0xf]
      %v2438 = vld [vmem:[%s9 + $0xdc] sm:$0xf]
      %v2439 = vld [vmem:[%s9 + $0xe4] sm:$0xf]
      %v2440 = vld [vmem:[%s9 + $0xec] sm:$0xf]
      %v2441 = vld [vmem:[%s9 + $0xf4] sm:$0xf]
      %v2442 = vld [vmem:[%s9 + $0xfc] sm:$0xf]
      %v2443 = vld [vmem:[%s9 + $0x104] sm:$0xf]
      %v2444 = vld [vmem:[%s9 + $0x10c] sm:$0xf]
      %v2445 = vld [vmem:[%s9 + $0x114] sm:$0xf]
      %v2446 = vld [vmem:[%s9 + $0x11c] sm:$0xf]
      %v2447 = vld [vmem:[%s9 + $0x124] sm:$0xf]
      %v2448 = vld [vmem:[%s9 + $0x12c] sm:$0xf]
      %v2449 = vld [vmem:[%s9 + $0x134] sm:$0xf]
      %v2450 = vld [vmem:[%s9 + $0x13c] sm:$0xf]
      %v2451 = vld [vmem:[%s9 + $0x144] sm:$0xf]
      %v2452 = vld [vmem:[%s9 + $0x14c] sm:$0xf]
      %v2453 = vld [vmem:[%s9 + $0x154] sm:$0xf]
      %v2454 = vld [vmem:[%s9 + $0x15c] sm:$0xf]
      %v2455 = vld [vmem:[%s9 + $0x164] sm:$0xf]
      %v2456 = vld [vmem:[%s9 + $0x16c] sm:$0xf]
      %v2457 = vld [vmem:[%s9 + $0x174] sm:$0xf]
      %v2458 = vld [vmem:[%s9 + $0x17c] sm:$0xf]
      %v2459 = vld [vmem:[%s9 + $0x184] sm:$0xf]
      %v2460 = vld [vmem:[%s9 + $0x18c] sm:$0xf]
      %v2461 = vld [vmem:[%s9 + $0x194] sm:$0xf]
      %v2462 = vld [vmem:[%s9 + $0x19c] sm:$0xf]
      %v2463 = vld [vmem:[%s9 + $0x1a4] sm:$0xf]
      %v2464 = vld [vmem:[%s9 + $0x1ac] sm:$0xf]
      %v2465 = vld [vmem:[%s9 + $0x1b4] sm:$0xf]
      %v2466 = vld [vmem:[%s9 + $0x1bc] sm:$0xf]
      %v2467 = vld [vmem:[%s9 + $0x1c4] sm:$0xf]
      %v2468 = vld [vmem:[%s9 + $0x1cc] sm:$0xf]
      %v2469 = vld [vmem:[%s9 + $0x1d4] sm:$0xf]
      %v2470 = vld [vmem:[%s9 + $0x1dc] sm:$0xf]
      %v2471 = vld [vmem:[%s9 + $0x1e4] sm:$0xf]
      %v2472 = vld [vmem:[%s9 + $0x1ec] sm:$0xf]
      %v2473 = vld [vmem:[%s9 + $0x1f4] sm:$0xf]
      %v2474 = vld [vmem:[%s9 + $0x1fc] sm:$0xf]
      %v2539 = vunpack.c.l.b16 %v2411
      %v2540 = vunpack.c.l.b16 %v2412
      %v2541 = vunpack.c.l.b16 %v2413
      %v2542 = vunpack.c.l.b16 %v2414
      %v2543 = vunpack.c.l.b16 %v2415
      %v2544 = vunpack.c.l.b16 %v2416
      %v2545 = vunpack.c.l.b16 %v2417
      %v2546 = vunpack.c.l.b16 %v2418
      %v2547 = vunpack.c.l.b16 %v2419
      %v2548 = vunpack.c.l.b16 %v2420
      %v2549 = vunpack.c.l.b16 %v2421
      %v2550 = vunpack.c.l.b16 %v2422
      %v2551 = vunpack.c.l.b16 %v2423
      %v2552 = vunpack.c.l.b16 %v2424
      %v2553 = vunpack.c.l.b16 %v2425
      %v2554 = vunpack.c.l.b16 %v2426
      %v2555 = vunpack.c.l.b16 %v2427
      %v2556 = vunpack.c.l.b16 %v2428
      %v2557 = vunpack.c.l.b16 %v2429
      %v2558 = vunpack.c.l.b16 %v2430
      %v2559 = vunpack.c.l.b16 %v2431
      %v2560 = vunpack.c.l.b16 %v2432
      %v2561 = vunpack.c.l.b16 %v2433
      %v2562 = vunpack.c.l.b16 %v2434
      %v2563 = vunpack.c.l.b16 %v2435
      %v2564 = vunpack.c.l.b16 %v2436
      %v2565 = vunpack.c.l.b16 %v2437
      %v2566 = vunpack.c.l.b16 %v2438
      %v2567 = vunpack.c.l.b16 %v2439
      %v2568 = vunpack.c.l.b16 %v2440
      %v2569 = vunpack.c.l.b16 %v2441
      %v2570 = vunpack.c.l.b16 %v2442
      %v2571 = vunpack.c.l.b16 %v2443
      %v2572 = vunpack.c.l.b16 %v2444
      %v2573 = vunpack.c.l.b16 %v2445
      %v2574 = vunpack.c.l.b16 %v2446
      %v2575 = vunpack.c.l.b16 %v2447
      %v2576 = vunpack.c.l.b16 %v2448
      %v2577 = vunpack.c.l.b16 %v2449
      %v2578 = vunpack.c.l.b16 %v2450
      %v2579 = vunpack.c.l.b16 %v2451
      %v2580 = vunpack.c.l.b16 %v2452
      %v2581 = vunpack.c.l.b16 %v2453
      %v2582 = vunpack.c.l.b16 %v2454
      %v2583 = vunpack.c.l.b16 %v2455
      %v2584 = vunpack.c.l.b16 %v2456
      %v2585 = vunpack.c.l.b16 %v2457
      %v2586 = vunpack.c.l.b16 %v2458
      %v2587 = vunpack.c.l.b16 %v2459
      %v2588 = vunpack.c.l.b16 %v2460
      %v2589 = vunpack.c.l.b16 %v2461
      %v2590 = vunpack.c.l.b16 %v2462
      %v2591 = vunpack.c.l.b16 %v2463
      %v2592 = vunpack.c.l.b16 %v2464
      %v2593 = vunpack.c.l.b16 %v2465
      %v2594 = vunpack.c.l.b16 %v2466
      %v2595 = vunpack.c.l.b16 %v2467
      %v2596 = vunpack.c.l.b16 %v2468
      %v2597 = vunpack.c.l.b16 %v2469
      %v2598 = vunpack.c.l.b16 %v2470
      %v2599 = vunpack.c.l.b16 %v2471
      %v2600 = vunpack.c.l.b16 %v2472
      %v2601 = vunpack.c.l.b16 %v2473
      %v2602 = vunpack.c.l.b16 %v2474
      %v2603 = vpack.c.b16 %v2540, %v2539
      %v2604 = vpack.c.b16 %v2542, %v2541
      %v2605 = vpack.c.b16 %v2544, %v2543
      %v2606 = vpack.c.b16 %v2546, %v2545
      %v2607 = vpack.c.b16 %v2548, %v2547
      %v2608 = vpack.c.b16 %v2550, %v2549
      %v2609 = vpack.c.b16 %v2552, %v2551
      %v2610 = vpack.c.b16 %v2554, %v2553
      %v2611 = vpack.c.b16 %v2556, %v2555
      %v2612 = vpack.c.b16 %v2558, %v2557
      %v2613 = vpack.c.b16 %v2560, %v2559
      %v2614 = vpack.c.b16 %v2562, %v2561
      %v2615 = vpack.c.b16 %v2564, %v2563
      %v2616 = vpack.c.b16 %v2566, %v2565
      %v2617 = vpack.c.b16 %v2568, %v2567
      %v2618 = vpack.c.b16 %v2570, %v2569
      %v2619 = vpack.c.b16 %v2572, %v2571
      %v2620 = vpack.c.b16 %v2574, %v2573
      %v2621 = vpack.c.b16 %v2576, %v2575
      %v2622 = vpack.c.b16 %v2578, %v2577
      %v2623 = vpack.c.b16 %v2580, %v2579
      %v2624 = vpack.c.b16 %v2582, %v2581
      %v2625 = vpack.c.b16 %v2584, %v2583
      %v2626 = vpack.c.b16 %v2586, %v2585
      %v2627 = vpack.c.b16 %v2588, %v2587
      %v2628 = vpack.c.b16 %v2590, %v2589
      %v2629 = vpack.c.b16 %v2592, %v2591
      %v2630 = vpack.c.b16 %v2594, %v2593
      %v2631 = vpack.c.b16 %v2596, %v2595
      %v2632 = vpack.c.b16 %v2598, %v2597
      %v2633 = vpack.c.b16 %v2600, %v2599
      %v2634 = vpack.c.b16 %v2602, %v2601
      %2667 = vmatprep.subr.bf16.mxu0 0
      %2668 = vmatpush1.bf16.msra.mxu0 %v2610
      %2669 = vmatprep.subr.bf16.mxu0 0
      %2670 = vmatpush1.bf16.msra.mxu0 %v2609
      %2671 = vmatprep.subr.bf16.mxu0 0
      %2672 = vmatpush1.bf16.msra.mxu0 %v2608
      %2673 = vmatprep.subr.bf16.mxu0 0
      %2674 = vmatpush1.bf16.msra.mxu0 %v2607
      %2675 = vmatprep.subr.bf16.mxu0 0
      %2676 = vmatpush1.bf16.msra.mxu0 %v2606
      %2677 = vmatprep.subr.bf16.mxu0 0
      %2678 = vmatpush1.bf16.msra.mxu0 %v2605
      %2679 = vmatprep.subr.bf16.mxu0 0
      %2680 = vmatpush1.bf16.msra.mxu0 %v2604
      %2681 = vmatprep.subr.bf16.mxu0 0
      %2682 = vmatpush1.bf16.msra.mxu0 %v2603
      %2683 = vmatprep.subr.bf16.mxu0 0
      %2684 = vmatpush2.bf16.msra.mxu0 %v2618
      %2685 = vmatprep.subr.bf16.mxu0 0
      %2686 = vmatpush2.bf16.msra.mxu0 %v2617
      %2687 = vmatprep.subr.bf16.mxu0 0
      %2688 = vmatpush2.bf16.msra.mxu0 %v2616
      %2689 = vmatprep.subr.bf16.mxu0 0
      %2690 = vmatpush2.bf16.msra.mxu0 %v2615
      %2691 = vmatprep.subr.bf16.mxu0 0
      %2692 = vmatpush2.bf16.msra.mxu0 %v2614
      %2693 = vmatprep.subr.bf16.mxu0 0
      %2694 = vmatpush2.bf16.msra.mxu0 %v2613
      %2695 = vmatprep.subr.bf16.mxu0 0
      %2696 = vmatpush2.bf16.msra.mxu0 %v2612
      %2697 = vmatprep.subr.bf16.mxu0 0
      %2698 = vmatpush2.bf16.msra.mxu0 %v2611
      %2699 = vmatprep.mubr.bf16.mxu0 %v2396
      %2700 = vmatmul.mubr.bf16.gmra.mxu0 %v2395
      %v2701 = vpop.f32.mrf.mxu0
      %v2702 = vadd.f32 0.0, %v2701
      %v2703 = vpop.f32.mrf.mxu0
      %v2704 = vpop.f32.mrf.mxu0
      %v2705 = vadd.f32 0.0, %v2704
      %v2706 = vpop.f32.mrf.mxu0
      %2707 = vmatprep.mubr.bf16.mxu0 %v2400
      %2708 = vmatmul.mubr.bf16.gmra.mxu0 %v2399
      %v2709 = vpop.f32.mrf.mxu0
      %v2710 = vadd.f32 0.0, %v2709
      %v2711 = vpop.f32.mrf.mxu0
      %v2712 = vpop.f32.mrf.mxu0
      %v2713 = vadd.f32 0.0, %v2712
      %v2714 = vpop.f32.mrf.mxu0
      %2715 = vmatprep.mubr.bf16.mxu0 %v2404
      %2716 = vmatmul.mubr.bf16.gmra.mxu0 %v2403
      %v2717 = vpop.f32.mrf.mxu0
      %v2718 = vadd.f32 0.0, %v2717
      %v2719 = vpop.f32.mrf.mxu0
      %v2720 = vpop.f32.mrf.mxu0
      %v2721 = vadd.f32 0.0, %v2720
      %v2722 = vpop.f32.mrf.mxu0
      %2723 = vmatprep.mubr.bf16.mxu0 %v2408
      %2724 = vmatmul.mubr.bf16.gmra.mxu0 %v2407
      %v2725 = vpop.f32.mrf.mxu0
      %v2726 = vadd.f32 0.0, %v2725
      %v2727 = vpop.f32.mrf.mxu0
      %v2728 = vpop.f32.mrf.mxu0
      %v2729 = vadd.f32 0.0, %v2728
      %v2730 = vpop.f32.mrf.mxu0
      %2731 = vdwg.mxu0
      %2732 = vmatprep.subr.bf16.mxu0 0
      %2733 = vmatpush1.bf16.msra.mxu0 %v2626
      %2734 = vmatprep.subr.bf16.mxu0 0
      %2735 = vmatpush1.bf16.msra.mxu0 %v2625
      %2736 = vmatprep.subr.bf16.mxu0 0
      %2737 = vmatpush1.bf16.msra.mxu0 %v2624
      %2738 = vmatprep.subr.bf16.mxu0 0
      %2739 = vmatpush1.bf16.msra.mxu0 %v2623
      %2740 = vmatprep.subr.bf16.mxu0 0
      %2741 = vmatpush1.bf16.msra.mxu0 %v2622
      %2742 = vmatprep.subr.bf16.mxu0 0
      %2743 = vmatpush1.bf16.msra.mxu0 %v2621
      %2744 = vmatprep.subr.bf16.mxu0 0
      %2745 = vmatpush1.bf16.msra.mxu0 %v2620
      %2746 = vmatprep.subr.bf16.mxu0 0
      %2747 = vmatpush1.bf16.msra.mxu0 %v2619
      %2748 = vmatprep.subr.bf16.mxu0 0
      %2749 = vmatpush2.bf16.msra.mxu0 %v2634
      %2750 = vmatprep.subr.bf16.mxu0 0
      %2751 = vmatpush2.bf16.msra.mxu0 %v2633
      %2752 = vmatprep.subr.bf16.mxu0 0
      %2753 = vmatpush2.bf16.msra.mxu0 %v2632
      %2754 = vmatprep.subr.bf16.mxu0 0
      %2755 = vmatpush2.bf16.msra.mxu0 %v2631
      %2756 = vmatprep.subr.bf16.mxu0 0
      %2757 = vmatpush2.bf16.msra.mxu0 %v2630
      %2758 = vmatprep.subr.bf16.mxu0 0
      %2759 = vmatpush2.bf16.msra.mxu0 %v2629
      %2760 = vmatprep.subr.bf16.mxu0 0
      %2761 = vmatpush2.bf16.msra.mxu0 %v2628
      %2762 = vmatprep.subr.bf16.mxu0 0
      %2763 = vmatpush2.bf16.msra.mxu0 %v2627
      %2764 = vmatprep.mubr.bf16.mxu0 %v2398
      %2765 = vmatmul.mubr.bf16.gmra.mxu0 %v2397
      %v2766 = vpop.f32.mrf.mxu0
      %v2767 = vadd.f32 %v2702, %v2766
      %v2768 = vpop.f32.mrf.mxu0
      %v2769 = vpop.f32.mrf.mxu0
      %v2770 = vadd.f32 %v2705, %v2769
      %v2771 = vpop.f32.mrf.mxu0
      %2772 = vmatprep.mubr.bf16.mxu0 %v2402
      %2773 = vmatmul.mubr.bf16.gmra.mxu0 %v2401
      %v2774 = vpop.f32.mrf.mxu0
      %v2775 = vadd.f32 %v2710, %v2774
      %v2776 = vpop.f32.mrf.mxu0
      %v2777 = vpop.f32.mrf.mxu0
      %v2778 = vadd.f32 %v2713, %v2777
      %v2779 = vpop.f32.mrf.mxu0
      %2780 = vmatprep.mubr.bf16.mxu0 %v2406
      %2781 = vmatmul.mubr.bf16.gmra.mxu0 %v2405
      %v2782 = vpop.f32.mrf.mxu0
      %v2783 = vadd.f32 %v2718, %v2782
      %v2784 = vpop.f32.mrf.mxu0
      %v2785 = vpop.f32.mrf.mxu0
      %v2786 = vadd.f32 %v2721, %v2785
      %v2787 = vpop.f32.mrf.mxu0
      %2788 = vmatprep.mubr.bf16.mxu0 %v2410
      %2789 = vmatmul.mubr.bf16.gmra.mxu0 %v2409
      %v2790 = vpop.f32.mrf.mxu0
      %v2791 = vadd.f32 %v2726, %v2790
      %v2792 = vpop.f32.mrf.mxu0
      %v2793 = vpop.f32.mrf.mxu0
      %v2794 = vadd.f32 %v2729, %v2793
      %v2795 = vpop.f32.mrf.mxu0
      %2796 = vdwg.mxu0
      %v2797 = vmax.f32 %v2107, 1e-30
      %v2798 = vmax.f32 %v2110, 1e-30
      %v2799 = vmax.f32 %v2115, 1e-30
      %v2800 = vmax.f32 %v2118, 1e-30
      %v2801 = vmax.f32 %v2123, 1e-30
      %v2802 = vmax.f32 %v2126, 1e-30
      %v2803 = vmax.f32 %v2131, 1e-30
      %v2804 = vmax.f32 %v2134, 1e-30
      %v2805 = vrcp.pop %v2797
      %v2806 = vrcp.pop %v2798
      %v2807 = vrcp.pop %v2799
      %v2808 = vrcp.pop %v2800
      %v2809 = vrcp.pop %v2801
      %v2810 = vrcp.pop %v2802
      %v2811 = vrcp.pop %v2803
      %v2812 = vrcp.pop %v2804
      %v2813 = vmul.f32 %v2767, %v2805
      %v2814 = vmul.f32 %v2770, %v2806
      %v2815 = vmul.f32 %v2775, %v2807
      %v2816 = vmul.f32 %v2778, %v2808
      %v2817 = vmul.f32 %v2783, %v2809
      %v2818 = vmul.f32 %v2786, %v2810
      %v2819 = vmul.f32 %v2791, %v2811
      %v2820 = vmul.f32 %v2794, %v2812
      %v2821 = vld [vmem:[%s4 + $0x20] sm:$0xff]
      %v2822 = vld [vmem:[%s4 + $0x50] sm:$0xff]
      %v2823 = vld [vmem:[%s4 + $0x80] sm:$0xff]
      %v2824 = vld [vmem:[%s4 + $0xb0] sm:$0xff]
      %v2826 = vsel %vm520, %v2813, 0
      %v2829 = vsel %vm520, %v2814, 0
      %v2832 = vsel %vm520, %v2815, 0
      %v2835 = vsel %vm520, %v2816, 0
      %v2838 = vsel %vm520, %v2817, 0
      %v2841 = vsel %vm520, %v2818, 0
      %v2844 = vsel %vm520, %v2819, 0
      %v2847 = vsel %vm520, %v2820, 0
      %2849 = vmatprep.subr.mxu0 0.0
      %2850 = vmatpush1.msra.mxu0 0.0
      %2851 = vmatprep.subr.mxu0 0.0
      %2852 = vmatpush1.msra.mxu0 0.0
      %2853 = vmatprep.subr.mxu0 0.0
      %2854 = vmatpush1.msra.mxu0 0.0
      %2855 = vmatprep.subr.mxu0 0.0
      %2856 = vmatpush1.msra.mxu0 0.0
      %2857 = vmatprep.subr.mxu0 0.0
      %2858 = vmatpush1.msra.mxu0 0.0
      %2859 = vmatprep.subr.mxu0 0.0
      %2860 = vmatpush1.msra.mxu0 0.0
      %2861 = vmatprep.subr.mxu0 0.0
      %2862 = vmatpush1.msra.mxu0 0.0
      %2863 = vmatprep.subr.mxu0 0.0
      %2864 = vmatpush1.msra.mxu0 0.0
      %2865 = vmatprep.subr.mxu0 0.0
      %2866 = vmatpush1.msra.mxu0 0.0
      %2867 = vmatprep.subr.mxu0 0.0
      %2868 = vmatpush1.msra.mxu0 0.0
      %2869 = vmatprep.subr.mxu0 0.0
      %2870 = vmatpush1.msra.mxu0 0.0
      %2871 = vmatprep.subr.mxu0 0.0
      %2872 = vmatpush1.msra.mxu0 0.0
      %2873 = vmatprep.subr.mxu0 0.0
      %2874 = vmatpush1.msra.mxu0 %v2824
      %2875 = vmatprep.subr.mxu0 0.0
      %2876 = vmatpush1.msra.mxu0 %v2823
      %2877 = vmatprep.subr.mxu0 0.0
      %2878 = vmatpush1.msra.mxu0 %v2822
      %2879 = vmatprep.subr.mxu0 0.0
      %2880 = vmatpush1.msra.mxu0 %v2821
      %2881 = vmatprep.subr.mxu0 0.0
      %2882 = vmatpush2.msra.mxu0 0.0
      %2883 = vmatprep.subr.mxu0 0.0
      %2884 = vmatpush2.msra.mxu0 0.0
      %2885 = vmatprep.subr.mxu0 0.0
      %2886 = vmatpush2.msra.mxu0 0.0
      %2887 = vmatprep.subr.mxu0 0.0
      %2888 = vmatpush2.msra.mxu0 0.0
      %2889 = vmatprep.subr.mxu0 0.0
      %2890 = vmatpush2.msra.mxu0 0.0
      %2891 = vmatprep.subr.mxu0 0.0
      %2892 = vmatpush2.msra.mxu0 0.0
      %2893 = vmatprep.subr.mxu0 0.0
      %2894 = vmatpush2.msra.mxu0 0.0
      %2895 = vmatprep.subr.mxu0 0.0
      %2896 = vmatpush2.msra.mxu0 0.0
      %2897 = vmatprep.subr.mxu0 0.0
      %2898 = vmatpush2.msra.mxu0 0.0
      %2899 = vmatprep.subr.mxu0 0.0
      %2900 = vmatpush2.msra.mxu0 0.0
      %2901 = vmatprep.subr.mxu0 0.0
      %2902 = vmatpush2.msra.mxu0 0.0
      %2903 = vmatprep.subr.mxu0 0.0
      %2904 = vmatpush2.msra.mxu0 0.0
      %2905 = vmatprep.subr.mxu0 0.0
      %2906 = vmatpush2.msra.mxu0 0.0
      %2907 = vmatprep.subr.mxu0 0.0
      %2908 = vmatpush2.msra.mxu0 0.0
      %2909 = vmatprep.subr.mxu0 0.0
      %2910 = vmatpush2.msra.mxu0 0.0
      %2911 = vmatprep.subr.mxu0 0.0
      %2912 = vmatpush2.msra.mxu0 0.0
      %2913 = vmatprep.mubr.f32.mxu0 0.0
      %2914 = vmatmul.mubr.f32.gmra.mxu0 %v2826
      %v2915 = vpop.f32.mrf.mxu0
      %v2916 = vadd.f32 0.0, %v2915
      %v2917 = vpop.f32.mrf.mxu0
      %2918 = vmatprep.mubr.f32.mxu0 0.0
      %2919 = vmatmul.mubr.f32.gmra.mxu0 %v2829
      %v2920 = vpop.f32.mrf.mxu0
      %v2921 = vadd.f32 0.0, %v2920
      %v2922 = vpop.f32.mrf.mxu0
      %2923 = vmatprep.mubr.f32.mxu0 0.0
      %2924 = vmatmul.mubr.f32.gmra.mxu0 %v2832
      %v2925 = vpop.f32.mrf.mxu0
      %v2926 = vadd.f32 0.0, %v2925
      %v2927 = vpop.f32.mrf.mxu0
      %2928 = vmatprep.mubr.f32.mxu0 0.0
      %2929 = vmatmul.mubr.f32.gmra.mxu0 %v2835
      %v2930 = vpop.f32.mrf.mxu0
      %v2931 = vadd.f32 0.0, %v2930
      %v2932 = vpop.f32.mrf.mxu0
      %2933 = vmatprep.mubr.f32.mxu0 0.0
      %2934 = vmatmul.mubr.f32.gmra.mxu0 %v2838
      %v2935 = vpop.f32.mrf.mxu0
      %v2936 = vadd.f32 0.0, %v2935
      %v2937 = vpop.f32.mrf.mxu0
      %2938 = vmatprep.mubr.f32.mxu0 0.0
      %2939 = vmatmul.mubr.f32.gmra.mxu0 %v2841
      %v2940 = vpop.f32.mrf.mxu0
      %v2941 = vadd.f32 0.0, %v2940
      %v2942 = vpop.f32.mrf.mxu0
      %2943 = vmatprep.mubr.f32.mxu0 0.0
      %2944 = vmatmul.mubr.f32.gmra.mxu0 %v2844
      %v2945 = vpop.f32.mrf.mxu0
      %v2946 = vadd.f32 0.0, %v2945
      %v2947 = vpop.f32.mrf.mxu0
      %2948 = vmatprep.mubr.f32.mxu0 0.0
      %2949 = vmatmul.mubr.f32.gmra.mxu0 %v2847
      %v2950 = vpop.f32.mrf.mxu0
      %v2951 = vadd.f32 0.0, %v2950
      %v2952 = vpop.f32.mrf.mxu0
      %2953 = vdwg.mxu0
      %v2954 = vadd.f32 %v458, %v2916
      %v2955 = vadd.f32 %v459, %v2921
      %v2956 = vadd.f32 %v460, %v2926
      %v2957 = vadd.f32 %v461, %v2931
      %v2958 = vadd.f32 %v462, %v2936
      %v2959 = vadd.f32 %v463, %v2941
      %v2960 = vadd.f32 %v464, %v2946
      %v2961 = vadd.f32 %v465, %v2951
      %v2962 = vld [vmem:[%s6 + $0x1] ss:$0 sm:$0xff]
      %v2963 = vadd.f32 %v2954, %v2962
      %v2964 = vadd.f32 %v2955, %v2962
      %v2965 = vadd.f32 %v2956, %v2962
      %v2966 = vadd.f32 %v2957, %v2962
      %v2967 = vadd.f32 %v2958, %v2962
      %v2968 = vadd.f32 %v2959, %v2962
      %v2969 = vadd.f32 %v2960, %v2962
      %v2970 = vadd.f32 %v2961, %v2962
      %v2971 = vld [vmem:[%s6 + $0x2] ss:$0 sm:$0xff]
      %v2972 = vld [vmem:[%s6 + $0x3] ss:$0 sm:$0xff]
      %v2973 = vsel %vm520, %v2963, 0.0
      %2974 = vadd.xlane.f32.xlu0 %v2973
      %v2975 = vpop.xlane.xlu0 %2974
      %v2976 = vsel %vm520, %v2964, 0.0
      %2977 = vadd.xlane.f32.xlu0 %v2976
      %v2978 = vpop.xlane.xlu0 %2977
      %v2979 = vsel %vm520, %v2965, 0.0
      %2980 = vadd.xlane.f32.xlu0 %v2979
      %v2981 = vpop.xlane.xlu0 %2980
      %v2982 = vsel %vm520, %v2966, 0.0
      %2983 = vadd.xlane.f32.xlu0 %v2982
      %v2984 = vpop.xlane.xlu0 %2983
      %v2985 = vsel %vm520, %v2967, 0.0
      %2986 = vadd.xlane.f32.xlu0 %v2985
      %v2987 = vpop.xlane.xlu0 %2986
      %v2988 = vsel %vm520, %v2968, 0.0
      %2989 = vadd.xlane.f32.xlu0 %v2988
      %v2990 = vpop.xlane.xlu0 %2989
      %v2991 = vsel %vm520, %v2969, 0.0
      %2992 = vadd.xlane.f32.xlu0 %v2991
      %v2993 = vpop.xlane.xlu0 %2992
      %v2994 = vsel %vm520, %v2970, 0.0
      %2995 = vadd.xlane.f32.xlu0 %v2994
      %v2996 = vpop.xlane.xlu0 %2995
      %v2997 = vrcp.pop 32.0
      %v2998 = vmul.f32 %v2975, %v2997
      %v2999 = vmul.f32 %v2978, %v2997
      %v3000 = vmul.f32 %v2981, %v2997
      %v3001 = vmul.f32 %v2984, %v2997
      %v3002 = vmul.f32 %v2987, %v2997
      %v3003 = vmul.f32 %v2990, %v2997
      %v3004 = vmul.f32 %v2993, %v2997
      %v3005 = vmul.f32 %v2996, %v2997
      %v3006 = vsub.f32 %v2963, %v2998
      %v3007 = vsub.f32 %v2964, %v2999
      %v3008 = vsub.f32 %v2965, %v3000
      %v3009 = vsub.f32 %v2966, %v3001
      %v3010 = vsub.f32 %v2967, %v3002
      %v3011 = vsub.f32 %v2968, %v3003
      %v3012 = vsub.f32 %v2969, %v3004
      %v3013 = vsub.f32 %v2970, %v3005
      %v3014 = vmul.f32 %v3006, %v3006
      %v3015 = vmul.f32 %v3007, %v3007
      %v3016 = vmul.f32 %v3008, %v3008
      %v3017 = vmul.f32 %v3009, %v3009
      %v3018 = vmul.f32 %v3010, %v3010
      %v3019 = vmul.f32 %v3011, %v3011
      %v3020 = vmul.f32 %v3012, %v3012
      %v3021 = vmul.f32 %v3013, %v3013
      %v3022 = vsel %vm520, %v3014, 0.0
      %3023 = vadd.xlane.f32.xlu0 %v3022
      %v3024 = vpop.xlane.xlu0 %3023
      %v3025 = vsel %vm520, %v3015, 0.0
      %3026 = vadd.xlane.f32.xlu0 %v3025
      %v3027 = vpop.xlane.xlu0 %3026
      %v3028 = vsel %vm520, %v3016, 0.0
      %3029 = vadd.xlane.f32.xlu0 %v3028
      %v3030 = vpop.xlane.xlu0 %3029
      %v3031 = vsel %vm520, %v3017, 0.0
      %3032 = vadd.xlane.f32.xlu0 %v3031
      %v3033 = vpop.xlane.xlu0 %3032
      %v3034 = vsel %vm520, %v3018, 0.0
      %3035 = vadd.xlane.f32.xlu0 %v3034
      %v3036 = vpop.xlane.xlu0 %3035
      %v3037 = vsel %vm520, %v3019, 0.0
      %3038 = vadd.xlane.f32.xlu0 %v3037
      %v3039 = vpop.xlane.xlu0 %3038
      %v3040 = vsel %vm520, %v3020, 0.0
      %3041 = vadd.xlane.f32.xlu0 %v3040
      %v3042 = vpop.xlane.xlu0 %3041
      %v3043 = vsel %vm520, %v3021, 0.0
      %3044 = vadd.xlane.f32.xlu0 %v3043
      %v3045 = vpop.xlane.xlu0 %3044
      %v3046 = vmul.f32 %v3024, %v2997
      %v3047 = vmul.f32 %v3027, %v2997
      %v3048 = vmul.f32 %v3030, %v2997
      %v3049 = vmul.f32 %v3033, %v2997
      %v3050 = vmul.f32 %v3036, %v2997
      %v3051 = vmul.f32 %v3039, %v2997
      %v3052 = vmul.f32 %v3042, %v2997
      %v3053 = vmul.f32 %v3045, %v2997
      %v3054 = vadd.f32 %v3046, 1e-05
      %v3055 = vadd.f32 %v3047, 1e-05
      %v3056 = vadd.f32 %v3048, 1e-05
      %v3057 = vadd.f32 %v3049, 1e-05
      %v3058 = vadd.f32 %v3050, 1e-05
      %v3059 = vadd.f32 %v3051, 1e-05
      %v3060 = vadd.f32 %v3052, 1e-05
      %v3061 = vadd.f32 %v3053, 1e-05
      %v3062 = vrsqrt.pop %v3054
      %v3063 = vrsqrt.pop %v3055
      %v3064 = vrsqrt.pop %v3056
      %v3065 = vrsqrt.pop %v3057
      %v3066 = vrsqrt.pop %v3058
      %v3067 = vrsqrt.pop %v3059
      %v3068 = vrsqrt.pop %v3060
      %v3069 = vrsqrt.pop %v3061
      %v3070 = vmul.f32 %v3006, %v3062
      %v3071 = vmul.f32 %v3007, %v3063
      %v3072 = vmul.f32 %v3008, %v3064
      %v3073 = vmul.f32 %v3009, %v3065
      %v3074 = vmul.f32 %v3010, %v3066
      %v3075 = vmul.f32 %v3011, %v3067
      %v3076 = vmul.f32 %v3012, %v3068
      %v3077 = vmul.f32 %v3013, %v3069
      %v3078 = vmul.f32 %v3070, %v2971
      %v3079 = vmul.f32 %v3071, %v2971
      %v3080 = vmul.f32 %v3072, %v2971
      %v3081 = vmul.f32 %v3073, %v2971
      %v3082 = vmul.f32 %v3074, %v2971
      %v3083 = vmul.f32 %v3075, %v2971
      %v3084 = vmul.f32 %v3076, %v2971
      %v3085 = vmul.f32 %v3077, %v2971
      %v3086 = vadd.f32 %v3078, %v2972
      %v3087 = vadd.f32 %v3079, %v2972
      %v3088 = vadd.f32 %v3080, %v2972
      %v3089 = vadd.f32 %v3081, %v2972
      %v3090 = vadd.f32 %v3082, %v2972
      %v3091 = vadd.f32 %v3083, %v2972
      %v3092 = vadd.f32 %v3084, %v2972
      %v3093 = vadd.f32 %v3085, %v2972
      %v3094 = vld [vmem:[%s4 + $0x28] sm:$0xff]
      %v3095 = vld [vmem:[%s4 + $0x58] sm:$0xff]
      %v3096 = vld [vmem:[%s4 + $0x88] sm:$0xff]
      %v3097 = vld [vmem:[%s4 + $0xb8] sm:$0xff]
      %v3098 = vld [vmem:[%s6 + $0x4] ss:$0 sm:$0xff]
      %v3100 = vsel %vm520, %v3086, 0
      %v3103 = vsel %vm520, %v3087, 0
      %v3106 = vsel %vm520, %v3088, 0
      %v3109 = vsel %vm520, %v3089, 0
      %v3112 = vsel %vm520, %v3090, 0
      %v3115 = vsel %vm520, %v3091, 0
      %v3118 = vsel %vm520, %v3092, 0
      %v3121 = vsel %vm520, %v3093, 0
      %3123 = vmatprep.subr.mxu0 0.0
      %3124 = vmatpush1.msra.mxu0 0.0
      %3125 = vmatprep.subr.mxu0 0.0
      %3126 = vmatpush1.msra.mxu0 0.0
      %3127 = vmatprep.subr.mxu0 0.0
      %3128 = vmatpush1.msra.mxu0 0.0
      %3129 = vmatprep.subr.mxu0 0.0
      %3130 = vmatpush1.msra.mxu0 0.0
      %3131 = vmatprep.subr.mxu0 0.0
      %3132 = vmatpush1.msra.mxu0 0.0
      %3133 = vmatprep.subr.mxu0 0.0
      %3134 = vmatpush1.msra.mxu0 0.0
      %3135 = vmatprep.subr.mxu0 0.0
      %3136 = vmatpush1.msra.mxu0 0.0
      %3137 = vmatprep.subr.mxu0 0.0
      %3138 = vmatpush1.msra.mxu0 0.0
      %3139 = vmatprep.subr.mxu0 0.0
      %3140 = vmatpush1.msra.mxu0 0.0
      %3141 = vmatprep.subr.mxu0 0.0
      %3142 = vmatpush1.msra.mxu0 0.0
      %3143 = vmatprep.subr.mxu0 0.0
      %3144 = vmatpush1.msra.mxu0 0.0
      %3145 = vmatprep.subr.mxu0 0.0
      %3146 = vmatpush1.msra.mxu0 0.0
      %3147 = vmatprep.subr.mxu0 0.0
      %3148 = vmatpush1.msra.mxu0 %v3097
      %3149 = vmatprep.subr.mxu0 0.0
      %3150 = vmatpush1.msra.mxu0 %v3096
      %3151 = vmatprep.subr.mxu0 0.0
      %3152 = vmatpush1.msra.mxu0 %v3095
      %3153 = vmatprep.subr.mxu0 0.0
      %3154 = vmatpush1.msra.mxu0 %v3094
      %3155 = vmatprep.subr.mxu0 0.0
      %3156 = vmatpush2.msra.mxu0 0.0
      %3157 = vmatprep.subr.mxu0 0.0
      %3158 = vmatpush2.msra.mxu0 0.0
      %3159 = vmatprep.subr.mxu0 0.0
      %3160 = vmatpush2.msra.mxu0 0.0
      %3161 = vmatprep.subr.mxu0 0.0
      %3162 = vmatpush2.msra.mxu0 0.0
      %3163 = vmatprep.subr.mxu0 0.0
      %3164 = vmatpush2.msra.mxu0 0.0
      %3165 = vmatprep.subr.mxu0 0.0
      %3166 = vmatpush2.msra.mxu0 0.0
      %3167 = vmatprep.subr.mxu0 0.0
      %3168 = vmatpush2.msra.mxu0 0.0
      %3169 = vmatprep.subr.mxu0 0.0
      %3170 = vmatpush2.msra.mxu0 0.0
      %3171 = vmatprep.subr.mxu0 0.0
      %3172 = vmatpush2.msra.mxu0 0.0
      %3173 = vmatprep.subr.mxu0 0.0
      %3174 = vmatpush2.msra.mxu0 0.0
      %3175 = vmatprep.subr.mxu0 0.0
      %3176 = vmatpush2.msra.mxu0 0.0
      %3177 = vmatprep.subr.mxu0 0.0
      %3178 = vmatpush2.msra.mxu0 0.0
      %3179 = vmatprep.subr.mxu0 0.0
      %3180 = vmatpush2.msra.mxu0 0.0
      %3181 = vmatprep.subr.mxu0 0.0
      %3182 = vmatpush2.msra.mxu0 0.0
      %3183 = vmatprep.subr.mxu0 0.0
      %3184 = vmatpush2.msra.mxu0 0.0
      %3185 = vmatprep.subr.mxu0 0.0
      %3186 = vmatpush2.msra.mxu0 0.0
      %3187 = vmatprep.mubr.f32.mxu0 0.0
      %3188 = vmatmul.mubr.f32.gmra.mxu0 %v3100
      %v3189 = vpop.f32.mrf.mxu0
      %v3190 = vadd.f32 %v3098, %v3189
      %v3191 = vpop.f32.mrf.mxu0
      %3192 = vmatprep.mubr.f32.mxu0 0.0
      %3193 = vmatmul.mubr.f32.gmra.mxu0 %v3103
      %v3194 = vpop.f32.mrf.mxu0
      %v3195 = vadd.f32 %v3098, %v3194
      %v3196 = vpop.f32.mrf.mxu0
      %3197 = vmatprep.mubr.f32.mxu0 0.0
      %3198 = vmatmul.mubr.f32.gmra.mxu0 %v3106
      %v3199 = vpop.f32.mrf.mxu0
      %v3200 = vadd.f32 %v3098, %v3199
      %v3201 = vpop.f32.mrf.mxu0
      %3202 = vmatprep.mubr.f32.mxu0 0.0
      %3203 = vmatmul.mubr.f32.gmra.mxu0 %v3109
      %v3204 = vpop.f32.mrf.mxu0
      %v3205 = vadd.f32 %v3098, %v3204
      %v3206 = vpop.f32.mrf.mxu0
      %3207 = vmatprep.mubr.f32.mxu0 0.0
      %3208 = vmatmul.mubr.f32.gmra.mxu0 %v3112
      %v3209 = vpop.f32.mrf.mxu0
      %v3210 = vadd.f32 %v3098, %v3209
      %v3211 = vpop.f32.mrf.mxu0
      %3212 = vmatprep.mubr.f32.mxu0 0.0
      %3213 = vmatmul.mubr.f32.gmra.mxu0 %v3115
      %v3214 = vpop.f32.mrf.mxu0
      %v3215 = vadd.f32 %v3098, %v3214
      %v3216 = vpop.f32.mrf.mxu0
      %3217 = vmatprep.mubr.f32.mxu0 0.0
      %3218 = vmatmul.mubr.f32.gmra.mxu0 %v3118
      %v3219 = vpop.f32.mrf.mxu0
      %v3220 = vadd.f32 %v3098, %v3219
      %v3221 = vpop.f32.mrf.mxu0
      %3222 = vmatprep.mubr.f32.mxu0 0.0
      %3223 = vmatmul.mubr.f32.gmra.mxu0 %v3121
      %v3224 = vpop.f32.mrf.mxu0
      %v3225 = vadd.f32 %v3098, %v3224
      %v3226 = vpop.f32.mrf.mxu0
      %3227 = vdwg.mxu0
      %v3228 = vmax.f32 %v3190, 0.0
      %v3229 = vmax.f32 %v3195, 0.0
      %v3230 = vmax.f32 %v3200, 0.0
      %v3231 = vmax.f32 %v3205, 0.0
      %v3232 = vmax.f32 %v3210, 0.0
      %v3233 = vmax.f32 %v3215, 0.0
      %v3234 = vmax.f32 %v3220, 0.0
      %v3235 = vmax.f32 %v3225, 0.0
      %v3236 = vld [vmem:[%s5] sm:$0xff]
      %v3237 = vld [vmem:[%s5 + $0x8] sm:$0xff]
      %v3238 = vld [vmem:[%s5 + $0x10] sm:$0xff]
      %v3239 = vld [vmem:[%s5 + $0x18] sm:$0xff]
      %v3240 = vld [vmem:[%s5 + $0x20] sm:$0xff]
      %v3241 = vld [vmem:[%s5 + $0x28] sm:$0xff]
      %v3242 = vld [vmem:[%s5 + $0x30] sm:$0xff]
      %v3243 = vld [vmem:[%s5 + $0x38] sm:$0xff]
      %v3244 = vld [vmem:[%s5 + $0x40] sm:$0xff]
      %v3245 = vld [vmem:[%s5 + $0x48] sm:$0xff]
      %v3246 = vld [vmem:[%s5 + $0x50] sm:$0xff]
      %v3247 = vld [vmem:[%s5 + $0x58] sm:$0xff]
      %v3248 = vld [vmem:[%s5 + $0x60] sm:$0xff]
      %v3249 = vld [vmem:[%s5 + $0x68] sm:$0xff]
      %v3250 = vld [vmem:[%s5 + $0x70] sm:$0xff]
      %v3251 = vld [vmem:[%s5 + $0x78] sm:$0xff]
      %v3252 = vld [vmem:[%s6 + $0x5] ss:$0 sm:$0xff]
      %3253 = vmatprep.subr.mxu0 0.0
      %3254 = vmatpush1.msra.mxu0 %v3251
      %3255 = vmatprep.subr.mxu0 0.0
      %3256 = vmatpush1.msra.mxu0 %v3250
      %3257 = vmatprep.subr.mxu0 0.0
      %3258 = vmatpush1.msra.mxu0 %v3249
      %3259 = vmatprep.subr.mxu0 0.0
      %3260 = vmatpush1.msra.mxu0 %v3248
      %3261 = vmatprep.subr.mxu0 0.0
      %3262 = vmatpush1.msra.mxu0 %v3247
      %3263 = vmatprep.subr.mxu0 0.0
      %3264 = vmatpush1.msra.mxu0 %v3246
      %3265 = vmatprep.subr.mxu0 0.0
      %3266 = vmatpush1.msra.mxu0 %v3245
      %3267 = vmatprep.subr.mxu0 0.0
      %3268 = vmatpush1.msra.mxu0 %v3244
      %3269 = vmatprep.subr.mxu0 0.0
      %3270 = vmatpush1.msra.mxu0 %v3243
      %3271 = vmatprep.subr.mxu0 0.0
      %3272 = vmatpush1.msra.mxu0 %v3242
      %3273 = vmatprep.subr.mxu0 0.0
      %3274 = vmatpush1.msra.mxu0 %v3241
      %3275 = vmatprep.subr.mxu0 0.0
      %3276 = vmatpush1.msra.mxu0 %v3240
      %3277 = vmatprep.subr.mxu0 0.0
      %3278 = vmatpush1.msra.mxu0 %v3239
      %3279 = vmatprep.subr.mxu0 0.0
      %3280 = vmatpush1.msra.mxu0 %v3238
      %3281 = vmatprep.subr.mxu0 0.0
      %3282 = vmatpush1.msra.mxu0 %v3237
      %3283 = vmatprep.subr.mxu0 0.0
      %3284 = vmatpush1.msra.mxu0 %v3236
      %3285 = vmatprep.subr.mxu0 0.0
      %3286 = vmatpush2.msra.mxu0 0.0
      %3287 = vmatprep.subr.mxu0 0.0
      %3288 = vmatpush2.msra.mxu0 0.0
      %3289 = vmatprep.subr.mxu0 0.0
      %3290 = vmatpush2.msra.mxu0 0.0
      %3291 = vmatprep.subr.mxu0 0.0
      %3292 = vmatpush2.msra.mxu0 0.0
      %3293 = vmatprep.subr.mxu0 0.0
      %3294 = vmatpush2.msra.mxu0 0.0
      %3295 = vmatprep.subr.mxu0 0.0
      %3296 = vmatpush2.msra.mxu0 0.0
      %3297 = vmatprep.subr.mxu0 0.0
      %3298 = vmatpush2.msra.mxu0 0.0
      %3299 = vmatprep.subr.mxu0 0.0
      %3300 = vmatpush2.msra.mxu0 0.0
      %3301 = vmatprep.subr.mxu0 0.0
      %3302 = vmatpush2.msra.mxu0 0.0
      %3303 = vmatprep.subr.mxu0 0.0
      %3304 = vmatpush2.msra.mxu0 0.0
      %3305 = vmatprep.subr.mxu0 0.0
      %3306 = vmatpush2.msra.mxu0 0.0
      %3307 = vmatprep.subr.mxu0 0.0
      %3308 = vmatpush2.msra.mxu0 0.0
      %3309 = vmatprep.subr.mxu0 0.0
      %3310 = vmatpush2.msra.mxu0 0.0
      %3311 = vmatprep.subr.mxu0 0.0
      %3312 = vmatpush2.msra.mxu0 0.0
      %3313 = vmatprep.subr.mxu0 0.0
      %3314 = vmatpush2.msra.mxu0 0.0
      %3315 = vmatprep.subr.mxu0 0.0
      %3316 = vmatpush2.msra.mxu0 0.0
      %3317 = vmatprep.mubr.f32.mxu0 0.0
      %3318 = vmatmul.mubr.f32.gmra.mxu0 %v3228
      %v3319 = vpop.f32.mrf.mxu0
      %v3320 = vadd.f32 %v3252, %v3319
      %v3321 = vpop.f32.mrf.mxu0
      %3322 = vmatprep.mubr.f32.mxu0 0.0
      %3323 = vmatmul.mubr.f32.gmra.mxu0 %v3229
      %v3324 = vpop.f32.mrf.mxu0
      %v3325 = vadd.f32 %v3252, %v3324
      %v3326 = vpop.f32.mrf.mxu0
      %3327 = vmatprep.mubr.f32.mxu0 0.0
      %3328 = vmatmul.mubr.f32.gmra.mxu0 %v3230
      %v3329 = vpop.f32.mrf.mxu0
      %v3330 = vadd.f32 %v3252, %v3329
      %v3331 = vpop.f32.mrf.mxu0
      %3332 = vmatprep.mubr.f32.mxu0 0.0
      %3333 = vmatmul.mubr.f32.gmra.mxu0 %v3231
      %v3334 = vpop.f32.mrf.mxu0
      %v3335 = vadd.f32 %v3252, %v3334
      %v3336 = vpop.f32.mrf.mxu0
      %3337 = vmatprep.mubr.f32.mxu0 0.0
      %3338 = vmatmul.mubr.f32.gmra.mxu0 %v3232
      %v3339 = vpop.f32.mrf.mxu0
      %v3340 = vadd.f32 %v3252, %v3339
      %v3341 = vpop.f32.mrf.mxu0
      %3342 = vmatprep.mubr.f32.mxu0 0.0
      %3343 = vmatmul.mubr.f32.gmra.mxu0 %v3233
      %v3344 = vpop.f32.mrf.mxu0
      %v3345 = vadd.f32 %v3252, %v3344
      %v3346 = vpop.f32.mrf.mxu0
      %3347 = vmatprep.mubr.f32.mxu0 0.0
      %3348 = vmatmul.mubr.f32.gmra.mxu0 %v3234
      %v3349 = vpop.f32.mrf.mxu0
      %v3350 = vadd.f32 %v3252, %v3349
      %v3351 = vpop.f32.mrf.mxu0
      %3352 = vmatprep.mubr.f32.mxu0 0.0
      %3353 = vmatmul.mubr.f32.gmra.mxu0 %v3235
      %v3354 = vpop.f32.mrf.mxu0
      %v3355 = vadd.f32 %v3252, %v3354
      %v3356 = vpop.f32.mrf.mxu0
      %3357 = vdwg.mxu0
      %v3358 = vadd.f32 %v3086, %v3320
      %v3359 = vadd.f32 %v3087, %v3325
      %v3360 = vadd.f32 %v3088, %v3330
      %v3361 = vadd.f32 %v3089, %v3335
      %v3362 = vadd.f32 %v3090, %v3340
      %v3363 = vadd.f32 %v3091, %v3345
      %v3364 = vadd.f32 %v3092, %v3350
      %v3365 = vadd.f32 %v3093, %v3355
      %v3366 = vld [vmem:[%s6 + $0x6] ss:$0 sm:$0xff]
      %v3367 = vld [vmem:[%s6 + $0x7] ss:$0 sm:$0xff]
      %v3368 = vsel %vm520, %v3358, 0.0
      %3369 = vadd.xlane.f32.xlu0 %v3368
      %v3370 = vpop.xlane.xlu0 %3369
      %v3371 = vsel %vm520, %v3359, 0.0
      %3372 = vadd.xlane.f32.xlu0 %v3371
      %v3373 = vpop.xlane.xlu0 %3372
      %v3374 = vsel %vm520, %v3360, 0.0
      %3375 = vadd.xlane.f32.xlu0 %v3374
      %v3376 = vpop.xlane.xlu0 %3375
      %v3377 = vsel %vm520, %v3361, 0.0
      %3378 = vadd.xlane.f32.xlu0 %v3377
      %v3379 = vpop.xlane.xlu0 %3378
      %v3380 = vsel %vm520, %v3362, 0.0
      %3381 = vadd.xlane.f32.xlu0 %v3380
      %v3382 = vpop.xlane.xlu0 %3381
      %v3383 = vsel %vm520, %v3363, 0.0
      %3384 = vadd.xlane.f32.xlu0 %v3383
      %v3385 = vpop.xlane.xlu0 %3384
      %v3386 = vsel %vm520, %v3364, 0.0
      %3387 = vadd.xlane.f32.xlu0 %v3386
      %v3388 = vpop.xlane.xlu0 %3387
      %v3389 = vsel %vm520, %v3365, 0.0
      %3390 = vadd.xlane.f32.xlu0 %v3389
      %v3391 = vpop.xlane.xlu0 %3390
      %v3392 = vmul.f32 %v3370, %v2997
      %v3393 = vmul.f32 %v3373, %v2997
      %v3394 = vmul.f32 %v3376, %v2997
      %v3395 = vmul.f32 %v3379, %v2997
      %v3396 = vmul.f32 %v3382, %v2997
      %v3397 = vmul.f32 %v3385, %v2997
      %v3398 = vmul.f32 %v3388, %v2997
      %v3399 = vmul.f32 %v3391, %v2997
      %v3400 = vsub.f32 %v3358, %v3392
      %v3401 = vsub.f32 %v3359, %v3393
      %v3402 = vsub.f32 %v3360, %v3394
      %v3403 = vsub.f32 %v3361, %v3395
      %v3404 = vsub.f32 %v3362, %v3396
      %v3405 = vsub.f32 %v3363, %v3397
      %v3406 = vsub.f32 %v3364, %v3398
      %v3407 = vsub.f32 %v3365, %v3399
      %v3408 = vmul.f32 %v3400, %v3400
      %v3409 = vmul.f32 %v3401, %v3401
      %v3410 = vmul.f32 %v3402, %v3402
      %v3411 = vmul.f32 %v3403, %v3403
      %v3412 = vmul.f32 %v3404, %v3404
      %v3413 = vmul.f32 %v3405, %v3405
      %v3414 = vmul.f32 %v3406, %v3406
      %v3415 = vmul.f32 %v3407, %v3407
      %v3416 = vsel %vm520, %v3408, 0.0
      %3417 = vadd.xlane.f32.xlu0 %v3416
      %v3418 = vpop.xlane.xlu0 %3417
      %v3419 = vsel %vm520, %v3409, 0.0
      %3420 = vadd.xlane.f32.xlu0 %v3419
      %v3421 = vpop.xlane.xlu0 %3420
      %v3422 = vsel %vm520, %v3410, 0.0
      %3423 = vadd.xlane.f32.xlu0 %v3422
      %v3424 = vpop.xlane.xlu0 %3423
      %v3425 = vsel %vm520, %v3411, 0.0
      %3426 = vadd.xlane.f32.xlu0 %v3425
      %v3427 = vpop.xlane.xlu0 %3426
      %v3428 = vsel %vm520, %v3412, 0.0
      %3429 = vadd.xlane.f32.xlu0 %v3428
      %v3430 = vpop.xlane.xlu0 %3429
      %v3431 = vsel %vm520, %v3413, 0.0
      %3432 = vadd.xlane.f32.xlu0 %v3431
      %v3433 = vpop.xlane.xlu0 %3432
      %v3434 = vsel %vm520, %v3414, 0.0
      %3435 = vadd.xlane.f32.xlu0 %v3434
      %v3436 = vpop.xlane.xlu0 %3435
      %v3437 = vsel %vm520, %v3415, 0.0
      %3438 = vadd.xlane.f32.xlu0 %v3437
      %v3439 = vpop.xlane.xlu0 %3438
      %v3440 = vmul.f32 %v3418, %v2997
      %v3441 = vmul.f32 %v3421, %v2997
      %v3442 = vmul.f32 %v3424, %v2997
      %v3443 = vmul.f32 %v3427, %v2997
      %v3444 = vmul.f32 %v3430, %v2997
      %v3445 = vmul.f32 %v3433, %v2997
      %v3446 = vmul.f32 %v3436, %v2997
      %v3447 = vmul.f32 %v3439, %v2997
      %v3448 = vadd.f32 %v3440, 1e-05
      %v3449 = vadd.f32 %v3441, 1e-05
      %v3450 = vadd.f32 %v3442, 1e-05
      %v3451 = vadd.f32 %v3443, 1e-05
      %v3452 = vadd.f32 %v3444, 1e-05
      %v3453 = vadd.f32 %v3445, 1e-05
      %v3454 = vadd.f32 %v3446, 1e-05
      %v3455 = vadd.f32 %v3447, 1e-05
      %v3456 = vrsqrt.pop %v3448
      %v3457 = vrsqrt.pop %v3449
      %v3458 = vrsqrt.pop %v3450
      %v3459 = vrsqrt.pop %v3451
      %v3460 = vrsqrt.pop %v3452
      %v3461 = vrsqrt.pop %v3453
      %v3462 = vrsqrt.pop %v3454
      %v3463 = vrsqrt.pop %v3455
      %v3464 = vmul.f32 %v3400, %v3456
      %v3465 = vmul.f32 %v3401, %v3457
      %v3466 = vmul.f32 %v3402, %v3458
      %v3467 = vmul.f32 %v3403, %v3459
      %v3468 = vmul.f32 %v3404, %v3460
      %v3469 = vmul.f32 %v3405, %v3461
      %v3470 = vmul.f32 %v3406, %v3462
      %v3471 = vmul.f32 %v3407, %v3463
      %v3472 = vmul.f32 %v3464, %v3366
      %v3473 = vmul.f32 %v3465, %v3366
      %v3474 = vmul.f32 %v3466, %v3366
      %v3475 = vmul.f32 %v3467, %v3366
      %v3476 = vmul.f32 %v3468, %v3366
      %v3477 = vmul.f32 %v3469, %v3366
      %v3478 = vmul.f32 %v3470, %v3366
      %v3479 = vmul.f32 %v3471, %v3366
      %v3480 = vadd.f32 %v3472, %v3367
      %v3481 = vadd.f32 %v3473, %v3367
      %v3482 = vadd.f32 %v3474, %v3367
      %v3483 = vadd.f32 %v3475, %v3367
      %v3484 = vadd.f32 %v3476, %v3367
      %v3485 = vadd.f32 %v3477, %v3367
      %v3486 = vadd.f32 %v3478, %v3367
      %v3487 = vadd.f32 %v3479, %v3367
      %3490 = vrot.lane.b32.xlu0 %v3482, 32
      %v3491 = vpop.permute.xlu0 %3490
      %3492 = vrot.lane.b32.xlu0 %v3483, 32
      %v3493 = vpop.permute.xlu0 %3492
      %3498 = vrot.lane.b32.xlu0 %v3484, 64
      %v3499 = vpop.permute.xlu0 %3498
      %3500 = vrot.lane.b32.xlu0 %v3485, 64
      %v3501 = vpop.permute.xlu0 %3500
      %3506 = vrot.lane.b32.xlu0 %v3486, 96
      %v3507 = vpop.permute.xlu0 %3506
      %3508 = vrot.lane.b32.xlu0 %v3487, 96
      %v3509 = vpop.permute.xlu0 %3508
      %v3512 = vsel %vm520, %v3480, %v3491
      %v3513 = vsel %vm520, %v3481, %v3493
      %vm3514 = vcmask 523264
      %v3515 = vsel %vm3514, %v3512, %v3499
      %v3516 = vsel %vm3514, %v3513, %v3501
      %vm3517 = vcmask 785408
      %v3518 = vsel %vm3517, %v3515, %v3507
      %v3519 = vsel %vm3517, %v3516, %v3509
      %3520 = vst [vmem:[%s455] sm:$0xff] %v3518
      %3521 = vst [vmem:[%s455 + $0x8] sm:$0xff] %v3519
      %s3522 = smul.u32 2, %s22
      %p3523 = scmp.lt.s32.totalorder %s3522, 3
      %s3524 = scalar_select %p3523, %s3522, 3
      %s3525 = smul.addr %s3524, 8
      %s3526 = scalar_lea.vmem %s11, %s3525
      // Predicated region
      $region65: #{rgat_layer.1} parent=63 // pred_check
        %p3527 = pneg %p291
      $region66: #{rgat_layer.1} parent=63 // pred_check_branch
        %3529 = sbr.rel (%p3527) target = $region68
      $region67: #{rgat_layer.1} parent=63 // pred_region
        %s3530 = smul.u32 2, %s22
      $region68: #{rgat_layer.1} parent=63 // pred_fallthru
        _
    $region64: #{rgat_layer.1} parent=5 // pred_fallthru
      _
    %p3531 = scmp.le.s32.totalorder 2, %s17
    // Predicated region
    $region69: #{rgat_layer.1} parent=5 // pred_check
      %p3532 = pneg %p3531
    $region70: #{rgat_layer.1} parent=5 // pred_check_branch
      %3534 = sbr.rel (%p3532) target = $region72
    $region71: #{rgat_layer.1} parent=5 // pred_region
      %s3535 = ssub.s32 %s17, 2
      // Predicated region
      $region73: #{rgat_layer.1} parent=71 // pred_check
        %p3536 = pneg %p297
      $region74: #{rgat_layer.1} parent=71 // pred_check_branch
        %3538 = sbr.rel (%p3536) target = $region76
      $region75: #{rgat_layer.1} parent=71 // pred_region
        %s3539 = smul.u32 2, %s23
        %p3540 = scmp.lt.s32.totalorder %s3539, 3
        %s3541 = scalar_select %p3540, %s3539, 3
        %s3542 = smul.addr %s3541, 8
        %s3543 = scalar_lea.vmem %s11, %s3542
      $region76: #{rgat_layer.1} parent=71 // pred_fallthru
        _
    $region72: #{rgat_layer.1} parent=5 // pred_fallthru
      _
  $region6: #{rgat_layer.1} parent=0 // loop_footer
    %s21 = sadd.s32 1, %s17
  $region7: #{rgat_layer.1} parent=0 // loop_footer_branch
    %16 = sbr.rel target = $region3
  $region8: #{rgat_layer.1} parent=0 // loop_exit
    _

</llo_original>
